<compile_context>
chip_gen: v7x
topology: tpu7x:2x2x1
jax: 0.10.0
libtpu: 0.0.40
codegen_flags: <defaults>
</compile_context>

<pallas_src>
import jax
import jax.numpy as jnp
from jax import lax
from jax.experimental import pallas as pl
from jax.experimental.pallas import tpu as pltpu


# --------------------------------------------------------------------------
# Fused Pallas kernel: conv stack + head
# --------------------------------------------------------------------------
def _cnn_kernel(x_ref, w1_ref, b1_ref, w2_ref, b2_ref, w3_ref, b3_ref,
                wh_ref, bh_ref, out_ref, pad_a, pad_b):
    b_tile = out_ref.shape[0]
    seq_len, mid, _ = wh_ref.shape
    c_in = w1_ref.shape[1]
    m = seq_len * b_tile                 # time-major rows: row = t*b_tile + b
    stage_dt = pad_a.dtype
    width = pad_a.shape[1]

    # Zero the one-timestep halos of both staging buffers (the conv's zero
    # padding).  Unconditional every grid step — per-core scratch under
    # dimension_semantics=("parallel",).
    zeros_halo = jnp.zeros((b_tile, width), stage_dt)
    for buf in (pad_a, pad_b):
        buf[0:b_tile, :] = zeros_halo
        buf[b_tile + m:2 * b_tile + m, :] = zeros_halo

    # Unpack the lane-dense [b_tile, seq_len*c_in] input tile into time-major
    # rows of pad_a, columns 0:c_in.
    for t in range(seq_len):
        pad_a[(1 + t) * b_tile:(2 + t) * b_tile, 0:c_in] = (
            x_ref[:, t * c_in:(t + 1) * c_in].astype(stage_dt))

    def conv_relu(src, dst, c, w_ref, b_ref):
        # Taps are sublane-aligned row slices of the zero-halo buffer:
        #   rows [0 : m)         -> x[t-1]
        #   rows [bt : bt+m)     -> x[t]
        #   rows [2bt : 2bt+m)   -> x[t+1]
        y = jnp.dot(src[0:m, 0:c], w_ref[0],
                    preferred_element_type=jnp.float32)
        y = y + jnp.dot(src[b_tile:b_tile + m, 0:c], w_ref[1],
                        preferred_element_type=jnp.float32)
        y = y + jnp.dot(src[2 * b_tile:2 * b_tile + m, 0:c], w_ref[2],
                        preferred_element_type=jnp.float32)
        y = jnp.maximum(y + b_ref[...], 0.0)
        dst[b_tile:b_tile + m, 0:mid] = y.astype(stage_dt)

    conv_relu(pad_a, pad_b, c_in, w1_ref, b1_ref)    # layer 1: A -> B
    conv_relu(pad_b, pad_a, mid, w2_ref, b2_ref)     # layer 2: B -> A
    conv_relu(pad_a, pad_b, mid, w3_ref, b3_ref)     # layer 3: A -> B

    # Head: per-timestep accumulating dots into a lane-dense (b_tile, 128)
    # output; padded columns of wh/bh are zero, wrapper slices them away.
    acc = jnp.dot(pad_b[b_tile:2 * b_tile, 0:mid], wh_ref[0],
                  preferred_element_type=jnp.float32)
    for t in range(1, seq_len):
        acc = acc + jnp.dot(
            pad_b[(1 + t) * b_tile:(2 + t) * b_tile, 0:mid], wh_ref[t],
            preferred_element_type=jnp.float32)
    out_ref[...] = (acc + bh_ref[...]).astype(out_ref.dtype)


# --------------------------------------------------------------------------
# One-time parameter re-layout (amortize across forward calls)
# --------------------------------------------------------------------------
def prepare_params(params, seq_len, compute_dtype=jnp.float32):
    """Re-layout PyTorch-shaped params for the fused kernel (do this ONCE).

    - Conv1d weight [Cout, Cin, 3] -> per-tap [3, Cin, Cout] (tap k multiplies
      x[t + k - 1], PyTorch cross-correlation with padding=1).
    - Head weight [na, mid*S] (PyTorch flattens [B, mid, S] in c*S + t order)
      -> [S, mid, 128] in (t, c, a) order, zero-padded to 128 output lanes;
      bias -> [1, 128] f32.
    - Matmul operands / staging dtype = compute_dtype (bf16 recommended on
      every TPU generation); accumulation is always f32.
    """
    mid = params["conv1_w"].shape[0]
    na = params["head_b"].shape[0]
    na_pad = -(-na // 128) * 128

    def taps(w):                               # [Cout, Cin, 3] -> [3, Cin, Cout]
        return jnp.transpose(w, (2, 1, 0)).astype(compute_dtype)

    wh = params["head_w"].reshape(na, mid, seq_len)       # [a, c, t]
    wh = jnp.transpose(wh, (2, 1, 0))                     # [t, c, a]
    wh = jnp.pad(wh, ((0, 0), (0, 0), (0, na_pad - na))).astype(compute_dtype)
    bh = jnp.pad(params["head_b"], (0, na_pad - na)).reshape(1, -1)

    return {
        "w1": taps(params["conv1_w"]),
        "b1": params["conv1_b"].reshape(1, -1).astype(jnp.float32),
        "w2": taps(params["conv2_w"]),
        "b2": params["conv2_b"].reshape(1, -1).astype(jnp.float32),
        "w3": taps(params["conv3_w"]),
        "b3": params["conv3_b"].reshape(1, -1).astype(jnp.float32),
        "wh": wh,
        "bh": bh.astype(jnp.float32),
        # Carries the *static* n_actions (as a shape) through jit so the
        # wrapper can slice the lane-padded output back down.
        "bh_raw": params["head_b"].astype(jnp.float32),
    }


def _choose_b_tile(batch, seq_len, c_in, mid, na_pad, stage_itemsize, sublane,
                   vmem_budget_bytes=20 * 1024 * 1024):
    """Batch-tile size: multiple of `sublane` (8 for f32 staging, 16 for bf16
    so row slices stay tile-aligned), aiming for >= 4 grid steps when batch
    allows (>= 2 per TensorCore on v7x), bounded by an honest lane-padded,
    double-buffered VMEM count under the 32 MiB scoped-VMEM limit."""
    lane = 128
    rup = lambda v, k: -(-v // k) * k
    width_l = rup(max(c_in, mid), lane)
    per_b = (2 * rup(seq_len * c_in, lane) * 4            # input block, x2 buffers, f32
             + 2 * rup(na_pad, lane) * 4                  # output block, x2 buffers, f32
             + 2 * (seq_len + 2) * width_l * stage_itemsize)  # two staging buffers
    w_bytes = 2 * stage_itemsize * (                      # resident weight blocks (x2)
        3 * rup(c_in, 8) * width_l + 6 * rup(mid, 8) * width_l
        + seq_len * rup(mid, 8) * rup(na_pad, lane)) + 6 * 8 * lane * 4
    cap = max(sublane, (vmem_budget_bytes - w_bytes) // max(per_b, 1))
    want = max(sublane, (max(batch // 4, 1) // sublane) * sublane)
    bt = int(min(256, cap, want))
    return max(sublane, (bt // sublane) * sublane)


# --------------------------------------------------------------------------
# Forward wrapper
# --------------------------------------------------------------------------
def cnn_forward(x, prep, *, b_tile=None):
    """x: [batch, seq_len, in_size] (any float). Returns [batch, n_actions] f32."""
    batch, seq_len, c_in = x.shape
    mid = prep["b1"].shape[1]
    na_pad = prep["bh"].shape[1]
    n_actions = prep["bh_raw"].shape[0]
    assert prep["wh"].shape == (seq_len, mid, na_pad), "prepare_params seq_len mismatch"
    stage_dt = prep["w1"].dtype
    stage_itemsize = jnp.dtype(stage_dt).itemsize
    sublane = 8 if stage_itemsize >= 4 else 16

    if b_tile is None:
        b_tile = _choose_b_tile(batch, seq_len, c_in, mid, na_pad,
                                stage_itemsize, sublane)
    nb = pl.cdiv(batch, b_tile)
    bp = nb * b_tile
    width = max(c_in, mid)

    # Lane-dense input view: [B, S, C] -> [B, S*C] is a free contiguous
    # reshape (no HBM transpose pass); time-major unpack happens in-kernel.
    xf = x.astype(jnp.float32).reshape(batch, seq_len * c_in)
    if bp != batch:   # pad batch to a multiple of b_tile (extra rows discarded)
        xf = jnp.pad(xf, ((0, bp - batch), (0, 0)))

    const2 = lambda i: (0, 0)
    const3 = lambda i: (0, 0, 0)
    weight_bytes = sum(int(prep[k].size) * jnp.dtype(prep[k].dtype).itemsize
                       for k in ("w1", "b1", "w2", "b2", "w3", "b3", "wh", "bh"))
    cost = pl.CostEstimate(
        flops=2 * bp * seq_len * (3 * c_in * mid + 6 * mid * mid + mid * na_pad),
        transcendentals=0,
        bytes_accessed=int(xf.size) * 4 + weight_bytes + bp * na_pad * 4)

    out = pl.pallas_call(
        _cnn_kernel,
        out_shape=jax.ShapeDtypeStruct((bp, na_pad), jnp.float32),
        grid=(nb,),
        in_specs=[
            pl.BlockSpec((b_tile, seq_len * c_in), lambda i: (i, 0)),  # batch tile
            pl.BlockSpec(prep["w1"].shape, const3),
            pl.BlockSpec(prep["b1"].shape, const2),
            pl.BlockSpec(prep["w2"].shape, const3),
            pl.BlockSpec(prep["b2"].shape, const2),
            pl.BlockSpec(prep["w3"].shape, const3),
            pl.BlockSpec(prep["b3"].shape, const2),
            pl.BlockSpec(prep["wh"].shape, const3),
            pl.BlockSpec(prep["bh"].shape, const2),
        ],
        out_specs=pl.BlockSpec((b_tile, na_pad), lambda i: (i, 0)),
        scratch_shapes=[
            pltpu.VMEM(((seq_len + 2) * b_tile, width), stage_dt),   # ping
            pltpu.VMEM(((seq_len + 2) * b_tile, width), stage_dt),   # pong
        ],
        compiler_params=pltpu.CompilerParams(
            dimension_semantics=("parallel",),
            vmem_limit_bytes=32 * 1024 * 1024),
        cost_estimate=cost,
    )(xf, prep["w1"], prep["b1"], prep["w2"], prep["b2"],
      prep["w3"], prep["b3"], prep["wh"], prep["bh"])
    return out[:batch, :n_actions]


# --------------------------------------------------------------------------
# Deterministic PyTorch-shaped parameter init + pure-JAX reference
# --------------------------------------------------------------------------
def init_params(key, in_size, seq_len, mid_size, n_actions):
    ks = jax.random.split(key, 8)

    def u(k, shape, fan_in):
        bound = 1.0 / float(fan_in) ** 0.5
        return jax.random.uniform(k, shape, jnp.float32, -bound, bound)

    return {
        "conv1_w": u(ks[0], (mid_size, in_size, 3), in_size * 3),
        "conv1_b": u(ks[1], (mid_size,), in_size * 3),
        "conv2_w": u(ks[2], (mid_size, mid_size, 3), mid_size * 3),
        "conv2_b": u(ks[3], (mid_size,), mid_size * 3),
        "conv3_w": u(ks[4], (mid_size, mid_size, 3), mid_size * 3),
        "conv3_b": u(ks[5], (mid_size,), mid_size * 3),
        "head_w": u(ks[6], (n_actions, mid_size * seq_len), mid_size * seq_len),
        "head_b": u(ks[7], (n_actions,), mid_size * seq_len),
    }


def reference_forward(x, params):
    # Mirrors the PyTorch module: NCW conv1d(pad=1), ReLU x3, flatten, linear.
    h = jnp.transpose(x.astype(jnp.float32), (0, 2, 1))   # [B, C, S]
    for i in (1, 2, 3):
        w, b = params[f"conv{i}_w"], params[f"conv{i}_b"]
        h = lax.conv_general_dilated(
            h, w, window_strides=(1,), padding=((1, 1),),
            dimension_numbers=("NCH", "OIH", "NCH"),
            precision=lax.Precision.HIGHEST)
        h = jnp.maximum(h + b[None, :, None], 0.0)
    flat = h.reshape(h.shape[0], -1)                       # [B, mid*S] (c*S + t)
    return jnp.dot(flat, params["head_w"].T,
                   precision=lax.Precision.HIGHEST) + params["head_b"]


# --------------------------------------------------------------------------
if __name__ == "__main__":
    B, S, in_size, mid_size, n_actions = 16, 16, 4, 32, 6

    key = jax.random.PRNGKey(0)
    k_x, k_p = jax.random.split(key)
    x = jax.random.normal(k_x, (B, S, in_size), jnp.float32)   # [batch, seq, feat]
    params = init_params(k_p, in_size, S, mid_size, n_actions)
    ref = jax.block_until_ready(reference_forward(x, params))

    fwd = jax.jit(cnn_forward)

    # f32 matmul/staging path (matches the module semantics tightly).
    prep_f32 = prepare_params(params, S, compute_dtype=jnp.float32)
    out_f32 = jax.block_until_ready(fwd(x, prep_f32))
    assert out_f32.shape == (B, n_actions), out_f32.shape
    assert out_f32.dtype == jnp.float32, out_f32.dtype
    assert jnp.allclose(out_f32, ref, atol=2e-3, rtol=2e-3), (
        "f32 mismatch vs reference", float(jnp.max(jnp.abs(out_f32 - ref))))

    # bf16 matmul operands + bf16 staging, f32 accumulation (full-rate MXU
    # path; recommended on v5e/v6e/v7x).
    prep_bf16 = prepare_params(params, S, compute_dtype=jnp.bfloat16)
    out_bf16 = jax.block_until_ready(fwd(x, prep_bf16))
    assert out_bf16.shape == (B, n_actions), out_bf16.shape
    assert jnp.allclose(out_bf16, ref, atol=1e-1, rtol=1e-1), (
        "bf16 mismatch vs reference", float(jnp.max(jnp.abs(out_bf16 - ref))))

    print("KERNEL_OK")
</pallas_src>

<mosaic_0001>
module attributes {stable_mosaic.version = 11 : i64} {
  func.func @_cnn_kernel(%arg0: i32, %arg1: memref<8x64xf32, #tpu.memory_space<vmem>>, %arg2: memref<3x4x32xf32, #tpu.memory_space<vmem>>, %arg3: memref<1x32xf32, #tpu.memory_space<vmem>>, %arg4: memref<3x32x32xf32, #tpu.memory_space<vmem>>, %arg5: memref<1x32xf32, #tpu.memory_space<vmem>>, %arg6: memref<3x32x32xf32, #tpu.memory_space<vmem>>, %arg7: memref<1x32xf32, #tpu.memory_space<vmem>>, %arg8: memref<16x32x128xf32, #tpu.memory_space<vmem>>, %arg9: memref<1x128xf32, #tpu.memory_space<vmem>>, %arg10: memref<8x128xf32, #tpu.memory_space<vmem>>, %arg11: memref<144x32xf32, #tpu.memory_space<vmem>>, %arg12: memref<144x32xf32, #tpu.memory_space<vmem>>) attributes {dimension_semantics = [#tpu.dimension_semantics<parallel>], iteration_bounds = array<i64: 2>, scalar_prefetch = 0 : i64, scratch_operands = 2 : i64, tpu.core_type = #tpu.core_type<tc>, window_params = [{transform_indices = @transform_0, window_bounds = array<i64: 8, 64>}, {pipeline_mode = #tpu.pipeline_mode<synchronous>, transform_indices = @transform_1, window_bounds = array<i64: 3, 4, 32>}, {pipeline_mode = #tpu.pipeline_mode<synchronous>, transform_indices = @transform_2, window_bounds = array<i64: 1, 32>}, {pipeline_mode = #tpu.pipeline_mode<synchronous>, transform_indices = @transform_3, window_bounds = array<i64: 3, 32, 32>}, {pipeline_mode = #tpu.pipeline_mode<synchronous>, transform_indices = @transform_4, window_bounds = array<i64: 1, 32>}, {pipeline_mode = #tpu.pipeline_mode<synchronous>, transform_indices = @transform_5, window_bounds = array<i64: 3, 32, 32>}, {pipeline_mode = #tpu.pipeline_mode<synchronous>, transform_indices = @transform_6, window_bounds = array<i64: 1, 32>}, {pipeline_mode = #tpu.pipeline_mode<synchronous>, transform_indices = @transform_7, window_bounds = array<i64: 16, 32, 128>}, {pipeline_mode = #tpu.pipeline_mode<synchronous>, transform_indices = @transform_8, window_bounds = array<i64: 1, 128>}, {transform_indices = @transform_9, window_bounds = array<i64: 8, 128>}]} {
    %cst = arith.constant 0.000000e+00 : f32
    %0 = vector.broadcast %cst : f32 to vector<8x32xf32>
    %c0 = arith.constant 0 : index
    %c0_0 = arith.constant 0 : index
    %1 = vector.load %arg11[%c0, %c0_0] : memref<144x32xf32, #tpu.memory_space<vmem>>, vector<8x32xf32>
    tpu.vector_store %arg11[%c0, %c0_0], %0 {strides = array<i32>} : memref<144x32xf32, #tpu.memory_space<vmem>>, vector<8x32xf32>,
    %c136 = arith.constant 136 : index
    %c0_1 = arith.constant 0 : index
    %2 = vector.load %arg11[%c136, %c0_1] : memref<144x32xf32, #tpu.memory_space<vmem>>, vector<8x32xf32>
    tpu.vector_store %arg11[%c136, %c0_1], %0 {strides = array<i32>} : memref<144x32xf32, #tpu.memory_space<vmem>>, vector<8x32xf32>,
    %c0_2 = arith.constant 0 : index
    %c0_3 = arith.constant 0 : index
    %3 = vector.load %arg12[%c0_2, %c0_3] : memref<144x32xf32, #tpu.memory_space<vmem>>, vector<8x32xf32>
    tpu.vector_store %arg12[%c0_2, %c0_3], %0 {strides = array<i32>} : memref<144x32xf32, #tpu.memory_space<vmem>>, vector<8x32xf32>,
    %c136_4 = arith.constant 136 : index
    %c0_5 = arith.constant 0 : index
    %4 = vector.load %arg12[%c136_4, %c0_5] : memref<144x32xf32, #tpu.memory_space<vmem>>, vector<8x32xf32>
    tpu.vector_store %arg12[%c136_4, %c0_5], %0 {strides = array<i32>} : memref<144x32xf32, #tpu.memory_space<vmem>>, vector<8x32xf32>,
    %c0_6 = arith.constant 0 : index
    %c0_7 = arith.constant 0 : index
    %5 = vector.load %arg1[%c0_6, %c0_7] : memref<8x64xf32, #tpu.memory_space<vmem>>, vector<8x4xf32>
    %c8 = arith.constant 8 : index
    %c0_8 = arith.constant 0 : index
    %6 = vector.load %arg11[%c8, %c0_8] : memref<144x32xf32, #tpu.memory_space<vmem>>, vector<8x4xf32>
    tpu.vector_store %arg11[%c8, %c0_8], %5 {strides = array<i32>} : memref<144x32xf32, #tpu.memory_space<vmem>>, vector<8x4xf32>,
    %c0_9 = arith.constant 0 : index
    %c4 = arith.constant 4 : index
    %7 = vector.load %arg1[%c0_9, %c4] : memref<8x64xf32, #tpu.memory_space<vmem>>, vector<8x4xf32>
    %c16 = arith.constant 16 : index
    %c0_10 = arith.constant 0 : index
    %8 = vector.load %arg11[%c16, %c0_10] : memref<144x32xf32, #tpu.memory_space<vmem>>, vector<8x4xf32>
    tpu.vector_store %arg11[%c16, %c0_10], %7 {strides = array<i32>} : memref<144x32xf32, #tpu.memory_space<vmem>>, vector<8x4xf32>,
    %c0_11 = arith.constant 0 : index
    %c8_12 = arith.constant 8 : index
    %9 = vector.load %arg1[%c0_11, %c8_12] : memref<8x64xf32, #tpu.memory_space<vmem>>, vector<8x4xf32>
    %c24 = arith.constant 24 : index
    %c0_13 = arith.constant 0 : index
    %10 = vector.load %arg11[%c24, %c0_13] : memref<144x32xf32, #tpu.memory_space<vmem>>, vector<8x4xf32>
    tpu.vector_store %arg11[%c24, %c0_13], %9 {strides = array<i32>} : memref<144x32xf32, #tpu.memory_space<vmem>>, vector<8x4xf32>,
    %c0_14 = arith.constant 0 : index
    %c12 = arith.constant 12 : index
    %11 = vector.load %arg1[%c0_14, %c12] : memref<8x64xf32, #tpu.memory_space<vmem>>, vector<8x4xf32>
    %c32 = arith.constant 32 : index
    %c0_15 = arith.constant 0 : index
    %12 = vector.load %arg11[%c32, %c0_15] : memref<144x32xf32, #tpu.memory_space<vmem>>, vector<8x4xf32>
    tpu.vector_store %arg11[%c32, %c0_15], %11 {strides = array<i32>} : memref<144x32xf32, #tpu.memory_space<vmem>>, vector<8x4xf32>,
    %c0_16 = arith.constant 0 : index
    %c16_17 = arith.constant 16 : index
    %13 = vector.load %arg1[%c0_16, %c16_17] : memref<8x64xf32, #tpu.memory_space<vmem>>, vector<8x4xf32>
    %c40 = arith.constant 40 : index
    %c0_18 = arith.constant 0 : index
    %14 = vector.load %arg11[%c40, %c0_18] : memref<144x32xf32, #tpu.memory_space<vmem>>, vector<8x4xf32>
    tpu.vector_store %arg11[%c40, %c0_18], %13 {strides = array<i32>} : memref<144x32xf32, #tpu.memory_space<vmem>>, vector<8x4xf32>,
    %c0_19 = arith.constant 0 : index
    %c20 = arith.constant 20 : index
    %15 = vector.load %arg1[%c0_19, %c20] : memref<8x64xf32, #tpu.memory_space<vmem>>, vector<8x4xf32>
    %c48 = arith.constant 48 : index
    %c0_20 = arith.constant 0 : index
    %16 = vector.load %arg11[%c48, %c0_20] : memref<144x32xf32, #tpu.memory_space<vmem>>, vector<8x4xf32>
    tpu.vector_store %arg11[%c48, %c0_20], %15 {strides = array<i32>} : memref<144x32xf32, #tpu.memory_space<vmem>>, vector<8x4xf32>,
    %c0_21 = arith.constant 0 : index
    %c24_22 = arith.constant 24 : index
    %17 = vector.load %arg1[%c0_21, %c24_22] : memref<8x64xf32, #tpu.memory_space<vmem>>, vector<8x4xf32>
    %c56 = arith.constant 56 : index
    %c0_23 = arith.constant 0 : index
    %18 = vector.load %arg11[%c56, %c0_23] : memref<144x32xf32, #tpu.memory_space<vmem>>, vector<8x4xf32>
    tpu.vector_store %arg11[%c56, %c0_23], %17 {strides = array<i32>} : memref<144x32xf32, #tpu.memory_space<vmem>>, vector<8x4xf32>,
    %c0_24 = arith.constant 0 : index
    %c28 = arith.constant 28 : index
    %19 = vector.load %arg1[%c0_24, %c28] : memref<8x64xf32, #tpu.memory_space<vmem>>, vector<8x4xf32>
    %c64 = arith.constant 64 : index
    %c0_25 = arith.constant 0 : index
    %20 = vector.load %arg11[%c64, %c0_25] : memref<144x32xf32, #tpu.memory_space<vmem>>, vector<8x4xf32>
    tpu.vector_store %arg11[%c64, %c0_25], %19 {strides = array<i32>} : memref<144x32xf32, #tpu.memory_space<vmem>>, vector<8x4xf32>,
    %c0_26 = arith.constant 0 : index
    %c32_27 = arith.constant 32 : index
    %21 = vector.load %arg1[%c0_26, %c32_27] : memref<8x64xf32, #tpu.memory_space<vmem>>, vector<8x4xf32>
    %c72 = arith.constant 72 : index
    %c0_28 = arith.constant 0 : index
    %22 = vector.load %arg11[%c72, %c0_28] : memref<144x32xf32, #tpu.memory_space<vmem>>, vector<8x4xf32>
    tpu.vector_store %arg11[%c72, %c0_28], %21 {strides = array<i32>} : memref<144x32xf32, #tpu.memory_space<vmem>>, vector<8x4xf32>,
    %c0_29 = arith.constant 0 : index
    %c36 = arith.constant 36 : index
    %23 = vector.load %arg1[%c0_29, %c36] : memref<8x64xf32, #tpu.memory_space<vmem>>, vector<8x4xf32>
    %c80 = arith.constant 80 : index
    %c0_30 = arith.constant 0 : index
    %24 = vector.load %arg11[%c80, %c0_30] : memref<144x32xf32, #tpu.memory_space<vmem>>, vector<8x4xf32>
    tpu.vector_store %arg11[%c80, %c0_30], %23 {strides = array<i32>} : memref<144x32xf32, #tpu.memory_space<vmem>>, vector<8x4xf32>,
    %c0_31 = arith.constant 0 : index
    %c40_32 = arith.constant 40 : index
    %25 = vector.load %arg1[%c0_31, %c40_32] : memref<8x64xf32, #tpu.memory_space<vmem>>, vector<8x4xf32>
    %c88 = arith.constant 88 : index
    %c0_33 = arith.constant 0 : index
    %26 = vector.load %arg11[%c88, %c0_33] : memref<144x32xf32, #tpu.memory_space<vmem>>, vector<8x4xf32>
    tpu.vector_store %arg11[%c88, %c0_33], %25 {strides = array<i32>} : memref<144x32xf32, #tpu.memory_space<vmem>>, vector<8x4xf32>,
    %c0_34 = arith.constant 0 : index
    %c44 = arith.constant 44 : index
    %27 = vector.load %arg1[%c0_34, %c44] : memref<8x64xf32, #tpu.memory_space<vmem>>, vector<8x4xf32>
    %c96 = arith.constant 96 : index
    %c0_35 = arith.constant 0 : index
    %28 = vector.load %arg11[%c96, %c0_35] : memref<144x32xf32, #tpu.memory_space<vmem>>, vector<8x4xf32>
    tpu.vector_store %arg11[%c96, %c0_35], %27 {strides = array<i32>} : memref<144x32xf32, #tpu.memory_space<vmem>>, vector<8x4xf32>,
    %c0_36 = arith.constant 0 : index
    %c48_37 = arith.constant 48 : index
    %29 = vector.load %arg1[%c0_36, %c48_37] : memref<8x64xf32, #tpu.memory_space<vmem>>, vector<8x4xf32>
    %c104 = arith.constant 104 : index
    %c0_38 = arith.constant 0 : index
    %30 = vector.load %arg11[%c104, %c0_38] : memref<144x32xf32, #tpu.memory_space<vmem>>, vector<8x4xf32>
    tpu.vector_store %arg11[%c104, %c0_38], %29 {strides = array<i32>} : memref<144x32xf32, #tpu.memory_space<vmem>>, vector<8x4xf32>,
    %c0_39 = arith.constant 0 : index
    %c52 = arith.constant 52 : index
    %31 = vector.load %arg1[%c0_39, %c52] : memref<8x64xf32, #tpu.memory_space<vmem>>, vector<8x4xf32>
    %c112 = arith.constant 112 : index
    %c0_40 = arith.constant 0 : index
    %32 = vector.load %arg11[%c112, %c0_40] : memref<144x32xf32, #tpu.memory_space<vmem>>, vector<8x4xf32>
    tpu.vector_store %arg11[%c112, %c0_40], %31 {strides = array<i32>} : memref<144x32xf32, #tpu.memory_space<vmem>>, vector<8x4xf32>,
    %c0_41 = arith.constant 0 : index
    %c56_42 = arith.constant 56 : index
    %33 = vector.load %arg1[%c0_41, %c56_42] : memref<8x64xf32, #tpu.memory_space<vmem>>, vector<8x4xf32>
    %c120 = arith.constant 120 : index
    %c0_43 = arith.constant 0 : index
    %34 = vector.load %arg11[%c120, %c0_43] : memref<144x32xf32, #tpu.memory_space<vmem>>, vector<8x4xf32>
    tpu.vector_store %arg11[%c120, %c0_43], %33 {strides = array<i32>} : memref<144x32xf32, #tpu.memory_space<vmem>>, vector<8x4xf32>,
    %c0_44 = arith.constant 0 : index
    %c60 = arith.constant 60 : index
    %35 = vector.load %arg1[%c0_44, %c60] : memref<8x64xf32, #tpu.memory_space<vmem>>, vector<8x4xf32>
    %c128 = arith.constant 128 : index
    %c0_45 = arith.constant 0 : index
    %36 = vector.load %arg11[%c128, %c0_45] : memref<144x32xf32, #tpu.memory_space<vmem>>, vector<8x4xf32>
    tpu.vector_store %arg11[%c128, %c0_45], %35 {strides = array<i32>} : memref<144x32xf32, #tpu.memory_space<vmem>>, vector<8x4xf32>,
    %c0_46 = arith.constant 0 : index
    %c0_47 = arith.constant 0 : index
    %37 = vector.load %arg11[%c0_46, %c0_47] : memref<144x32xf32, #tpu.memory_space<vmem>>, vector<128x4xf32>
    %c0_48 = arith.constant 0 : index
    %c0_49 = arith.constant 0 : index
    %c0_50 = arith.constant 0 : index
    %38 = vector.load %arg2[%c0_48, %c0_49, %c0_50] : memref<3x4x32xf32, #tpu.memory_space<vmem>>, vector<1x4x32xf32>
    %39 = vector.shape_cast %38 : vector<1x4x32xf32> to vector<4x32xf32>
    %cst_51 = arith.constant dense<0.000000e+00> : vector<128x32xf32>
    %40 = tpu.matmul %37, %39, %cst_51 {dimension_numbers = #tpu.dot_dimension_numbers<[1], [0], [0], [1], [0, 0, 1, 1], [], []>} : vector<128x4xf32>, vector<4x32xf32>, vector<128x32xf32> -> vector<128x32xf32>
    %c8_52 = arith.constant 8 : index
    %c0_53 = arith.constant 0 : index
    %41 = vector.load %arg11[%c8_52, %c0_53] : memref<144x32xf32, #tpu.memory_space<vmem>>, vector<128x4xf32>
    %c1 = arith.constant 1 : index
    %c0_54 = arith.constant 0 : index
    %c0_55 = arith.constant 0 : index
    %42 = vector.load %arg2[%c1, %c0_54, %c0_55] : memref<3x4x32xf32, #tpu.memory_space<vmem>>, vector<1x4x32xf32>
    %43 = vector.shape_cast %42 : vector<1x4x32xf32> to vector<4x32xf32>
    %cst_56 = arith.constant dense<0.000000e+00> : vector<128x32xf32>
    %44 = tpu.matmul %41, %43, %cst_56 {dimension_numbers = #tpu.dot_dimension_numbers<[1], [0], [0], [1], [0, 0, 1, 1], [], []>} : vector<128x4xf32>, vector<4x32xf32>, vector<128x32xf32> -> vector<128x32xf32>
    %45 = arith.addf %40, %44 : vector<128x32xf32>
    %c16_57 = arith.constant 16 : index
    %c0_58 = arith.constant 0 : index
    %46 = vector.load %arg11[%c16_57, %c0_58] : memref<144x32xf32, #tpu.memory_space<vmem>>, vector<128x4xf32>
    %c2 = arith.constant 2 : index
    %c0_59 = arith.constant 0 : index
    %c0_60 = arith.constant 0 : index
    %47 = vector.load %arg2[%c2, %c0_59, %c0_60] : memref<3x4x32xf32, #tpu.memory_space<vmem>>, vector<1x4x32xf32>
    %48 = vector.shape_cast %47 : vector<1x4x32xf32> to vector<4x32xf32>
    %cst_61 = arith.constant dense<0.000000e+00> : vector<128x32xf32>
    %49 = tpu.matmul %46, %48, %cst_61 {dimension_numbers = #tpu.dot_dimension_numbers<[1], [0], [0], [1], [0, 0, 1, 1], [], []>} : vector<128x4xf32>, vector<4x32xf32>, vector<128x32xf32> -> vector<128x32xf32>
    %50 = arith.addf %45, %49 : vector<128x32xf32>
    %c0_62 = arith.constant 0 : index
    %c0_63 = arith.constant 0 : index
    %51 = vector.load %arg3[%c0_62, %c0_63] : memref<1x32xf32, #tpu.memory_space<vmem>>, vector<1x32xf32>
    %52 = vector.broadcast %51 : vector<1x32xf32> to vector<128x32xf32>
    %53 = arith.addf %50, %52 : vector<128x32xf32>
    %cst_64 = arith.constant 0.000000e+00 : f32
    %54 = vector.broadcast %cst_64 : f32 to vector<128x32xf32>
    %55 = arith.maximumf %53, %54 : vector<128x32xf32>
    %c8_65 = arith.constant 8 : index
    %c0_66 = arith.constant 0 : index
    %56 = vector.load %arg12[%c8_65, %c0_66] : memref<144x32xf32, #tpu.memory_space<vmem>>, vector<128x32xf32>
    tpu.vector_store %arg12[%c8_65, %c0_66], %55 {strides = array<i32>} : memref<144x32xf32, #tpu.memory_space<vmem>>, vector<128x32xf32>,
    %c0_67 = arith.constant 0 : index
    %c0_68 = arith.constant 0 : index
    %57 = vector.load %arg12[%c0_67, %c0_68] : memref<144x32xf32, #tpu.memory_space<vmem>>, vector<128x32xf32>
    %c0_69 = arith.constant 0 : index
    %c0_70 = arith.constant 0 : index
    %c0_71 = arith.constant 0 : index
    %58 = vector.load %arg4[%c0_69, %c0_70, %c0_71] : memref<3x32x32xf32, #tpu.memory_space<vmem>>, vector<1x32x32xf32>
    %59 = vector.shape_cast %58 : vector<1x32x32xf32> to vector<32x32xf32>
    %cst_72 = arith.constant dense<0.000000e+00> : vector<128x32xf32>
    %60 = tpu.matmul %57, %59, %cst_72 {dimension_numbers = #tpu.dot_dimension_numbers<[1], [0], [0], [1], [0, 0, 1, 1], [], []>} : vector<128x32xf32>, vector<32x32xf32>, vector<128x32xf32> -> vector<128x32xf32>
    %c8_73 = arith.constant 8 : index
    %c0_74 = arith.constant 0 : index
    %61 = vector.load %arg12[%c8_73, %c0_74] : memref<144x32xf32, #tpu.memory_space<vmem>>, vector<128x32xf32>
    %c1_75 = arith.constant 1 : index
    %c0_76 = arith.constant 0 : index
    %c0_77 = arith.constant 0 : index
    %62 = vector.load %arg4[%c1_75, %c0_76, %c0_77] : memref<3x32x32xf32, #tpu.memory_space<vmem>>, vector<1x32x32xf32>
    %63 = vector.shape_cast %62 : vector<1x32x32xf32> to vector<32x32xf32>
    %cst_78 = arith.constant dense<0.000000e+00> : vector<128x32xf32>
    %64 = tpu.matmul %61, %63, %cst_78 {dimension_numbers = #tpu.dot_dimension_numbers<[1], [0], [0], [1], [0, 0, 1, 1], [], []>} : vector<128x32xf32>, vector<32x32xf32>, vector<128x32xf32> -> vector<128x32xf32>
    %65 = arith.addf %60, %64 : vector<128x32xf32>
    %c16_79 = arith.constant 16 : index
    %c0_80 = arith.constant 0 : index
    %66 = vector.load %arg12[%c16_79, %c0_80] : memref<144x32xf32, #tpu.memory_space<vmem>>, vector<128x32xf32>
    %c2_81 = arith.constant 2 : index
    %c0_82 = arith.constant 0 : index
    %c0_83 = arith.constant 0 : index
    %67 = vector.load %arg4[%c2_81, %c0_82, %c0_83] : memref<3x32x32xf32, #tpu.memory_space<vmem>>, vector<1x32x32xf32>
    %68 = vector.shape_cast %67 : vector<1x32x32xf32> to vector<32x32xf32>
    %cst_84 = arith.constant dense<0.000000e+00> : vector<128x32xf32>
    %69 = tpu.matmul %66, %68, %cst_84 {dimension_numbers = #tpu.dot_dimension_numbers<[1], [0], [0], [1], [0, 0, 1, 1], [], []>} : vector<128x32xf32>, vector<32x32xf32>, vector<128x32xf32> -> vector<128x32xf32>
    %70 = arith.addf %65, %69 : vector<128x32xf32>
    %c0_85 = arith.constant 0 : index
    %c0_86 = arith.constant 0 : index
    %71 = vector.load %arg5[%c0_85, %c0_86] : memref<1x32xf32, #tpu.memory_space<vmem>>, vector<1x32xf32>
    %72 = vector.broadcast %71 : vector<1x32xf32> to vector<128x32xf32>
    %73 = arith.addf %70, %72 : vector<128x32xf32>
    %cst_87 = arith.constant 0.000000e+00 : f32
    %74 = vector.broadcast %cst_87 : f32 to vector<128x32xf32>
    %75 = arith.maximumf %73, %74 : vector<128x32xf32>
    %c8_88 = arith.constant 8 : index
    %c0_89 = arith.constant 0 : index
    %76 = vector.load %arg11[%c8_88, %c0_89] : memref<144x32xf32, #tpu.memory_space<vmem>>, vector<128x32xf32>
    tpu.vector_store %arg11[%c8_88, %c0_89], %75 {strides = array<i32>} : memref<144x32xf32, #tpu.memory_space<vmem>>, vector<128x32xf32>,
    %c0_90 = arith.constant 0 : index
    %c0_91 = arith.constant 0 : index
    %77 = vector.load %arg11[%c0_90, %c0_91] : memref<144x32xf32, #tpu.memory_space<vmem>>, vector<128x32xf32>
    %c0_92 = arith.constant 0 : index
    %c0_93 = arith.constant 0 : index
    %c0_94 = arith.constant 0 : index
    %78 = vector.load %arg6[%c0_92, %c0_93, %c0_94] : memref<3x32x32xf32, #tpu.memory_space<vmem>>, vector<1x32x32xf32>
    %79 = vector.shape_cast %78 : vector<1x32x32xf32> to vector<32x32xf32>
    %cst_95 = arith.constant dense<0.000000e+00> : vector<128x32xf32>
    %80 = tpu.matmul %77, %79, %cst_95 {dimension_numbers = #tpu.dot_dimension_numbers<[1], [0], [0], [1], [0, 0, 1, 1], [], []>} : vector<128x32xf32>, vector<32x32xf32>, vector<128x32xf32> -> vector<128x32xf32>
    %c8_96 = arith.constant 8 : index
    %c0_97 = arith.constant 0 : index
    %81 = vector.load %arg11[%c8_96, %c0_97] : memref<144x32xf32, #tpu.memory_space<vmem>>, vector<128x32xf32>
    %c1_98 = arith.constant 1 : index
    %c0_99 = arith.constant 0 : index
    %c0_100 = arith.constant 0 : index
    %82 = vector.load %arg6[%c1_98, %c0_99, %c0_100] : memref<3x32x32xf32, #tpu.memory_space<vmem>>, vector<1x32x32xf32>
    %83 = vector.shape_cast %82 : vector<1x32x32xf32> to vector<32x32xf32>
    %cst_101 = arith.constant dense<0.000000e+00> : vector<128x32xf32>
    %84 = tpu.matmul %81, %83, %cst_101 {dimension_numbers = #tpu.dot_dimension_numbers<[1], [0], [0], [1], [0, 0, 1, 1], [], []>} : vector<128x32xf32>, vector<32x32xf32>, vector<128x32xf32> -> vector<128x32xf32>
    %85 = arith.addf %80, %84 : vector<128x32xf32>
    %c16_102 = arith.constant 16 : index
    %c0_103 = arith.constant 0 : index
    %86 = vector.load %arg11[%c16_102, %c0_103] : memref<144x32xf32, #tpu.memory_space<vmem>>, vector<128x32xf32>
    %c2_104 = arith.constant 2 : index
    %c0_105 = arith.constant 0 : index
    %c0_106 = arith.constant 0 : index
    %87 = vector.load %arg6[%c2_104, %c0_105, %c0_106] : memref<3x32x32xf32, #tpu.memory_space<vmem>>, vector<1x32x32xf32>
    %88 = vector.shape_cast %87 : vector<1x32x32xf32> to vector<32x32xf32>
    %cst_107 = arith.constant dense<0.000000e+00> : vector<128x32xf32>
    %89 = tpu.matmul %86, %88, %cst_107 {dimension_numbers = #tpu.dot_dimension_numbers<[1], [0], [0], [1], [0, 0, 1, 1], [], []>} : vector<128x32xf32>, vector<32x32xf32>, vector<128x32xf32> -> vector<128x32xf32>
    %90 = arith.addf %85, %89 : vector<128x32xf32>
    %c0_108 = arith.constant 0 : index
    %c0_109 = arith.constant 0 : index
    %91 = vector.load %arg7[%c0_108, %c0_109] : memref<1x32xf32, #tpu.memory_space<vmem>>, vector<1x32xf32>
    %92 = vector.broadcast %91 : vector<1x32xf32> to vector<128x32xf32>
    %93 = arith.addf %90, %92 : vector<128x32xf32>
    %cst_110 = arith.constant 0.000000e+00 : f32
    %94 = vector.broadcast %cst_110 : f32 to vector<128x32xf32>
    %95 = arith.maximumf %93, %94 : vector<128x32xf32>
    %c8_111 = arith.constant 8 : index
    %c0_112 = arith.constant 0 : index
    %96 = vector.load %arg12[%c8_111, %c0_112] : memref<144x32xf32, #tpu.memory_space<vmem>>, vector<128x32xf32>
    tpu.vector_store %arg12[%c8_111, %c0_112], %95 {strides = array<i32>} : memref<144x32xf32, #tpu.memory_space<vmem>>, vector<128x32xf32>,
    %c8_113 = arith.constant 8 : index
    %c0_114 = arith.constant 0 : index
    %97 = vector.load %arg12[%c8_113, %c0_114] : memref<144x32xf32, #tpu.memory_space<vmem>>, vector<8x32xf32>
    %c0_115 = arith.constant 0 : index
    %c0_116 = arith.constant 0 : index
    %c0_117 = arith.constant 0 : index
    %98 = vector.load %arg8[%c0_115, %c0_116, %c0_117] : memref<16x32x128xf32, #tpu.memory_space<vmem>>, vector<1x32x128xf32>
    %99 = vector.shape_cast %98 : vector<1x32x128xf32> to vector<32x128xf32>
    %cst_118 = arith.constant dense<0.000000e+00> : vector<8x128xf32>
    %100 = tpu.matmul %97, %99, %cst_118 {dimension_numbers = #tpu.dot_dimension_numbers<[1], [0], [0], [1], [0, 0, 1, 1], [], []>} : vector<8x32xf32>, vector<32x128xf32>, vector<8x128xf32> -> vector<8x128xf32>
    %c16_119 = arith.constant 16 : index
    %c0_120 = arith.constant 0 : index
    %101 = vector.load %arg12[%c16_119, %c0_120] : memref<144x32xf32, #tpu.memory_space<vmem>>, vector<8x32xf32>
    %c1_121 = arith.constant 1 : index
    %c0_122 = arith.constant 0 : index
    %c0_123 = arith.constant 0 : index
    %102 = vector.load %arg8[%c1_121, %c0_122, %c0_123] : memref<16x32x128xf32, #tpu.memory_space<vmem>>, vector<1x32x128xf32>
    %103 = vector.shape_cast %102 : vector<1x32x128xf32> to vector<32x128xf32>
    %cst_124 = arith.constant dense<0.000000e+00> : vector<8x128xf32>
    %104 = tpu.matmul %101, %103, %cst_124 {dimension_numbers = #tpu.dot_dimension_numbers<[1], [0], [0], [1], [0, 0, 1, 1], [], []>} : vector<8x32xf32>, vector<32x128xf32>, vector<8x128xf32> -> vector<8x128xf32>
    %105 = arith.addf %100, %104 : vector<8x128xf32>
    %c24_125 = arith.constant 24 : index
    %c0_126 = arith.constant 0 : index
    %106 = vector.load %arg12[%c24_125, %c0_126] : memref<144x32xf32, #tpu.memory_space<vmem>>, vector<8x32xf32>
    %c2_127 = arith.constant 2 : index
    %c0_128 = arith.constant 0 : index
    %c0_129 = arith.constant 0 : index
    %107 = vector.load %arg8[%c2_127, %c0_128, %c0_129] : memref<16x32x128xf32, #tpu.memory_space<vmem>>, vector<1x32x128xf32>
    %108 = vector.shape_cast %107 : vector<1x32x128xf32> to vector<32x128xf32>
    %cst_130 = arith.constant dense<0.000000e+00> : vector<8x128xf32>
    %109 = tpu.matmul %106, %108, %cst_130 {dimension_numbers = #tpu.dot_dimension_numbers<[1], [0], [0], [1], [0, 0, 1, 1], [], []>} : vector<8x32xf32>, vector<32x128xf32>, vector<8x128xf32> -> vector<8x128xf32>
    %110 = arith.addf %105, %109 : vector<8x128xf32>
    %c32_131 = arith.constant 32 : index
    %c0_132 = arith.constant 0 : index
    %111 = vector.load %arg12[%c32_131, %c0_132] : memref<144x32xf32, #tpu.memory_space<vmem>>, vector<8x32xf32>
    %c3 = arith.constant 3 : index
    %c0_133 = arith.constant 0 : index
    %c0_134 = arith.constant 0 : index
    %112 = vector.load %arg8[%c3, %c0_133, %c0_134] : memref<16x32x128xf32, #tpu.memory_space<vmem>>, vector<1x32x128xf32>
    %113 = vector.shape_cast %112 : vector<1x32x128xf32> to vector<32x128xf32>
    %cst_135 = arith.constant dense<0.000000e+00> : vector<8x128xf32>
    %114 = tpu.matmul %111, %113, %cst_135 {dimension_numbers = #tpu.dot_dimension_numbers<[1], [0], [0], [1], [0, 0, 1, 1], [], []>} : vector<8x32xf32>, vector<32x128xf32>, vector<8x128xf32> -> vector<8x128xf32>
    %115 = arith.addf %110, %114 : vector<8x128xf32>
    %c40_136 = arith.constant 40 : index
    %c0_137 = arith.constant 0 : index
    %116 = vector.load %arg12[%c40_136, %c0_137] : memref<144x32xf32, #tpu.memory_space<vmem>>, vector<8x32xf32>
    %c4_138 = arith.constant 4 : index
    %c0_139 = arith.constant 0 : index
    %c0_140 = arith.constant 0 : index
    %117 = vector.load %arg8[%c4_138, %c0_139, %c0_140] : memref<16x32x128xf32, #tpu.memory_space<vmem>>, vector<1x32x128xf32>
    %118 = vector.shape_cast %117 : vector<1x32x128xf32> to vector<32x128xf32>
    %cst_141 = arith.constant dense<0.000000e+00> : vector<8x128xf32>
    %119 = tpu.matmul %116, %118, %cst_141 {dimension_numbers = #tpu.dot_dimension_numbers<[1], [0], [0], [1], [0, 0, 1, 1], [], []>} : vector<8x32xf32>, vector<32x128xf32>, vector<8x128xf32> -> vector<8x128xf32>
    %120 = arith.addf %115, %119 : vector<8x128xf32>
    %c48_142 = arith.constant 48 : index
    %c0_143 = arith.constant 0 : index
    %121 = vector.load %arg12[%c48_142, %c0_143] : memref<144x32xf32, #tpu.memory_space<vmem>>, vector<8x32xf32>
    %c5 = arith.constant 5 : index
    %c0_144 = arith.constant 0 : index
    %c0_145 = arith.constant 0 : index
    %122 = vector.load %arg8[%c5, %c0_144, %c0_145] : memref<16x32x128xf32, #tpu.memory_space<vmem>>, vector<1x32x128xf32>
    %123 = vector.shape_cast %122 : vector<1x32x128xf32> to vector<32x128xf32>
    %cst_146 = arith.constant dense<0.000000e+00> : vector<8x128xf32>
    %124 = tpu.matmul %121, %123, %cst_146 {dimension_numbers = #tpu.dot_dimension_numbers<[1], [0], [0], [1], [0, 0, 1, 1], [], []>} : vector<8x32xf32>, vector<32x128xf32>, vector<8x128xf32> -> vector<8x128xf32>
    %125 = arith.addf %120, %124 : vector<8x128xf32>
    %c56_147 = arith.constant 56 : index
    %c0_148 = arith.constant 0 : index
    %126 = vector.load %arg12[%c56_147, %c0_148] : memref<144x32xf32, #tpu.memory_space<vmem>>, vector<8x32xf32>
    %c6 = arith.constant 6 : index
    %c0_149 = arith.constant 0 : index
    %c0_150 = arith.constant 0 : index
    %127 = vector.load %arg8[%c6, %c0_149, %c0_150] : memref<16x32x128xf32, #tpu.memory_space<vmem>>, vector<1x32x128xf32>
    %128 = vector.shape_cast %127 : vector<1x32x128xf32> to vector<32x128xf32>
    %cst_151 = arith.constant dense<0.000000e+00> : vector<8x128xf32>
    %129 = tpu.matmul %126, %128, %cst_151 {dimension_numbers = #tpu.dot_dimension_numbers<[1], [0], [0], [1], [0, 0, 1, 1], [], []>} : vector<8x32xf32>, vector<32x128xf32>, vector<8x128xf32> -> vector<8x128xf32>
    %130 = arith.addf %125, %129 : vector<8x128xf32>
    %c64_152 = arith.constant 64 : index
    %c0_153 = arith.constant 0 : index
    %131 = vector.load %arg12[%c64_152, %c0_153] : memref<144x32xf32, #tpu.memory_space<vmem>>, vector<8x32xf32>
    %c7 = arith.constant 7 : index
    %c0_154 = arith.constant 0 : index
    %c0_155 = arith.constant 0 : index
    %132 = vector.load %arg8[%c7, %c0_154, %c0_155] : memref<16x32x128xf32, #tpu.memory_space<vmem>>, vector<1x32x128xf32>
    %133 = vector.shape_cast %132 : vector<1x32x128xf32> to vector<32x128xf32>
    %cst_156 = arith.constant dense<0.000000e+00> : vector<8x128xf32>
    %134 = tpu.matmul %131, %133, %cst_156 {dimension_numbers = #tpu.dot_dimension_numbers<[1], [0], [0], [1], [0, 0, 1, 1], [], []>} : vector<8x32xf32>, vector<32x128xf32>, vector<8x128xf32> -> vector<8x128xf32>
    %135 = arith.addf %130, %134 : vector<8x128xf32>
    %c72_157 = arith.constant 72 : index
    %c0_158 = arith.constant 0 : index
    %136 = vector.load %arg12[%c72_157, %c0_158] : memref<144x32xf32, #tpu.memory_space<vmem>>, vector<8x32xf32>
    %c8_159 = arith.constant 8 : index
    %c0_160 = arith.constant 0 : index
    %c0_161 = arith.constant 0 : index
    %137 = vector.load %arg8[%c8_159, %c0_160, %c0_161] : memref<16x32x128xf32, #tpu.memory_space<vmem>>, vector<1x32x128xf32>
    %138 = vector.shape_cast %137 : vector<1x32x128xf32> to vector<32x128xf32>
    %cst_162 = arith.constant dense<0.000000e+00> : vector<8x128xf32>
    %139 = tpu.matmul %136, %138, %cst_162 {dimension_numbers = #tpu.dot_dimension_numbers<[1], [0], [0], [1], [0, 0, 1, 1], [], []>} : vector<8x32xf32>, vector<32x128xf32>, vector<8x128xf32> -> vector<8x128xf32>
    %140 = arith.addf %135, %139 : vector<8x128xf32>
    %c80_163 = arith.constant 80 : index
    %c0_164 = arith.constant 0 : index
    %141 = vector.load %arg12[%c80_163, %c0_164] : memref<144x32xf32, #tpu.memory_space<vmem>>, vector<8x32xf32>
    %c9 = arith.constant 9 : index
    %c0_165 = arith.constant 0 : index
    %c0_166 = arith.constant 0 : index
    %142 = vector.load %arg8[%c9, %c0_165, %c0_166] : memref<16x32x128xf32, #tpu.memory_space<vmem>>, vector<1x32x128xf32>
    %143 = vector.shape_cast %142 : vector<1x32x128xf32> to vector<32x128xf32>
    %cst_167 = arith.constant dense<0.000000e+00> : vector<8x128xf32>
    %144 = tpu.matmul %141, %143, %cst_167 {dimension_numbers = #tpu.dot_dimension_numbers<[1], [0], [0], [1], [0, 0, 1, 1], [], []>} : vector<8x32xf32>, vector<32x128xf32>, vector<8x128xf32> -> vector<8x128xf32>
    %145 = arith.addf %140, %144 : vector<8x128xf32>
    %c88_168 = arith.constant 88 : index
    %c0_169 = arith.constant 0 : index
    %146 = vector.load %arg12[%c88_168, %c0_169] : memref<144x32xf32, #tpu.memory_space<vmem>>, vector<8x32xf32>
    %c10 = arith.constant 10 : index
    %c0_170 = arith.constant 0 : index
    %c0_171 = arith.constant 0 : index
    %147 = vector.load %arg8[%c10, %c0_170, %c0_171] : memref<16x32x128xf32, #tpu.memory_space<vmem>>, vector<1x32x128xf32>
    %148 = vector.shape_cast %147 : vector<1x32x128xf32> to vector<32x128xf32>
    %cst_172 = arith.constant dense<0.000000e+00> : vector<8x128xf32>
    %149 = tpu.matmul %146, %148, %cst_172 {dimension_numbers = #tpu.dot_dimension_numbers<[1], [0], [0], [1], [0, 0, 1, 1], [], []>} : vector<8x32xf32>, vector<32x128xf32>, vector<8x128xf32> -> vector<8x128xf32>
    %150 = arith.addf %145, %149 : vector<8x128xf32>
    %c96_173 = arith.constant 96 : index
    %c0_174 = arith.constant 0 : index
    %151 = vector.load %arg12[%c96_173, %c0_174] : memref<144x32xf32, #tpu.memory_space<vmem>>, vector<8x32xf32>
    %c11 = arith.constant 11 : index
    %c0_175 = arith.constant 0 : index
    %c0_176 = arith.constant 0 : index
    %152 = vector.load %arg8[%c11, %c0_175, %c0_176] : memref<16x32x128xf32, #tpu.memory_space<vmem>>, vector<1x32x128xf32>
    %153 = vector.shape_cast %152 : vector<1x32x128xf32> to vector<32x128xf32>
    %cst_177 = arith.constant dense<0.000000e+00> : vector<8x128xf32>
    %154 = tpu.matmul %151, %153, %cst_177 {dimension_numbers = #tpu.dot_dimension_numbers<[1], [0], [0], [1], [0, 0, 1, 1], [], []>} : vector<8x32xf32>, vector<32x128xf32>, vector<8x128xf32> -> vector<8x128xf32>
    %155 = arith.addf %150, %154 : vector<8x128xf32>
    %c104_178 = arith.constant 104 : index
    %c0_179 = arith.constant 0 : index
    %156 = vector.load %arg12[%c104_178, %c0_179] : memref<144x32xf32, #tpu.memory_space<vmem>>, vector<8x32xf32>
    %c12_180 = arith.constant 12 : index
    %c0_181 = arith.constant 0 : index
    %c0_182 = arith.constant 0 : index
    %157 = vector.load %arg8[%c12_180, %c0_181, %c0_182] : memref<16x32x128xf32, #tpu.memory_space<vmem>>, vector<1x32x128xf32>
    %158 = vector.shape_cast %157 : vector<1x32x128xf32> to vector<32x128xf32>
    %cst_183 = arith.constant dense<0.000000e+00> : vector<8x128xf32>
    %159 = tpu.matmul %156, %158, %cst_183 {dimension_numbers = #tpu.dot_dimension_numbers<[1], [0], [0], [1], [0, 0, 1, 1], [], []>} : vector<8x32xf32>, vector<32x128xf32>, vector<8x128xf32> -> vector<8x128xf32>
    %160 = arith.addf %155, %159 : vector<8x128xf32>
    %c112_184 = arith.constant 112 : index
    %c0_185 = arith.constant 0 : index
    %161 = vector.load %arg12[%c112_184, %c0_185] : memref<144x32xf32, #tpu.memory_space<vmem>>, vector<8x32xf32>
    %c13 = arith.constant 13 : index
    %c0_186 = arith.constant 0 : index
    %c0_187 = arith.constant 0 : index
    %162 = vector.load %arg8[%c13, %c0_186, %c0_187] : memref<16x32x128xf32, #tpu.memory_space<vmem>>, vector<1x32x128xf32>
    %163 = vector.shape_cast %162 : vector<1x32x128xf32> to vector<32x128xf32>
    %cst_188 = arith.constant dense<0.000000e+00> : vector<8x128xf32>
    %164 = tpu.matmul %161, %163, %cst_188 {dimension_numbers = #tpu.dot_dimension_numbers<[1], [0], [0], [1], [0, 0, 1, 1], [], []>} : vector<8x32xf32>, vector<32x128xf32>, vector<8x128xf32> -> vector<8x128xf32>
    %165 = arith.addf %160, %164 : vector<8x128xf32>
    %c120_189 = arith.constant 120 : index
    %c0_190 = arith.constant 0 : index
    %166 = vector.load %arg12[%c120_189, %c0_190] : memref<144x32xf32, #tpu.memory_space<vmem>>, vector<8x32xf32>
    %c14 = arith.constant 14 : index
    %c0_191 = arith.constant 0 : index
    %c0_192 = arith.constant 0 : index
    %167 = vector.load %arg8[%c14, %c0_191, %c0_192] : memref<16x32x128xf32, #tpu.memory_space<vmem>>, vector<1x32x128xf32>
    %168 = vector.shape_cast %167 : vector<1x32x128xf32> to vector<32x128xf32>
    %cst_193 = arith.constant dense<0.000000e+00> : vector<8x128xf32>
    %169 = tpu.matmul %166, %168, %cst_193 {dimension_numbers = #tpu.dot_dimension_numbers<[1], [0], [0], [1], [0, 0, 1, 1], [], []>} : vector<8x32xf32>, vector<32x128xf32>, vector<8x128xf32> -> vector<8x128xf32>
    %170 = arith.addf %165, %169 : vector<8x128xf32>
    %c128_194 = arith.constant 128 : index
    %c0_195 = arith.constant 0 : index
    %171 = vector.load %arg12[%c128_194, %c0_195] : memref<144x32xf32, #tpu.memory_space<vmem>>, vector<8x32xf32>
    %c15 = arith.constant 15 : index
    %c0_196 = arith.constant 0 : index
    %c0_197 = arith.constant 0 : index
    %172 = vector.load %arg8[%c15, %c0_196, %c0_197] : memref<16x32x128xf32, #tpu.memory_space<vmem>>, vector<1x32x128xf32>
    %173 = vector.shape_cast %172 : vector<1x32x128xf32> to vector<32x128xf32>
    %cst_198 = arith.constant dense<0.000000e+00> : vector<8x128xf32>
    %174 = tpu.matmul %171, %173, %cst_198 {dimension_numbers = #tpu.dot_dimension_numbers<[1], [0], [0], [1], [0, 0, 1, 1], [], []>} : vector<8x32xf32>, vector<32x128xf32>, vector<8x128xf32> -> vector<8x128xf32>
    %175 = arith.addf %170, %174 : vector<8x128xf32>
    %c0_199 = arith.constant 0 : index
    %c0_200 = arith.constant 0 : index
    %176 = vector.load %arg9[%c0_199, %c0_200] : memref<1x128xf32, #tpu.memory_space<vmem>>, vector<1x128xf32>
    %177 = vector.broadcast %176 : vector<1x128xf32> to vector<8x128xf32>
    %178 = arith.addf %175, %177 : vector<8x128xf32>
    %c0_201 = arith.constant 0 : index
    %c0_202 = arith.constant 0 : index
    %179 = vector.load %arg10[%c0_201, %c0_202] : memref<8x128xf32, #tpu.memory_space<vmem>>, vector<8x128xf32>
    tpu.vector_store %arg10[%c0_201, %c0_202], %178 {strides = array<i32>} : memref<8x128xf32, #tpu.memory_space<vmem>>, vector<8x128xf32>,
    return
  }
  func.func @transform_0(%arg0: i32) -> (i32, i32) {
    %c0_i32 = arith.constant 0 : i32
    %c0_i32_0 = arith.constant 0 : i32
    return %arg0, %c0_i32 : i32, i32
  }
  func.func @transform_1(%arg0: i32) -> (i32, i32, i32) {
    %c0_i32 = arith.constant 0 : i32
    %c0_i32_0 = arith.constant 0 : i32
    %c0_i32_1 = arith.constant 0 : i32
    %c0_i32_2 = arith.constant 0 : i32
    return %c0_i32, %c0_i32_0, %c0_i32_1 : i32, i32, i32
  }
  func.func @transform_2(%arg0: i32) -> (i32, i32) {
    %c0_i32 = arith.constant 0 : i32
    %c0_i32_0 = arith.constant 0 : i32
    %c0_i32_1 = arith.constant 0 : i32
    return %c0_i32, %c0_i32_0 : i32, i32
  }
  func.func @transform_3(%arg0: i32) -> (i32, i32, i32) {
    %c0_i32 = arith.constant 0 : i32
    %c0_i32_0 = arith.constant 0 : i32
    %c0_i32_1 = arith.constant 0 : i32
    %c0_i32_2 = arith.constant 0 : i32
    return %c0_i32, %c0_i32_0, %c0_i32_1 : i32, i32, i32
  }
  func.func @transform_4(%arg0: i32) -> (i32, i32) {
    %c0_i32 = arith.constant 0 : i32
    %c0_i32_0 = arith.constant 0 : i32
    %c0_i32_1 = arith.constant 0 : i32
    return %c0_i32, %c0_i32_0 : i32, i32
  }
  func.func @transform_5(%arg0: i32) -> (i32, i32, i32) {
    %c0_i32 = arith.constant 0 : i32
    %c0_i32_0 = arith.constant 0 : i32
    %c0_i32_1 = arith.constant 0 : i32
    %c0_i32_2 = arith.constant 0 : i32
    return %c0_i32, %c0_i32_0, %c0_i32_1 : i32, i32, i32
  }
  func.func @transform_6(%arg0: i32) -> (i32, i32) {
    %c0_i32 = arith.constant 0 : i32
    %c0_i32_0 = arith.constant 0 : i32
    %c0_i32_1 = arith.constant 0 : i32
    return %c0_i32, %c0_i32_0 : i32, i32
  }
  func.func @transform_7(%arg0: i32) -> (i32, i32, i32) {
    %c0_i32 = arith.constant 0 : i32
    %c0_i32_0 = arith.constant 0 : i32
    %c0_i32_1 = arith.constant 0 : i32
    %c0_i32_2 = arith.constant 0 : i32
    return %c0_i32, %c0_i32_0, %c0_i32_1 : i32, i32, i32
  }
  func.func @transform_8(%arg0: i32) -> (i32, i32) {
    %c0_i32 = arith.constant 0 : i32
    %c0_i32_0 = arith.constant 0 : i32
    %c0_i32_1 = arith.constant 0 : i32
    return %c0_i32, %c0_i32_0 : i32, i32
  }
  func.func @transform_9(%arg0: i32) -> (i32, i32) {
    %c0_i32 = arith.constant 0 : i32
    %c0_i32_0 = arith.constant 0 : i32
    return %arg0, %c0_i32 : i32, i32
  }
}

</mosaic_0001>

<llo_original>
// kernel: cnn_forward.1
$region0: #{cnn_forward.1}
  #allocation0 [shape = 'u32[]', space=smem, size = 0x4, offset = 0x4, fixed_abs, tag = 'smem constant byte address 0x4 - core index']
  #allocation1 [shape = 'u32[144,128]{1,0:T(1,128)}', space=vmem, size = 0x12000, scoped, tag = 'internal scratch']
  #allocation2 [shape = 'f32[144,32]{1,0:T(8,128)}', space=vmem, size = 0x12000, scoped, tag = 'scratch operand']
  #allocation3 [shape = 'f32[144,32]{1,0:T(8,128)}', space=vmem, size = 0x12000, scoped, tag = 'scratch operand']
  %s0 = inlined_call_operand.vmem [shape: f32[16,64], index: 0, kind: input, shape index: {}]
  %s1 = inlined_call_operand.vmem [shape: f32[3,4,32], index: 1, kind: input, shape index: {}]
  %s2 = inlined_call_operand.vmem [shape: f32[1,32], index: 2, kind: input, shape index: {}]
  %s3 = inlined_call_operand.vmem [shape: f32[3,32,32], index: 3, kind: input, shape index: {}]
  %s4 = inlined_call_operand.vmem [shape: f32[1,32], index: 4, kind: input, shape index: {}]
  %s5 = inlined_call_operand.vmem [shape: f32[3,32,32], index: 5, kind: input, shape index: {}]
  %s6 = inlined_call_operand.vmem [shape: f32[1,32], index: 6, kind: input, shape index: {}]
  %s7 = inlined_call_operand.hbm [shape: f32[16,32,128], index: 7, kind: input, shape index: {}]
  %s8 = inlined_call_operand.vmem [shape: f32[1,128], index: 8, kind: input, shape index: {}]
  %s9 = inlined_call_operand.vmem [shape: f32[16,128], index: 9, kind: output, shape index: {}]
  %s10 = sld [smem:[#allocation0]]
  $region73: #{cnn_forward.1} parent=0
    _
  %s12 = ssub.s32 1, %s10
  %s13 = scalar_select 0, %s12, %s10
  $region1: #{cnn_forward.1} parent=0
    #allocation4 [shape = 'u8[262144]{0}', space=vmem, size = 0x40000, scoped, tag = 'input window, operand 7, single buffered']
    #allocation5 [shape = 's32[2]{0}', space=sflag, size = 0x8, scoped, tag = 'scoped memory for cnn_forward.1']
    %14 = vsyncpa [#allocation5], 0
    loop: start=0, step=1, limit=4
    $region2: #{cnn_forward.1} parent=1 // loop_pre_header
      _
    $region3: #{cnn_forward.1} parent=1 // loop_header
      %s16 = sphi 0, %s20
      %p17 = scmp.ge.s32.totalorder %s16, 4
      %s26 = sphi 0, %s28
      %s29 = sphi 0, %s26
      %s30 = sphi 0, %s29
      %s46 = sphi 0, %s30
      %s50 = sphi 0, %s50
      %s52 = sphi 0, %s50
      %s53 = sphi 0, %s52
      %s67 = sphi 0, %s53
      %s71 = sphi 0, %s71
      %s73 = sphi 0, %s71
      %s74 = sphi 0, %s73
      %s88 = sphi 0, %s74
      %s92 = sphi 0, %s92
      %s94 = sphi 0, %s92
      %s95 = sphi 0, %s94
      %s109 = sphi 0, %s95
      %s113 = sphi 0, %s113
      %s115 = sphi 0, %s113
      %s116 = sphi 0, %s115
      %s130 = sphi 0, %s116
      %s134 = sphi 0, %s134
      %s136 = sphi 0, %s134
      %s137 = sphi 0, %s136
      %s151 = sphi 0, %s137
      %s155 = sphi 0, %s155
      %s157 = sphi 0, %s155
      %s158 = sphi 0, %s157
      %s172 = sphi 0, %s158
      %s176 = sphi 0, %s176
      %s178 = sphi 0, %s176
      %s179 = sphi 0, %s178
      %s193 = sphi 0, %s179
      %s197 = sphi 0, %s197
      %s199 = sphi 0, %s197
      %s200 = sphi 0, %s199
      %s214 = sphi 0, %s200
      %s220 = sphi 0, %s222
      %s223 = sphi 0, %s220
      %s224 = sphi 0, %s223
      %s240 = sphi 0, %s224
    $region4: #{cnn_forward.1} parent=1 // loop_header_branch
      %19 = sbr.rel (%p17) target = $region8
    $region5: #{cnn_forward.1} parent=1 // loop_body
      %s21 = ssub.s32 %s16, 1
      %s22 = ssub.s32 %s16, 2
      %s23 = sadd.s32 %s16, 1
      %s24 = ssub.s32 %s16, %s23
      %p25 = scmp.eq.s32.totalorder %s24, 0
      %s27 = sadd.s32 %s26, 1
      %s28 = scalar_select %p25, %s26, %s27
      %p31 = pneg %p25
      %p32 = scmp.eq.s32.totalorder %s16, 1
      %p33 = por %p31, %p32
      %p34 = scmp.ne.s32.totalorder %s26, %s29
      %p35 = scmp.eq.s32.totalorder %s16, 0
      %p36 = por %p34, %p35
      %p37 = scmp.ne.s32.totalorder %s26, %s29
      %p38 = scmp.eq.s32.totalorder %s21, 1
      %p39 = por %p37, %p38
      %p40 = scmp.ne.s32.totalorder %s29, %s30
      %p41 = scmp.eq.s32.totalorder %s21, 0
      %p42 = por %p40, %p41
      %p43 = scmp.ne.s32.totalorder %s29, %s30
      %p44 = scmp.eq.s32.totalorder %s22, 1
      %p45 = por %p43, %p44
      %p47 = scmp.ne.s32.totalorder %s30, %s46
      %p48 = scmp.eq.s32.totalorder %s22, 0
      %p49 = por %p47, %p48
      %s51 = sadd.s32 %s50, 1
      %p54 = scmp.eq.s32.totalorder %s16, 1
      %p55 = scmp.ne.s32.totalorder %s50, %s52
      %p56 = scmp.eq.s32.totalorder %s16, 0
      %p57 = por %p55, %p56
      %p58 = scmp.ne.s32.totalorder %s50, %s52
      %p59 = scmp.eq.s32.totalorder %s21, 1
      %p60 = por %p58, %p59
      %p61 = scmp.ne.s32.totalorder %s52, %s53
      %p62 = scmp.eq.s32.totalorder %s21, 0
      %p63 = por %p61, %p62
      %p64 = scmp.ne.s32.totalorder %s52, %s53
      %p65 = scmp.eq.s32.totalorder %s22, 1
      %p66 = por %p64, %p65
      %p68 = scmp.ne.s32.totalorder %s53, %s67
      %p69 = scmp.eq.s32.totalorder %s22, 0
      %p70 = por %p68, %p69
      %s72 = sadd.s32 %s71, 1
      %p75 = scmp.eq.s32.totalorder %s16, 1
      %p76 = scmp.ne.s32.totalorder %s71, %s73
      %p77 = scmp.eq.s32.totalorder %s16, 0
      %p78 = por %p76, %p77
      %p79 = scmp.ne.s32.totalorder %s71, %s73
      %p80 = scmp.eq.s32.totalorder %s21, 1
      %p81 = por %p79, %p80
      %p82 = scmp.ne.s32.totalorder %s73, %s74
      %p83 = scmp.eq.s32.totalorder %s21, 0
      %p84 = por %p82, %p83
      %p85 = scmp.ne.s32.totalorder %s73, %s74
      %p86 = scmp.eq.s32.totalorder %s22, 1
      %p87 = por %p85, %p86
      %p89 = scmp.ne.s32.totalorder %s74, %s88
      %p90 = scmp.eq.s32.totalorder %s22, 0
      %p91 = por %p89, %p90
      %s93 = sadd.s32 %s92, 1
      %p96 = scmp.eq.s32.totalorder %s16, 1
      %p97 = scmp.ne.s32.totalorder %s92, %s94
      %p98 = scmp.eq.s32.totalorder %s16, 0
      %p99 = por %p97, %p98
      %p100 = scmp.ne.s32.totalorder %s92, %s94
      %p101 = scmp.eq.s32.totalorder %s21, 1
      %p102 = por %p100, %p101
      %p103 = scmp.ne.s32.totalorder %s94, %s95
      %p104 = scmp.eq.s32.totalorder %s21, 0
      %p105 = por %p103, %p104
      %p106 = scmp.ne.s32.totalorder %s94, %s95
      %p107 = scmp.eq.s32.totalorder %s22, 1
      %p108 = por %p106, %p107
      %p110 = scmp.ne.s32.totalorder %s95, %s109
      %p111 = scmp.eq.s32.totalorder %s22, 0
      %p112 = por %p110, %p111
      %s114 = sadd.s32 %s113, 1
      %p117 = scmp.eq.s32.totalorder %s16, 1
      %p118 = scmp.ne.s32.totalorder %s113, %s115
      %p119 = scmp.eq.s32.totalorder %s16, 0
      %p120 = por %p118, %p119
      %p121 = scmp.ne.s32.totalorder %s113, %s115
      %p122 = scmp.eq.s32.totalorder %s21, 1
      %p123 = por %p121, %p122
      %p124 = scmp.ne.s32.totalorder %s115, %s116
      %p125 = scmp.eq.s32.totalorder %s21, 0
      %p126 = por %p124, %p125
      %p127 = scmp.ne.s32.totalorder %s115, %s116
      %p128 = scmp.eq.s32.totalorder %s22, 1
      %p129 = por %p127, %p128
      %p131 = scmp.ne.s32.totalorder %s116, %s130
      %p132 = scmp.eq.s32.totalorder %s22, 0
      %p133 = por %p131, %p132
      %s135 = sadd.s32 %s134, 1
      %p138 = scmp.eq.s32.totalorder %s16, 1
      %p139 = scmp.ne.s32.totalorder %s134, %s136
      %p140 = scmp.eq.s32.totalorder %s16, 0
      %p141 = por %p139, %p140
      %p142 = scmp.ne.s32.totalorder %s134, %s136
      %p143 = scmp.eq.s32.totalorder %s21, 1
      %p144 = por %p142, %p143
      %p145 = scmp.ne.s32.totalorder %s136, %s137
      %p146 = scmp.eq.s32.totalorder %s21, 0
      %p147 = por %p145, %p146
      %p148 = scmp.ne.s32.totalorder %s136, %s137
      %p149 = scmp.eq.s32.totalorder %s22, 1
      %p150 = por %p148, %p149
      %p152 = scmp.ne.s32.totalorder %s137, %s151
      %p153 = scmp.eq.s32.totalorder %s22, 0
      %p154 = por %p152, %p153
      %s156 = sadd.s32 %s155, 1
      %p159 = scmp.eq.s32.totalorder %s16, 1
      %p160 = scmp.ne.s32.totalorder %s155, %s157
      %p161 = scmp.eq.s32.totalorder %s16, 0
      %p162 = por %p160, %p161
      %p163 = scmp.ne.s32.totalorder %s155, %s157
      %p164 = scmp.eq.s32.totalorder %s21, 1
      %p165 = por %p163, %p164
      %p166 = scmp.ne.s32.totalorder %s157, %s158
      %p167 = scmp.eq.s32.totalorder %s21, 0
      %p168 = por %p166, %p167
      %p169 = scmp.ne.s32.totalorder %s157, %s158
      %p170 = scmp.eq.s32.totalorder %s22, 1
      %p171 = por %p169, %p170
      %p173 = scmp.ne.s32.totalorder %s158, %s172
      %p174 = scmp.eq.s32.totalorder %s22, 0
      %p175 = por %p173, %p174
      %s177 = sadd.s32 %s176, 1
      %p180 = scmp.eq.s32.totalorder %s16, 1
      %p181 = scmp.ne.s32.totalorder %s176, %s178
      %p182 = scmp.eq.s32.totalorder %s16, 0
      %p183 = por %p181, %p182
      %p184 = scmp.ne.s32.totalorder %s176, %s178
      %p185 = scmp.eq.s32.totalorder %s21, 1
      %p186 = por %p184, %p185
      %p187 = scmp.ne.s32.totalorder %s178, %s179
      %p188 = scmp.eq.s32.totalorder %s21, 0
      %p189 = por %p187, %p188
      %p190 = scmp.ne.s32.totalorder %s178, %s179
      %p191 = scmp.eq.s32.totalorder %s22, 1
      %p192 = por %p190, %p191
      %p194 = scmp.ne.s32.totalorder %s179, %s193
      %p195 = scmp.eq.s32.totalorder %s22, 0
      %p196 = por %p194, %p195
      %s198 = sadd.s32 %s197, 1
      %p201 = scmp.eq.s32.totalorder %s16, 1
      %p202 = scmp.ne.s32.totalorder %s197, %s199
      %p203 = scmp.eq.s32.totalorder %s16, 0
      %p204 = por %p202, %p203
      %p205 = scmp.ne.s32.totalorder %s197, %s199
      %p206 = scmp.eq.s32.totalorder %s21, 1
      %p207 = por %p205, %p206
      %p208 = scmp.ne.s32.totalorder %s199, %s200
      %p209 = scmp.eq.s32.totalorder %s21, 0
      %p210 = por %p208, %p209
      %p211 = scmp.ne.s32.totalorder %s199, %s200
      %p212 = scmp.eq.s32.totalorder %s22, 1
      %p213 = por %p211, %p212
      %p215 = scmp.ne.s32.totalorder %s200, %s214
      %p216 = scmp.eq.s32.totalorder %s22, 0
      %p217 = por %p215, %p216
      %s218 = ssub.s32 %s16, %s23
      %p219 = scmp.eq.s32.totalorder %s218, 0
      %s221 = sadd.s32 %s220, 1
      %s222 = scalar_select %p219, %s220, %s221
      %p225 = pneg %p219
      %p226 = scmp.eq.s32.totalorder %s16, 1
      %p227 = por %p225, %p226
      %p228 = scmp.ne.s32.totalorder %s220, %s223
      %p229 = scmp.eq.s32.totalorder %s16, 0
      %p230 = por %p228, %p229
      %p231 = scmp.ne.s32.totalorder %s220, %s223
      %p232 = scmp.eq.s32.totalorder %s21, 1
      %p233 = por %p231, %p232
      %p234 = scmp.ne.s32.totalorder %s223, %s224
      %p235 = scmp.eq.s32.totalorder %s21, 0
      %p236 = por %p234, %p235
      %p237 = scmp.ne.s32.totalorder %s223, %s224
      %p238 = scmp.eq.s32.totalorder %s22, 1
      %p239 = por %p237, %p238
      %p241 = scmp.ne.s32.totalorder %s224, %s240
      %p242 = scmp.eq.s32.totalorder %s22, 0
      %p243 = por %p241, %p242
      %p244 = scmp.le.s32.totalorder 1, %s16
      %p245 = scmp.lt.s32.totalorder %s16, 3
      %p246 = pnand %p244, %p245
      %p247 = pneg %p246
      // Predicated region
      $region9: #{cnn_forward.1} parent=5 // pred_check
        _
      $region10: #{cnn_forward.1} parent=5 // pred_check_branch
        %249 = sbr.rel (%p246) target = $region12
      $region11: #{cnn_forward.1} parent=5 // pred_region
        %s250 = ssub.s32 %s16, 1
        // Predicated region
        $region13: #{cnn_forward.1} parent=11 // pred_check
          %p251 = pneg %p63
        $region14: #{cnn_forward.1} parent=11 // pred_check_branch
          %253 = sbr.rel (%p251) target = $region16
        $region15: #{cnn_forward.1} parent=11 // pred_region
          _
        $region16: #{cnn_forward.1} parent=11 // pred_fallthru
          _
        // Predicated region
        $region17: #{cnn_forward.1} parent=11 // pred_check
          %p254 = pneg %p84
        $region18: #{cnn_forward.1} parent=11 // pred_check_branch
          %256 = sbr.rel (%p254) target = $region20
        $region19: #{cnn_forward.1} parent=11 // pred_region
          _
        $region20: #{cnn_forward.1} parent=11 // pred_fallthru
          _
        // Predicated region
        $region21: #{cnn_forward.1} parent=11 // pred_check
          %p257 = pneg %p105
        $region22: #{cnn_forward.1} parent=11 // pred_check_branch
          %259 = sbr.rel (%p257) target = $region24
        $region23: #{cnn_forward.1} parent=11 // pred_region
          _
        $region24: #{cnn_forward.1} parent=11 // pred_fallthru
          _
        // Predicated region
        $region25: #{cnn_forward.1} parent=11 // pred_check
          %p260 = pneg %p126
        $region26: #{cnn_forward.1} parent=11 // pred_check_branch
          %262 = sbr.rel (%p260) target = $region28
        $region27: #{cnn_forward.1} parent=11 // pred_region
          _
        $region28: #{cnn_forward.1} parent=11 // pred_fallthru
          _
        // Predicated region
        $region29: #{cnn_forward.1} parent=11 // pred_check
          %p263 = pneg %p147
        $region30: #{cnn_forward.1} parent=11 // pred_check_branch
          %265 = sbr.rel (%p263) target = $region32
        $region31: #{cnn_forward.1} parent=11 // pred_region
          _
        $region32: #{cnn_forward.1} parent=11 // pred_fallthru
          _
        // Predicated region
        $region33: #{cnn_forward.1} parent=11 // pred_check
          %p266 = pneg %p168
        $region34: #{cnn_forward.1} parent=11 // pred_check_branch
          %268 = sbr.rel (%p266) target = $region36
        $region35: #{cnn_forward.1} parent=11 // pred_region
          _
        $region36: #{cnn_forward.1} parent=11 // pred_fallthru
          _
        // Predicated region
        $region37: #{cnn_forward.1} parent=11 // pred_check
          %p269 = pneg %p189
        $region38: #{cnn_forward.1} parent=11 // pred_check_branch
          %271 = sbr.rel (%p269) target = $region40
        $region39: #{cnn_forward.1} parent=11 // pred_region
          %s273 = ssub.s32 8192, 8192
          %274 = vsyncadd [#allocation5], %s273
          %s275 = sshll.u32 [#allocation4], 4
          %s276 = int_to_ptr.vmem [resolvable:$true] %s275
          %281 = dma.hbm_to_vmem [thread:$0]  %s7, 8192, %s276, [#allocation5], 128, 128, 8
        $region40: #{cnn_forward.1} parent=11 // pred_fallthru
          _
        // Predicated region
        $region41: #{cnn_forward.1} parent=11 // pred_check
          %p282 = pneg %p210
        $region42: #{cnn_forward.1} parent=11 // pred_check_branch
          %284 = sbr.rel (%p282) target = $region44
        $region43: #{cnn_forward.1} parent=11 // pred_region
          _
        $region44: #{cnn_forward.1} parent=11 // pred_fallthru
          _
      $region12: #{cnn_forward.1} parent=5 // pred_fallthru
        _
      %p285 = scmp.lt.s32.totalorder %s16, 2
      // Predicated region
      $region45: #{cnn_forward.1} parent=5 // pred_check
        %p286 = pneg %p285
      $region46: #{cnn_forward.1} parent=5 // pred_check_branch
        %288 = sbr.rel (%p286) target = $region48
      $region47: #{cnn_forward.1} parent=5 // pred_region
        // Predicated region
        $region49: #{cnn_forward.1} parent=47 // pred_check
          %p289 = pneg %p36
        $region50: #{cnn_forward.1} parent=47 // pred_check_branch
          %291 = sbr.rel (%p289) target = $region52
        $region51: #{cnn_forward.1} parent=47 // pred_region
          %p292 = scmp.lt.s32.totalorder %s16, 1
          %s293 = scalar_select %p292, %s16, 1
          %s294 = smul.addr %s293, 8
          %s295 = scalar_lea.vmem %s0, %s294
        $region52: #{cnn_forward.1} parent=47 // pred_fallthru
          _
      $region48: #{cnn_forward.1} parent=5 // pred_fallthru
        _
      %p296 = scmp.le.s32.totalorder 1, %s16
      %p297 = scmp.lt.s32.totalorder %s16, 3
      %p298 = pnand %p296, %p297
      %p299 = pneg %p298
      // Predicated region
      $region53: #{cnn_forward.1} parent=5 // pred_check
        _
      $region54: #{cnn_forward.1} parent=5 // pred_check_branch
        %301 = sbr.rel (%p298) target = $region56
      $region55: #{cnn_forward.1} parent=5 // pred_region
        %s302 = ssub.s32 %s16, 1
        // Predicated region
        $region57: #{cnn_forward.1} parent=55 // pred_check
          %p303 = pneg %p189
        $region58: #{cnn_forward.1} parent=55 // pred_check_branch
          %305 = sbr.rel (%p303) target = $region60
        $region59: #{cnn_forward.1} parent=55 // pred_region
          %306 = dma.done [#allocation5], 8192
        $region60: #{cnn_forward.1} parent=55 // pred_fallthru
          _
        %p307 = scmp.lt.s32.totalorder %s21, 1
        %s308 = scalar_select %p307, %s21, 1
        %s309 = smul.addr %s308, 8
        %s310 = scalar_lea.vmem %s0, %s309
        %p311 = pneg %p42
        %p312 = pneg %p39
        %p313 = pneg %p63
        %p314 = pneg %p60
        %p315 = pneg %p84
        %p316 = pneg %p81
        %p317 = pneg %p105
        %p318 = pneg %p102
        %p319 = pneg %p126
        %p320 = pneg %p123
        %p321 = pneg %p147
        %p322 = pneg %p144
        %p323 = pneg %p168
        %p324 = pneg %p165
        %p325 = pneg %p189
        %p326 = pneg %p186
        %p327 = pneg %p210
        %p328 = pneg %p207
        %p329 = pneg %p236
        %p330 = pneg %p233
        %p331 = scmp.lt.s32.totalorder %s21, 1
        %s332 = scalar_select %p331, %s21, 1
        %s333 = smul.addr %s332, 8
        %s334 = scalar_lea.vmem %s9, %s333
        %p335 = scmp.lt.s32.totalorder %s21, 1
        %s336 = scalar_select %p335, %s21, 1
        %s337 = smul.addr %s336, 8
        %s338 = scalar_lea.vmem %s0, %s337
        %p339 = scmp.lt.s32.totalorder %s21, 1
        %s340 = scalar_select %p339, %s21, 1
        %s341 = smul.addr %s340, 8
        %s342 = scalar_lea.vmem %s9, %s341
        %vm343 = vcmask 261120
        %344 = vst.msk [vmem:[#allocation2] sm:$0xff] %vm343, 0.0
        %345 = vst.msk [vmem:[#allocation2 + $0x88] sm:$0xff] %vm343, 0.0
        %346 = vst.msk [vmem:[#allocation3] sm:$0xff] %vm343, 0.0
        %347 = vst.msk [vmem:[#allocation3 + $0x88] sm:$0xff] %vm343, 0.0
        %v348 = vld [vmem:[%s338] sm:$0xff]
        %vm349 = vcmask 31744
        %350 = vst.msk [vmem:[#allocation2 + $0x8] sm:$0xff] %vm349, %v348
        %v351 = vld [vmem:[%s338] sm:$0xff]
        %353 = vrot.lane.b32.xlu0 %v351, 124
        %v354 = vpop.permute.xlu0 %353
        %356 = vst.msk [vmem:[#allocation2 + $0x10] sm:$0xff] %vm349, %v354
        %v357 = vld [vmem:[%s338] sm:$0xff]
        %359 = vrot.lane.b32.xlu0 %v357, 120
        %v360 = vpop.permute.xlu0 %359
        %362 = vst.msk [vmem:[#allocation2 + $0x18] sm:$0xff] %vm349, %v360
        %v363 = vld [vmem:[%s338] sm:$0xff]
        %365 = vrot.lane.b32.xlu0 %v363, 116
        %v366 = vpop.permute.xlu0 %365
        %368 = vst.msk [vmem:[#allocation2 + $0x20] sm:$0xff] %vm349, %v366
        %v369 = vld [vmem:[%s338] sm:$0xff]
        %371 = vrot.lane.b32.xlu0 %v369, 112
        %v372 = vpop.permute.xlu0 %371
        %374 = vst.msk [vmem:[#allocation2 + $0x28] sm:$0xff] %vm349, %v372
        %v375 = vld [vmem:[%s338] sm:$0xff]
        %377 = vrot.lane.b32.xlu0 %v375, 108
        %v378 = vpop.permute.xlu0 %377
        %380 = vst.msk [vmem:[#allocation2 + $0x30] sm:$0xff] %vm349, %v378
        %v381 = vld [vmem:[%s338] sm:$0xff]
        %383 = vrot.lane.b32.xlu0 %v381, 104
        %v384 = vpop.permute.xlu0 %383
        %386 = vst.msk [vmem:[#allocation2 + $0x38] sm:$0xff] %vm349, %v384
        %v387 = vld [vmem:[%s338] sm:$0xff]
        %389 = vrot.lane.b32.xlu0 %v387, 100
        %v390 = vpop.permute.xlu0 %389
        %392 = vst.msk [vmem:[#allocation2 + $0x40] sm:$0xff] %vm349, %v390
        %v393 = vld [vmem:[%s338] sm:$0xff]
        %395 = vrot.lane.b32.xlu0 %v393, 96
        %v396 = vpop.permute.xlu0 %395
        %398 = vst.msk [vmem:[#allocation2 + $0x48] sm:$0xff] %vm349, %v396
        %v399 = vld [vmem:[%s338] sm:$0xff]
        %401 = vrot.lane.b32.xlu0 %v399, 92
        %v402 = vpop.permute.xlu0 %401
        %404 = vst.msk [vmem:[#allocation2 + $0x50] sm:$0xff] %vm349, %v402
        %v405 = vld [vmem:[%s338] sm:$0xff]
        %407 = vrot.lane.b32.xlu0 %v405, 88
        %v408 = vpop.permute.xlu0 %407
        %410 = vst.msk [vmem:[#allocation2 + $0x58] sm:$0xff] %vm349, %v408
        %v411 = vld [vmem:[%s338] sm:$0xff]
        %413 = vrot.lane.b32.xlu0 %v411, 84
        %v414 = vpop.permute.xlu0 %413
        %416 = vst.msk [vmem:[#allocation2 + $0x60] sm:$0xff] %vm349, %v414
        %v417 = vld [vmem:[%s338] sm:$0xff]
        %419 = vrot.lane.b32.xlu0 %v417, 80
        %v420 = vpop.permute.xlu0 %419
        %422 = vst.msk [vmem:[#allocation2 + $0x68] sm:$0xff] %vm349, %v420
        %v423 = vld [vmem:[%s338] sm:$0xff]
        %425 = vrot.lane.b32.xlu0 %v423, 76
        %v426 = vpop.permute.xlu0 %425
        %428 = vst.msk [vmem:[#allocation2 + $0x70] sm:$0xff] %vm349, %v426
        %v429 = vld [vmem:[%s338] sm:$0xff]
        %431 = vrot.lane.b32.xlu0 %v429, 72
        %v432 = vpop.permute.xlu0 %431
        %434 = vst.msk [vmem:[#allocation2 + $0x78] sm:$0xff] %vm349, %v432
        %v435 = vld [vmem:[%s338] sm:$0xff]
        %437 = vrot.lane.b32.xlu0 %v435, 68
        %v438 = vpop.permute.xlu0 %437
        %440 = vst.msk [vmem:[#allocation2 + $0x80] sm:$0xff] %vm349, %v438
        %v441 = vld [vmem:[#allocation2] sm:$0xff]
        %v442 = vld [vmem:[#allocation2 + $0x8] sm:$0xff]
        %v443 = vld [vmem:[#allocation2 + $0x10] sm:$0xff]
        %v444 = vld [vmem:[#allocation2 + $0x18] sm:$0xff]
        %v445 = vld [vmem:[#allocation2 + $0x20] sm:$0xff]
        %v446 = vld [vmem:[#allocation2 + $0x28] sm:$0xff]
        %v447 = vld [vmem:[#allocation2 + $0x30] sm:$0xff]
        %v448 = vld [vmem:[#allocation2 + $0x38] sm:$0xff]
        %v449 = vld [vmem:[#allocation2 + $0x40] sm:$0xff]
        %v450 = vld [vmem:[#allocation2 + $0x48] sm:$0xff]
        %v451 = vld [vmem:[#allocation2 + $0x50] sm:$0xff]
        %v452 = vld [vmem:[#allocation2 + $0x58] sm:$0xff]
        %v453 = vld [vmem:[#allocation2 + $0x60] sm:$0xff]
        %v454 = vld [vmem:[#allocation2 + $0x68] sm:$0xff]
        %v455 = vld [vmem:[#allocation2 + $0x70] sm:$0xff]
        %v456 = vld [vmem:[#allocation2 + $0x78] sm:$0xff]
        %v457 = vld [vmem:[%s1] sm:$0xf]
        %v458 = vld [vmem:[#allocation2 + $0x80] sm:$0xff]
        %s459 = scalar_lea.vmem %s1, 4
        %v460 = vld [vmem:[%s459] sm:$0xf]
        %v462 = vsel %vm349, %v442, 0
        %v465 = vsel %vm349, %v443, 0
        %v468 = vsel %vm349, %v444, 0
        %v471 = vsel %vm349, %v445, 0
        %v474 = vsel %vm349, %v446, 0
        %v477 = vsel %vm349, %v447, 0
        %v480 = vsel %vm349, %v448, 0
        %v483 = vsel %vm349, %v449, 0
        %v486 = vsel %vm349, %v450, 0
        %v489 = vsel %vm349, %v451, 0
        %v492 = vsel %vm349, %v452, 0
        %v495 = vsel %vm349, %v453, 0
        %v498 = vsel %vm349, %v454, 0
        %v501 = vsel %vm349, %v455, 0
        %v504 = vsel %vm349, %v456, 0
        %v507 = vsel %vm349, %v458, 0
        %vm509 = vcmask 1043456
        %v511 = vsel %vm509, %v460, 0
        %513 = vmatprep.subr.mxu0 0.0
        %514 = vmatpush1.msra.mxu0 %v511
        %515 = vmatprep.subr.mxu0 0.0
        %516 = vmatpush1.msra.mxu0 0.0
        %517 = vmatprep.subr.mxu0 0.0
        %518 = vmatpush1.msra.mxu0 0.0
        %519 = vmatprep.subr.mxu0 0.0
        %520 = vmatpush1.msra.mxu0 0.0
        %521 = vmatprep.subr.mxu0 0.0
        %522 = vmatpush1.msra.mxu0 0.0
        %523 = vmatprep.subr.mxu0 0.0
        %524 = vmatpush1.msra.mxu0 0.0
        %525 = vmatprep.subr.mxu0 0.0
        %526 = vmatpush1.msra.mxu0 0.0
        %527 = vmatprep.subr.mxu0 0.0
        %528 = vmatpush1.msra.mxu0 0.0
        %529 = vmatprep.subr.mxu0 0.0
        %530 = vmatpush1.msra.mxu0 0.0
        %531 = vmatprep.subr.mxu0 0.0
        %532 = vmatpush1.msra.mxu0 0.0
        %533 = vmatprep.subr.mxu0 0.0
        %534 = vmatpush1.msra.mxu0 0.0
        %535 = vmatprep.subr.mxu0 0.0
        %536 = vmatpush1.msra.mxu0 0.0
        %537 = vmatprep.subr.mxu0 0.0
        %538 = vmatpush1.msra.mxu0 0.0
        %539 = vmatprep.subr.mxu0 0.0
        %540 = vmatpush1.msra.mxu0 0.0
        %541 = vmatprep.subr.mxu0 0.0
        %542 = vmatpush1.msra.mxu0 0.0
        %543 = vmatprep.subr.mxu0 0.0
        %544 = vmatpush1.msra.mxu0 0.0
        %545 = vmatprep.subr.mxu0 0.0
        %546 = vmatpush1.msra.mxu0 0.0
        %547 = vmatprep.subr.mxu0 0.0
        %548 = vmatpush1.msra.mxu0 0.0
        %549 = vmatprep.subr.mxu0 0.0
        %550 = vmatpush1.msra.mxu0 0.0
        %551 = vmatprep.subr.mxu0 0.0
        %552 = vmatpush1.msra.mxu0 0.0
        %553 = vmatprep.subr.mxu0 0.0
        %554 = vmatpush1.msra.mxu0 0.0
        %555 = vmatprep.subr.mxu0 0.0
        %556 = vmatpush1.msra.mxu0 0.0
        %557 = vmatprep.subr.mxu0 0.0
        %558 = vmatpush1.msra.mxu0 0.0
        %559 = vmatprep.subr.mxu0 0.0
        %560 = vmatpush1.msra.mxu0 0.0
        %561 = vmatprep.subr.mxu0 0.0
        %562 = vmatpush1.msra.mxu0 0.0
        %563 = vmatprep.subr.mxu0 0.0
        %564 = vmatpush1.msra.mxu0 0.0
        %565 = vmatprep.subr.mxu0 0.0
        %566 = vmatpush1.msra.mxu0 0.0
        %567 = vmatprep.subr.mxu0 0.0
        %568 = vmatpush1.msra.mxu0 0.0
        %569 = vmatprep.subr.mxu0 0.0
        %570 = vmatpush1.msra.mxu0 0.0
        %571 = vmatprep.subr.mxu0 0.0
        %572 = vmatpush1.msra.mxu0 0.0
        %573 = vmatprep.subr.mxu0 0.0
        %574 = vmatpush1.msra.mxu0 0.0
        %575 = vmatprep.subr.mxu0 0.0
        %576 = vmatpush1.msra.mxu0 0.0
        %577 = vmatprep.mubr.f32.mxu0 0.0
        %578 = vmatmul.mubr.f32.gmra.mrb[0].mxu0 %v462
        %v579 = vpop.f32.mrb[0].mxu0
        %v580 = vadd.f32 0.0, %v579
        %v581 = vpop.f32.mrb[0].mxu0
        %582 = vmatprep.mubr.f32.mxu0 0.0
        %583 = vmatmul.mubr.f32.gmra.mrb[0].mxu0 %v465
        %v584 = vpop.f32.mrb[0].mxu0
        %v585 = vadd.f32 0.0, %v584
        %v586 = vpop.f32.mrb[0].mxu0
        %587 = vmatprep.mubr.f32.mxu0 0.0
        %588 = vmatmul.mubr.f32.gmra.mrb[0].mxu0 %v468
        %v589 = vpop.f32.mrb[0].mxu0
        %v590 = vadd.f32 0.0, %v589
        %v591 = vpop.f32.mrb[0].mxu0
        %592 = vmatprep.mubr.f32.mxu0 0.0
        %593 = vmatmul.mubr.f32.gmra.mrb[0].mxu0 %v471
        %v594 = vpop.f32.mrb[0].mxu0
        %v595 = vadd.f32 0.0, %v594
        %v596 = vpop.f32.mrb[0].mxu0
        %597 = vmatprep.mubr.f32.mxu0 0.0
        %598 = vmatmul.mubr.f32.gmra.mrb[0].mxu0 %v474
        %v599 = vpop.f32.mrb[0].mxu0
        %v600 = vadd.f32 0.0, %v599
        %v601 = vpop.f32.mrb[0].mxu0
        %602 = vmatprep.mubr.f32.mxu0 0.0
        %603 = vmatmul.mubr.f32.gmra.mrb[0].mxu0 %v477
        %v604 = vpop.f32.mrb[0].mxu0
        %v605 = vadd.f32 0.0, %v604
        %v606 = vpop.f32.mrb[0].mxu0
        %607 = vmatprep.mubr.f32.mxu0 0.0
        %608 = vmatmul.mubr.f32.gmra.mrb[0].mxu0 %v480
        %v609 = vpop.f32.mrb[0].mxu0
        %v610 = vadd.f32 0.0, %v609
        %v611 = vpop.f32.mrb[0].mxu0
        %612 = vmatprep.mubr.f32.mxu0 0.0
        %613 = vmatmul.mubr.f32.gmra.mrb[0].mxu0 %v483
        %v614 = vpop.f32.mrb[0].mxu0
        %v615 = vadd.f32 0.0, %v614
        %v616 = vpop.f32.mrb[0].mxu0
        %617 = vmatprep.mubr.f32.mxu0 0.0
        %618 = vmatmul.mubr.f32.gmra.mrb[0].mxu0 %v486
        %v619 = vpop.f32.mrb[0].mxu0
        %v620 = vadd.f32 0.0, %v619
        %v621 = vpop.f32.mrb[0].mxu0
        %622 = vmatprep.mubr.f32.mxu0 0.0
        %623 = vmatmul.mubr.f32.gmra.mrb[0].mxu0 %v489
        %v624 = vpop.f32.mrb[0].mxu0
        %v625 = vadd.f32 0.0, %v624
        %v626 = vpop.f32.mrb[0].mxu0
        %627 = vmatprep.mubr.f32.mxu0 0.0
        %628 = vmatmul.mubr.f32.gmra.mrb[0].mxu0 %v492
        %v629 = vpop.f32.mrb[0].mxu0
        %v630 = vadd.f32 0.0, %v629
        %v631 = vpop.f32.mrb[0].mxu0
        %632 = vmatprep.mubr.f32.mxu0 0.0
        %633 = vmatmul.mubr.f32.gmra.mrb[0].mxu0 %v495
        %v634 = vpop.f32.mrb[0].mxu0
        %v635 = vadd.f32 0.0, %v634
        %v636 = vpop.f32.mrb[0].mxu0
        %637 = vmatprep.mubr.f32.mxu0 0.0
        %638 = vmatmul.mubr.f32.gmra.mrb[0].mxu0 %v498
        %v639 = vpop.f32.mrb[0].mxu0
        %v640 = vadd.f32 0.0, %v639
        %v641 = vpop.f32.mrb[0].mxu0
        %642 = vmatprep.mubr.f32.mxu0 0.0
        %643 = vmatmul.mubr.f32.gmra.mrb[0].mxu0 %v501
        %v644 = vpop.f32.mrb[0].mxu0
        %v645 = vadd.f32 0.0, %v644
        %v646 = vpop.f32.mrb[0].mxu0
        %647 = vmatprep.mubr.f32.mxu0 0.0
        %648 = vmatmul.mubr.f32.gmra.mrb[0].mxu0 %v504
        %v649 = vpop.f32.mrb[0].mxu0
        %v650 = vadd.f32 0.0, %v649
        %v651 = vpop.f32.mrb[0].mxu0
        %652 = vmatprep.mubr.f32.mxu0 0.0
        %653 = vmatmul.mubr.f32.gmra.mrb[0].mxu0 %v507
        %v654 = vpop.f32.mrb[0].mxu0
        %v655 = vadd.f32 0.0, %v654
        %v656 = vpop.f32.mrb[0].mxu0
        %657 = vdwg.mxu0
        %v659 = vsel %vm349, %v441, 0
        %v662 = vsel %vm509, %v457, 0
        %664 = vmatprep.subr.mxu0 0.0
        %665 = vmatpush1.msra.mxu0 %v662
        %666 = vmatprep.subr.mxu0 0.0
        %667 = vmatpush1.msra.mxu0 0.0
        %668 = vmatprep.subr.mxu0 0.0
        %669 = vmatpush1.msra.mxu0 0.0
        %670 = vmatprep.subr.mxu0 0.0
        %671 = vmatpush1.msra.mxu0 0.0
        %672 = vmatprep.subr.mxu0 0.0
        %673 = vmatpush1.msra.mxu0 0.0
        %674 = vmatprep.subr.mxu0 0.0
        %675 = vmatpush1.msra.mxu0 0.0
        %676 = vmatprep.subr.mxu0 0.0
        %677 = vmatpush1.msra.mxu0 0.0
        %678 = vmatprep.subr.mxu0 0.0
        %679 = vmatpush1.msra.mxu0 0.0
        %680 = vmatprep.subr.mxu0 0.0
        %681 = vmatpush1.msra.mxu0 0.0
        %682 = vmatprep.subr.mxu0 0.0
        %683 = vmatpush1.msra.mxu0 0.0
        %684 = vmatprep.subr.mxu0 0.0
        %685 = vmatpush1.msra.mxu0 0.0
        %686 = vmatprep.subr.mxu0 0.0
        %687 = vmatpush1.msra.mxu0 0.0
        %688 = vmatprep.subr.mxu0 0.0
        %689 = vmatpush1.msra.mxu0 0.0
        %690 = vmatprep.subr.mxu0 0.0
        %691 = vmatpush1.msra.mxu0 0.0
        %692 = vmatprep.subr.mxu0 0.0
        %693 = vmatpush1.msra.mxu0 0.0
        %694 = vmatprep.subr.mxu0 0.0
        %695 = vmatpush1.msra.mxu0 0.0
        %696 = vmatprep.subr.mxu0 0.0
        %697 = vmatpush1.msra.mxu0 0.0
        %698 = vmatprep.subr.mxu0 0.0
        %699 = vmatpush1.msra.mxu0 0.0
        %700 = vmatprep.subr.mxu0 0.0
        %701 = vmatpush1.msra.mxu0 0.0
        %702 = vmatprep.subr.mxu0 0.0
        %703 = vmatpush1.msra.mxu0 0.0
        %704 = vmatprep.subr.mxu0 0.0
        %705 = vmatpush1.msra.mxu0 0.0
        %706 = vmatprep.subr.mxu0 0.0
        %707 = vmatpush1.msra.mxu0 0.0
        %708 = vmatprep.subr.mxu0 0.0
        %709 = vmatpush1.msra.mxu0 0.0
        %710 = vmatprep.subr.mxu0 0.0
        %711 = vmatpush1.msra.mxu0 0.0
        %712 = vmatprep.subr.mxu0 0.0
        %713 = vmatpush1.msra.mxu0 0.0
        %714 = vmatprep.subr.mxu0 0.0
        %715 = vmatpush1.msra.mxu0 0.0
        %716 = vmatprep.subr.mxu0 0.0
        %717 = vmatpush1.msra.mxu0 0.0
        %718 = vmatprep.subr.mxu0 0.0
        %719 = vmatpush1.msra.mxu0 0.0
        %720 = vmatprep.subr.mxu0 0.0
        %721 = vmatpush1.msra.mxu0 0.0
        %722 = vmatprep.subr.mxu0 0.0
        %723 = vmatpush1.msra.mxu0 0.0
        %724 = vmatprep.subr.mxu0 0.0
        %725 = vmatpush1.msra.mxu0 0.0
        %726 = vmatprep.subr.mxu0 0.0
        %727 = vmatpush1.msra.mxu0 0.0
        %728 = vmatprep.mubr.f32.mxu0 0.0
        %729 = vmatmul.mubr.f32.gmra.mrb[0].mxu0 %v659
        %v730 = vpop.f32.mrb[0].mxu0
        %v731 = vadd.f32 %v580, %v730
        %v732 = vpop.f32.mrb[0].mxu0
        %733 = vmatprep.mubr.f32.mxu0 0.0
        %734 = vmatmul.mubr.f32.gmra.mrb[0].mxu0 %v462
        %v735 = vpop.f32.mrb[0].mxu0
        %v736 = vadd.f32 %v585, %v735
        %v737 = vpop.f32.mrb[0].mxu0
        %738 = vmatprep.mubr.f32.mxu0 0.0
        %739 = vmatmul.mubr.f32.gmra.mrb[0].mxu0 %v465
        %v740 = vpop.f32.mrb[0].mxu0
        %v741 = vadd.f32 %v590, %v740
        %v742 = vpop.f32.mrb[0].mxu0
        %743 = vmatprep.mubr.f32.mxu0 0.0
        %744 = vmatmul.mubr.f32.gmra.mrb[0].mxu0 %v468
        %v745 = vpop.f32.mrb[0].mxu0
        %v746 = vadd.f32 %v595, %v745
        %v747 = vpop.f32.mrb[0].mxu0
        %748 = vmatprep.mubr.f32.mxu0 0.0
        %749 = vmatmul.mubr.f32.gmra.mrb[0].mxu0 %v471
        %v750 = vpop.f32.mrb[0].mxu0
        %v751 = vadd.f32 %v600, %v750
        %v752 = vpop.f32.mrb[0].mxu0
        %753 = vmatprep.mubr.f32.mxu0 0.0
        %754 = vmatmul.mubr.f32.gmra.mrb[0].mxu0 %v474
        %v755 = vpop.f32.mrb[0].mxu0
        %v756 = vadd.f32 %v605, %v755
        %v757 = vpop.f32.mrb[0].mxu0
        %758 = vmatprep.mubr.f32.mxu0 0.0
        %759 = vmatmul.mubr.f32.gmra.mrb[0].mxu0 %v477
        %v760 = vpop.f32.mrb[0].mxu0
        %v761 = vadd.f32 %v610, %v760
        %v762 = vpop.f32.mrb[0].mxu0
        %763 = vmatprep.mubr.f32.mxu0 0.0
        %764 = vmatmul.mubr.f32.gmra.mrb[0].mxu0 %v480
        %v765 = vpop.f32.mrb[0].mxu0
        %v766 = vadd.f32 %v615, %v765
        %v767 = vpop.f32.mrb[0].mxu0
        %768 = vmatprep.mubr.f32.mxu0 0.0
        %769 = vmatmul.mubr.f32.gmra.mrb[0].mxu0 %v483
        %v770 = vpop.f32.mrb[0].mxu0
        %v771 = vadd.f32 %v620, %v770
        %v772 = vpop.f32.mrb[0].mxu0
        %773 = vmatprep.mubr.f32.mxu0 0.0
        %774 = vmatmul.mubr.f32.gmra.mrb[0].mxu0 %v486
        %v775 = vpop.f32.mrb[0].mxu0
        %v776 = vadd.f32 %v625, %v775
        %v777 = vpop.f32.mrb[0].mxu0
        %778 = vmatprep.mubr.f32.mxu0 0.0
        %779 = vmatmul.mubr.f32.gmra.mrb[0].mxu0 %v489
        %v780 = vpop.f32.mrb[0].mxu0
        %v781 = vadd.f32 %v630, %v780
        %v782 = vpop.f32.mrb[0].mxu0
        %783 = vmatprep.mubr.f32.mxu0 0.0
        %784 = vmatmul.mubr.f32.gmra.mrb[0].mxu0 %v492
        %v785 = vpop.f32.mrb[0].mxu0
        %v786 = vadd.f32 %v635, %v785
        %v787 = vpop.f32.mrb[0].mxu0
        %788 = vmatprep.mubr.f32.mxu0 0.0
        %789 = vmatmul.mubr.f32.gmra.mrb[0].mxu0 %v495
        %v790 = vpop.f32.mrb[0].mxu0
        %v791 = vadd.f32 %v640, %v790
        %v792 = vpop.f32.mrb[0].mxu0
        %793 = vmatprep.mubr.f32.mxu0 0.0
        %794 = vmatmul.mubr.f32.gmra.mrb[0].mxu0 %v498
        %v795 = vpop.f32.mrb[0].mxu0
        %v796 = vadd.f32 %v645, %v795
        %v797 = vpop.f32.mrb[0].mxu0
        %798 = vmatprep.mubr.f32.mxu0 0.0
        %799 = vmatmul.mubr.f32.gmra.mrb[0].mxu0 %v501
        %v800 = vpop.f32.mrb[0].mxu0
        %v801 = vadd.f32 %v650, %v800
        %v802 = vpop.f32.mrb[0].mxu0
        %803 = vmatprep.mubr.f32.mxu0 0.0
        %804 = vmatmul.mubr.f32.gmra.mrb[0].mxu0 %v504
        %v805 = vpop.f32.mrb[0].mxu0
        %v806 = vadd.f32 %v655, %v805
        %v807 = vpop.f32.mrb[0].mxu0
        %808 = vdwg.mxu0
        %v809 = vld [vmem:[#allocation2 + $0x10] sm:$0xff]
        %v810 = vld [vmem:[#allocation2 + $0x18] sm:$0xff]
        %v811 = vld [vmem:[#allocation2 + $0x20] sm:$0xff]
        %v812 = vld [vmem:[#allocation2 + $0x28] sm:$0xff]
        %v813 = vld [vmem:[#allocation2 + $0x30] sm:$0xff]
        %v814 = vld [vmem:[#allocation2 + $0x38] sm:$0xff]
        %v815 = vld [vmem:[#allocation2 + $0x40] sm:$0xff]
        %v816 = vld [vmem:[#allocation2 + $0x48] sm:$0xff]
        %v817 = vld [vmem:[#allocation2 + $0x50] sm:$0xff]
        %v818 = vld [vmem:[#allocation2 + $0x58] sm:$0xff]
        %v819 = vld [vmem:[#allocation2 + $0x60] sm:$0xff]
        %v820 = vld [vmem:[#allocation2 + $0x68] sm:$0xff]
        %v821 = vld [vmem:[#allocation2 + $0x70] sm:$0xff]
        %v822 = vld [vmem:[#allocation2 + $0x78] sm:$0xff]
        %v823 = vld [vmem:[#allocation2 + $0x80] sm:$0xff]
        %v824 = vld [vmem:[#allocation2 + $0x88] sm:$0xff]
        %s825 = scalar_lea.vmem %s1, 8
        %v826 = vld [vmem:[%s825] sm:$0xf]
        %v828 = vsel %vm349, %v809, 0
        %v831 = vsel %vm349, %v810, 0
        %v834 = vsel %vm349, %v811, 0
        %v837 = vsel %vm349, %v812, 0
        %v840 = vsel %vm349, %v813, 0
        %v843 = vsel %vm349, %v814, 0
        %v846 = vsel %vm349, %v815, 0
        %v849 = vsel %vm349, %v816, 0
        %v852 = vsel %vm349, %v817, 0
        %v855 = vsel %vm349, %v818, 0
        %v858 = vsel %vm349, %v819, 0
        %v861 = vsel %vm349, %v820, 0
        %v864 = vsel %vm349, %v821, 0
        %v867 = vsel %vm349, %v822, 0
        %v870 = vsel %vm349, %v823, 0
        %v873 = vsel %vm349, %v824, 0
        %v876 = vsel %vm509, %v826, 0
        %878 = vmatprep.subr.mxu0 0.0
        %879 = vmatpush1.msra.mxu0 %v876
        %880 = vmatprep.subr.mxu0 0.0
        %881 = vmatpush1.msra.mxu0 0.0
        %882 = vmatprep.subr.mxu0 0.0
        %883 = vmatpush1.msra.mxu0 0.0
        %884 = vmatprep.subr.mxu0 0.0
        %885 = vmatpush1.msra.mxu0 0.0
        %886 = vmatprep.subr.mxu0 0.0
        %887 = vmatpush1.msra.mxu0 0.0
        %888 = vmatprep.subr.mxu0 0.0
        %889 = vmatpush1.msra.mxu0 0.0
        %890 = vmatprep.subr.mxu0 0.0
        %891 = vmatpush1.msra.mxu0 0.0
        %892 = vmatprep.subr.mxu0 0.0
        %893 = vmatpush1.msra.mxu0 0.0
        %894 = vmatprep.subr.mxu0 0.0
        %895 = vmatpush1.msra.mxu0 0.0
        %896 = vmatprep.subr.mxu0 0.0
        %897 = vmatpush1.msra.mxu0 0.0
        %898 = vmatprep.subr.mxu0 0.0
        %899 = vmatpush1.msra.mxu0 0.0
        %900 = vmatprep.subr.mxu0 0.0
        %901 = vmatpush1.msra.mxu0 0.0
        %902 = vmatprep.subr.mxu0 0.0
        %903 = vmatpush1.msra.mxu0 0.0
        %904 = vmatprep.subr.mxu0 0.0
        %905 = vmatpush1.msra.mxu0 0.0
        %906 = vmatprep.subr.mxu0 0.0
        %907 = vmatpush1.msra.mxu0 0.0
        %908 = vmatprep.subr.mxu0 0.0
        %909 = vmatpush1.msra.mxu0 0.0
        %910 = vmatprep.subr.mxu0 0.0
        %911 = vmatpush1.msra.mxu0 0.0
        %912 = vmatprep.subr.mxu0 0.0
        %913 = vmatpush1.msra.mxu0 0.0
        %914 = vmatprep.subr.mxu0 0.0
        %915 = vmatpush1.msra.mxu0 0.0
        %916 = vmatprep.subr.mxu0 0.0
        %917 = vmatpush1.msra.mxu0 0.0
        %918 = vmatprep.subr.mxu0 0.0
        %919 = vmatpush1.msra.mxu0 0.0
        %920 = vmatprep.subr.mxu0 0.0
        %921 = vmatpush1.msra.mxu0 0.0
        %922 = vmatprep.subr.mxu0 0.0
        %923 = vmatpush1.msra.mxu0 0.0
        %924 = vmatprep.subr.mxu0 0.0
        %925 = vmatpush1.msra.mxu0 0.0
        %926 = vmatprep.subr.mxu0 0.0
        %927 = vmatpush1.msra.mxu0 0.0
        %928 = vmatprep.subr.mxu0 0.0
        %929 = vmatpush1.msra.mxu0 0.0
        %930 = vmatprep.subr.mxu0 0.0
        %931 = vmatpush1.msra.mxu0 0.0
        %932 = vmatprep.subr.mxu0 0.0
        %933 = vmatpush1.msra.mxu0 0.0
        %934 = vmatprep.subr.mxu0 0.0
        %935 = vmatpush1.msra.mxu0 0.0
        %936 = vmatprep.subr.mxu0 0.0
        %937 = vmatpush1.msra.mxu0 0.0
        %938 = vmatprep.subr.mxu0 0.0
        %939 = vmatpush1.msra.mxu0 0.0
        %940 = vmatprep.subr.mxu0 0.0
        %941 = vmatpush1.msra.mxu0 0.0
        %942 = vmatprep.mubr.f32.mxu0 0.0
        %943 = vmatmul.mubr.f32.gmra.mrb[0].mxu0 %v828
        %v944 = vpop.f32.mrb[0].mxu0
        %v945 = vadd.f32 0.0, %v944
        %v946 = vpop.f32.mrb[0].mxu0
        %947 = vmatprep.mubr.f32.mxu0 0.0
        %948 = vmatmul.mubr.f32.gmra.mrb[0].mxu0 %v831
        %v949 = vpop.f32.mrb[0].mxu0
        %v950 = vadd.f32 0.0, %v949
        %v951 = vpop.f32.mrb[0].mxu0
        %952 = vmatprep.mubr.f32.mxu0 0.0
        %953 = vmatmul.mubr.f32.gmra.mrb[0].mxu0 %v834
        %v954 = vpop.f32.mrb[0].mxu0
        %v955 = vadd.f32 0.0, %v954
        %v956 = vpop.f32.mrb[0].mxu0
        %957 = vmatprep.mubr.f32.mxu0 0.0
        %958 = vmatmul.mubr.f32.gmra.mrb[0].mxu0 %v837
        %v959 = vpop.f32.mrb[0].mxu0
        %v960 = vadd.f32 0.0, %v959
        %v961 = vpop.f32.mrb[0].mxu0
        %962 = vmatprep.mubr.f32.mxu0 0.0
        %963 = vmatmul.mubr.f32.gmra.mrb[0].mxu0 %v840
        %v964 = vpop.f32.mrb[0].mxu0
        %v965 = vadd.f32 0.0, %v964
        %v966 = vpop.f32.mrb[0].mxu0
        %967 = vmatprep.mubr.f32.mxu0 0.0
        %968 = vmatmul.mubr.f32.gmra.mrb[0].mxu0 %v843
        %v969 = vpop.f32.mrb[0].mxu0
        %v970 = vadd.f32 0.0, %v969
        %v971 = vpop.f32.mrb[0].mxu0
        %972 = vmatprep.mubr.f32.mxu0 0.0
        %973 = vmatmul.mubr.f32.gmra.mrb[0].mxu0 %v846
        %v974 = vpop.f32.mrb[0].mxu0
        %v975 = vadd.f32 0.0, %v974
        %v976 = vpop.f32.mrb[0].mxu0
        %977 = vmatprep.mubr.f32.mxu0 0.0
        %978 = vmatmul.mubr.f32.gmra.mrb[0].mxu0 %v849
        %v979 = vpop.f32.mrb[0].mxu0
        %v980 = vadd.f32 0.0, %v979
        %v981 = vpop.f32.mrb[0].mxu0
        %982 = vmatprep.mubr.f32.mxu0 0.0
        %983 = vmatmul.mubr.f32.gmra.mrb[0].mxu0 %v852
        %v984 = vpop.f32.mrb[0].mxu0
        %v985 = vadd.f32 0.0, %v984
        %v986 = vpop.f32.mrb[0].mxu0
        %987 = vmatprep.mubr.f32.mxu0 0.0
        %988 = vmatmul.mubr.f32.gmra.mrb[0].mxu0 %v855
        %v989 = vpop.f32.mrb[0].mxu0
        %v990 = vadd.f32 0.0, %v989
        %v991 = vpop.f32.mrb[0].mxu0
        %992 = vmatprep.mubr.f32.mxu0 0.0
        %993 = vmatmul.mubr.f32.gmra.mrb[0].mxu0 %v858
        %v994 = vpop.f32.mrb[0].mxu0
        %v995 = vadd.f32 0.0, %v994
        %v996 = vpop.f32.mrb[0].mxu0
        %997 = vmatprep.mubr.f32.mxu0 0.0
        %998 = vmatmul.mubr.f32.gmra.mrb[0].mxu0 %v861
        %v999 = vpop.f32.mrb[0].mxu0
        %v1000 = vadd.f32 0.0, %v999
        %v1001 = vpop.f32.mrb[0].mxu0
        %1002 = vmatprep.mubr.f32.mxu0 0.0
        %1003 = vmatmul.mubr.f32.gmra.mrb[0].mxu0 %v864
        %v1004 = vpop.f32.mrb[0].mxu0
        %v1005 = vadd.f32 0.0, %v1004
        %v1006 = vpop.f32.mrb[0].mxu0
        %1007 = vmatprep.mubr.f32.mxu0 0.0
        %1008 = vmatmul.mubr.f32.gmra.mrb[0].mxu0 %v867
        %v1009 = vpop.f32.mrb[0].mxu0
        %v1010 = vadd.f32 0.0, %v1009
        %v1011 = vpop.f32.mrb[0].mxu0
        %1012 = vmatprep.mubr.f32.mxu0 0.0
        %1013 = vmatmul.mubr.f32.gmra.mrb[0].mxu0 %v870
        %v1014 = vpop.f32.mrb[0].mxu0
        %v1015 = vadd.f32 0.0, %v1014
        %v1016 = vpop.f32.mrb[0].mxu0
        %1017 = vmatprep.mubr.f32.mxu0 0.0
        %1018 = vmatmul.mubr.f32.gmra.mrb[0].mxu0 %v873
        %v1019 = vpop.f32.mrb[0].mxu0
        %v1020 = vadd.f32 0.0, %v1019
        %v1021 = vpop.f32.mrb[0].mxu0
        %1022 = vdwg.mxu0
        %v1023 = vadd.f32 %v731, %v945
        %v1024 = vadd.f32 %v736, %v950
        %v1025 = vadd.f32 %v741, %v955
        %v1026 = vadd.f32 %v746, %v960
        %v1027 = vadd.f32 %v751, %v965
        %v1028 = vadd.f32 %v756, %v970
        %v1029 = vadd.f32 %v761, %v975
        %v1030 = vadd.f32 %v766, %v980
        %v1031 = vadd.f32 %v771, %v985
        %v1032 = vadd.f32 %v776, %v990
        %v1033 = vadd.f32 %v781, %v995
        %v1034 = vadd.f32 %v786, %v1000
        %v1035 = vadd.f32 %v791, %v1005
        %v1036 = vadd.f32 %v796, %v1010
        %v1037 = vadd.f32 %v801, %v1015
        %v1038 = vadd.f32 %v806, %v1020
        %v1039 = vld [vmem:[%s2] sm:$0x1]
        %v1041 = vlaneseq
        %v1042 = vshrl.u32 %v1041, 7
        %v1043 = vsub.s32 0, %v1042
        %v1044 = vrot.slane %v1039, %v1043
        %v1046 = vadd.f32 %v1023, %v1044
        %v1047 = vadd.f32 %v1024, %v1044
        %v1048 = vadd.f32 %v1025, %v1044
        %v1049 = vadd.f32 %v1026, %v1044
        %v1050 = vadd.f32 %v1027, %v1044
        %v1051 = vadd.f32 %v1028, %v1044
        %v1052 = vadd.f32 %v1029, %v1044
        %v1053 = vadd.f32 %v1030, %v1044
        %v1054 = vadd.f32 %v1031, %v1044
        %v1055 = vadd.f32 %v1032, %v1044
        %v1056 = vadd.f32 %v1033, %v1044
        %v1057 = vadd.f32 %v1034, %v1044
        %v1058 = vadd.f32 %v1035, %v1044
        %v1059 = vadd.f32 %v1036, %v1044
        %v1060 = vadd.f32 %v1037, %v1044
        %v1061 = vadd.f32 %v1038, %v1044
        %v1062 = vmax.f32 %v1046, 0.0
        %v1063 = vmax.f32 %v1047, 0.0
        %v1064 = vmax.f32 %v1048, 0.0
        %v1065 = vmax.f32 %v1049, 0.0
        %v1066 = vmax.f32 %v1050, 0.0
        %v1067 = vmax.f32 %v1051, 0.0
        %v1068 = vmax.f32 %v1052, 0.0
        %v1069 = vmax.f32 %v1053, 0.0
        %v1070 = vmax.f32 %v1054, 0.0
        %v1071 = vmax.f32 %v1055, 0.0
        %v1072 = vmax.f32 %v1056, 0.0
        %v1073 = vmax.f32 %v1057, 0.0
        %v1074 = vmax.f32 %v1058, 0.0
        %v1075 = vmax.f32 %v1059, 0.0
        %v1076 = vmax.f32 %v1060, 0.0
        %v1077 = vmax.f32 %v1061, 0.0
        %1078 = vst.msk [vmem:[#allocation3 + $0x8] sm:$0xff] %vm343, %v1062
        %1079 = vst.msk [vmem:[#allocation3 + $0x10] sm:$0xff] %vm343, %v1063
        %1080 = vst.msk [vmem:[#allocation3 + $0x18] sm:$0xff] %vm343, %v1064
        %1081 = vst.msk [vmem:[#allocation3 + $0x20] sm:$0xff] %vm343, %v1065
        %1082 = vst.msk [vmem:[#allocation3 + $0x28] sm:$0xff] %vm343, %v1066
        %1083 = vst.msk [vmem:[#allocation3 + $0x30] sm:$0xff] %vm343, %v1067
        %1084 = vst.msk [vmem:[#allocation3 + $0x38] sm:$0xff] %vm343, %v1068
        %1085 = vst.msk [vmem:[#allocation3 + $0x40] sm:$0xff] %vm343, %v1069
        %1086 = vst.msk [vmem:[#allocation3 + $0x48] sm:$0xff] %vm343, %v1070
        %1087 = vst.msk [vmem:[#allocation3 + $0x50] sm:$0xff] %vm343, %v1071
        %1088 = vst.msk [vmem:[#allocation3 + $0x58] sm:$0xff] %vm343, %v1072
        %1089 = vst.msk [vmem:[#allocation3 + $0x60] sm:$0xff] %vm343, %v1073
        %1090 = vst.msk [vmem:[#allocation3 + $0x68] sm:$0xff] %vm343, %v1074
        %1091 = vst.msk [vmem:[#allocation3 + $0x70] sm:$0xff] %vm343, %v1075
        %1092 = vst.msk [vmem:[#allocation3 + $0x78] sm:$0xff] %vm343, %v1076
        %1093 = vst.msk [vmem:[#allocation3 + $0x80] sm:$0xff] %vm343, %v1077
        %v1094 = vld [vmem:[#allocation3] sm:$0xff]
        %v1095 = vld [vmem:[#allocation3 + $0x8] sm:$0xff]
        %v1096 = vld [vmem:[#allocation3 + $0x10] sm:$0xff]
        %v1097 = vld [vmem:[#allocation3 + $0x18] sm:$0xff]
        %v1098 = vld [vmem:[#allocation3 + $0x20] sm:$0xff]
        %v1099 = vld [vmem:[#allocation3 + $0x28] sm:$0xff]
        %v1100 = vld [vmem:[#allocation3 + $0x30] sm:$0xff]
        %v1101 = vld [vmem:[#allocation3 + $0x38] sm:$0xff]
        %v1102 = vld [vmem:[#allocation3 + $0x40] sm:$0xff]
        %v1103 = vld [vmem:[#allocation3 + $0x48] sm:$0xff]
        %v1104 = vld [vmem:[#allocation3 + $0x50] sm:$0xff]
        %v1105 = vld [vmem:[#allocation3 + $0x58] sm:$0xff]
        %v1106 = vld [vmem:[#allocation3 + $0x60] sm:$0xff]
        %v1107 = vld [vmem:[#allocation3 + $0x68] sm:$0xff]
        %v1108 = vld [vmem:[#allocation3 + $0x70] sm:$0xff]
        %v1109 = vld [vmem:[#allocation3 + $0x78] sm:$0xff]
        %v1110 = vld [vmem:[%s3] sm:$0xff]
        %v1111 = vld [vmem:[%s3 + $0x8] sm:$0xff]
        %v1112 = vld [vmem:[%s3 + $0x10] sm:$0xff]
        %v1113 = vld [vmem:[%s3 + $0x18] sm:$0xff]
        %v1114 = vld [vmem:[#allocation3 + $0x80] sm:$0xff]
        %s1115 = scalar_lea.vmem %s3, 32
        %v1116 = vld [vmem:[%s1115] sm:$0xff]
        %v1117 = vld [vmem:[%s1115 + $0x8] sm:$0xff]
        %v1118 = vld [vmem:[%s1115 + $0x10] sm:$0xff]
        %v1119 = vld [vmem:[%s1115 + $0x18] sm:$0xff]
        %v1121 = vsel %vm343, %v1095, 0
        %v1124 = vsel %vm343, %v1096, 0
        %v1127 = vsel %vm343, %v1097, 0
        %v1130 = vsel %vm343, %v1098, 0
        %v1133 = vsel %vm343, %v1099, 0
        %v1136 = vsel %vm343, %v1100, 0
        %v1139 = vsel %vm343, %v1101, 0
        %v1142 = vsel %vm343, %v1102, 0
        %v1145 = vsel %vm343, %v1103, 0
        %v1148 = vsel %vm343, %v1104, 0
        %v1151 = vsel %vm343, %v1105, 0
        %v1154 = vsel %vm343, %v1106, 0
        %v1157 = vsel %vm343, %v1107, 0
        %v1160 = vsel %vm343, %v1108, 0
        %v1163 = vsel %vm343, %v1109, 0
        %v1166 = vsel %vm343, %v1114, 0
        %1168 = vmatprep.subr.mxu0 0.0
        %1169 = vmatpush1.msra.mxu0 %v1116
        %1170 = vmatprep.subr.mxu0 0.0
        %1171 = vmatpush1.msra.mxu0 %v1117
        %1172 = vmatprep.subr.mxu0 0.0
        %1173 = vmatpush1.msra.mxu0 %v1118
        %1174 = vmatprep.subr.mxu0 0.0
        %1175 = vmatpush1.msra.mxu0 %v1119
        %1176 = vmatprep.subr.mxu0 0.0
        %1177 = vmatpush1.msra.mxu0 0.0
        %1178 = vmatprep.subr.mxu0 0.0
        %1179 = vmatpush1.msra.mxu0 0.0
        %1180 = vmatprep.subr.mxu0 0.0
        %1181 = vmatpush1.msra.mxu0 0.0
        %1182 = vmatprep.subr.mxu0 0.0
        %1183 = vmatpush1.msra.mxu0 0.0
        %1184 = vmatprep.subr.mxu0 0.0
        %1185 = vmatpush1.msra.mxu0 0.0
        %1186 = vmatprep.subr.mxu0 0.0
        %1187 = vmatpush1.msra.mxu0 0.0
        %1188 = vmatprep.subr.mxu0 0.0
        %1189 = vmatpush1.msra.mxu0 0.0
        %1190 = vmatprep.subr.mxu0 0.0
        %1191 = vmatpush1.msra.mxu0 0.0
        %1192 = vmatprep.subr.mxu0 0.0
        %1193 = vmatpush1.msra.mxu0 0.0
        %1194 = vmatprep.subr.mxu0 0.0
        %1195 = vmatpush1.msra.mxu0 0.0
        %1196 = vmatprep.subr.mxu0 0.0
        %1197 = vmatpush1.msra.mxu0 0.0
        %1198 = vmatprep.subr.mxu0 0.0
        %1199 = vmatpush1.msra.mxu0 0.0
        %1200 = vmatprep.subr.mxu0 0.0
        %1201 = vmatpush1.msra.mxu0 0.0
        %1202 = vmatprep.subr.mxu0 0.0
        %1203 = vmatpush1.msra.mxu0 0.0
        %1204 = vmatprep.subr.mxu0 0.0
        %1205 = vmatpush1.msra.mxu0 0.0
        %1206 = vmatprep.subr.mxu0 0.0
        %1207 = vmatpush1.msra.mxu0 0.0
        %1208 = vmatprep.subr.mxu0 0.0
        %1209 = vmatpush1.msra.mxu0 0.0
        %1210 = vmatprep.subr.mxu0 0.0
        %1211 = vmatpush1.msra.mxu0 0.0
        %1212 = vmatprep.subr.mxu0 0.0
        %1213 = vmatpush1.msra.mxu0 0.0
        %1214 = vmatprep.subr.mxu0 0.0
        %1215 = vmatpush1.msra.mxu0 0.0
        %1216 = vmatprep.subr.mxu0 0.0
        %1217 = vmatpush1.msra.mxu0 0.0
        %1218 = vmatprep.subr.mxu0 0.0
        %1219 = vmatpush1.msra.mxu0 0.0
        %1220 = vmatprep.subr.mxu0 0.0
        %1221 = vmatpush1.msra.mxu0 0.0
        %1222 = vmatprep.subr.mxu0 0.0
        %1223 = vmatpush1.msra.mxu0 0.0
        %1224 = vmatprep.subr.mxu0 0.0
        %1225 = vmatpush1.msra.mxu0 0.0
        %1226 = vmatprep.subr.mxu0 0.0
        %1227 = vmatpush1.msra.mxu0 0.0
        %1228 = vmatprep.subr.mxu0 0.0
        %1229 = vmatpush1.msra.mxu0 0.0
        %1230 = vmatprep.subr.mxu0 0.0
        %1231 = vmatpush1.msra.mxu0 0.0
        %1232 = vmatprep.mubr.f32.mxu0 0.0
        %1233 = vmatmul.mubr.f32.gmra.mrb[0].mxu0 %v1121
        %v1234 = vpop.f32.mrb[0].mxu0
        %v1235 = vadd.f32 0.0, %v1234
        %v1236 = vpop.f32.mrb[0].mxu0
        %1237 = vmatprep.mubr.f32.mxu0 0.0
        %1238 = vmatmul.mubr.f32.gmra.mrb[0].mxu0 %v1124
        %v1239 = vpop.f32.mrb[0].mxu0
        %v1240 = vadd.f32 0.0, %v1239
        %v1241 = vpop.f32.mrb[0].mxu0
        %1242 = vmatprep.mubr.f32.mxu0 0.0
        %1243 = vmatmul.mubr.f32.gmra.mrb[0].mxu0 %v1127
        %v1244 = vpop.f32.mrb[0].mxu0
        %v1245 = vadd.f32 0.0, %v1244
        %v1246 = vpop.f32.mrb[0].mxu0
        %1247 = vmatprep.mubr.f32.mxu0 0.0
        %1248 = vmatmul.mubr.f32.gmra.mrb[0].mxu0 %v1130
        %v1249 = vpop.f32.mrb[0].mxu0
        %v1250 = vadd.f32 0.0, %v1249
        %v1251 = vpop.f32.mrb[0].mxu0
        %1252 = vmatprep.mubr.f32.mxu0 0.0
        %1253 = vmatmul.mubr.f32.gmra.mrb[0].mxu0 %v1133
        %v1254 = vpop.f32.mrb[0].mxu0
        %v1255 = vadd.f32 0.0, %v1254
        %v1256 = vpop.f32.mrb[0].mxu0
        %1257 = vmatprep.mubr.f32.mxu0 0.0
        %1258 = vmatmul.mubr.f32.gmra.mrb[0].mxu0 %v1136
        %v1259 = vpop.f32.mrb[0].mxu0
        %v1260 = vadd.f32 0.0, %v1259
        %v1261 = vpop.f32.mrb[0].mxu0
        %1262 = vmatprep.mubr.f32.mxu0 0.0
        %1263 = vmatmul.mubr.f32.gmra.mrb[0].mxu0 %v1139
        %v1264 = vpop.f32.mrb[0].mxu0
        %v1265 = vadd.f32 0.0, %v1264
        %v1266 = vpop.f32.mrb[0].mxu0
        %1267 = vmatprep.mubr.f32.mxu0 0.0
        %1268 = vmatmul.mubr.f32.gmra.mrb[0].mxu0 %v1142
        %v1269 = vpop.f32.mrb[0].mxu0
        %v1270 = vadd.f32 0.0, %v1269
        %v1271 = vpop.f32.mrb[0].mxu0
        %1272 = vmatprep.mubr.f32.mxu0 0.0
        %1273 = vmatmul.mubr.f32.gmra.mrb[0].mxu0 %v1145
        %v1274 = vpop.f32.mrb[0].mxu0
        %v1275 = vadd.f32 0.0, %v1274
        %v1276 = vpop.f32.mrb[0].mxu0
        %1277 = vmatprep.mubr.f32.mxu0 0.0
        %1278 = vmatmul.mubr.f32.gmra.mrb[0].mxu0 %v1148
        %v1279 = vpop.f32.mrb[0].mxu0
        %v1280 = vadd.f32 0.0, %v1279
        %v1281 = vpop.f32.mrb[0].mxu0
        %1282 = vmatprep.mubr.f32.mxu0 0.0
        %1283 = vmatmul.mubr.f32.gmra.mrb[0].mxu0 %v1151
        %v1284 = vpop.f32.mrb[0].mxu0
        %v1285 = vadd.f32 0.0, %v1284
        %v1286 = vpop.f32.mrb[0].mxu0
        %1287 = vmatprep.mubr.f32.mxu0 0.0
        %1288 = vmatmul.mubr.f32.gmra.mrb[0].mxu0 %v1154
        %v1289 = vpop.f32.mrb[0].mxu0
        %v1290 = vadd.f32 0.0, %v1289
        %v1291 = vpop.f32.mrb[0].mxu0
        %1292 = vmatprep.mubr.f32.mxu0 0.0
        %1293 = vmatmul.mubr.f32.gmra.mrb[0].mxu0 %v1157
        %v1294 = vpop.f32.mrb[0].mxu0
        %v1295 = vadd.f32 0.0, %v1294
        %v1296 = vpop.f32.mrb[0].mxu0
        %1297 = vmatprep.mubr.f32.mxu0 0.0
        %1298 = vmatmul.mubr.f32.gmra.mrb[0].mxu0 %v1160
        %v1299 = vpop.f32.mrb[0].mxu0
        %v1300 = vadd.f32 0.0, %v1299
        %v1301 = vpop.f32.mrb[0].mxu0
        %1302 = vmatprep.mubr.f32.mxu0 0.0
        %1303 = vmatmul.mubr.f32.gmra.mrb[0].mxu0 %v1163
        %v1304 = vpop.f32.mrb[0].mxu0
        %v1305 = vadd.f32 0.0, %v1304
        %v1306 = vpop.f32.mrb[0].mxu0
        %1307 = vmatprep.mubr.f32.mxu0 0.0
        %1308 = vmatmul.mubr.f32.gmra.mrb[0].mxu0 %v1166
        %v1309 = vpop.f32.mrb[0].mxu0
        %v1310 = vadd.f32 0.0, %v1309
        %v1311 = vpop.f32.mrb[0].mxu0
        %1312 = vdwg.mxu0
        %v1314 = vsel %vm343, %v1094, 0
        %1316 = vmatprep.subr.mxu0 0.0
        %1317 = vmatpush1.msra.mxu0 %v1110
        %1318 = vmatprep.subr.mxu0 0.0
        %1319 = vmatpush1.msra.mxu0 %v1111
        %1320 = vmatprep.subr.mxu0 0.0
        %1321 = vmatpush1.msra.mxu0 %v1112
        %1322 = vmatprep.subr.mxu0 0.0
        %1323 = vmatpush1.msra.mxu0 %v1113
        %1324 = vmatprep.subr.mxu0 0.0
        %1325 = vmatpush1.msra.mxu0 0.0
        %1326 = vmatprep.subr.mxu0 0.0
        %1327 = vmatpush1.msra.mxu0 0.0
        %1328 = vmatprep.subr.mxu0 0.0
        %1329 = vmatpush1.msra.mxu0 0.0
        %1330 = vmatprep.subr.mxu0 0.0
        %1331 = vmatpush1.msra.mxu0 0.0
        %1332 = vmatprep.subr.mxu0 0.0
        %1333 = vmatpush1.msra.mxu0 0.0
        %1334 = vmatprep.subr.mxu0 0.0
        %1335 = vmatpush1.msra.mxu0 0.0
        %1336 = vmatprep.subr.mxu0 0.0
        %1337 = vmatpush1.msra.mxu0 0.0
        %1338 = vmatprep.subr.mxu0 0.0
        %1339 = vmatpush1.msra.mxu0 0.0
        %1340 = vmatprep.subr.mxu0 0.0
        %1341 = vmatpush1.msra.mxu0 0.0
        %1342 = vmatprep.subr.mxu0 0.0
        %1343 = vmatpush1.msra.mxu0 0.0
        %1344 = vmatprep.subr.mxu0 0.0
        %1345 = vmatpush1.msra.mxu0 0.0
        %1346 = vmatprep.subr.mxu0 0.0
        %1347 = vmatpush1.msra.mxu0 0.0
        %1348 = vmatprep.subr.mxu0 0.0
        %1349 = vmatpush1.msra.mxu0 0.0
        %1350 = vmatprep.subr.mxu0 0.0
        %1351 = vmatpush1.msra.mxu0 0.0
        %1352 = vmatprep.subr.mxu0 0.0
        %1353 = vmatpush1.msra.mxu0 0.0
        %1354 = vmatprep.subr.mxu0 0.0
        %1355 = vmatpush1.msra.mxu0 0.0
        %1356 = vmatprep.subr.mxu0 0.0
        %1357 = vmatpush1.msra.mxu0 0.0
        %1358 = vmatprep.subr.mxu0 0.0
        %1359 = vmatpush1.msra.mxu0 0.0
        %1360 = vmatprep.subr.mxu0 0.0
        %1361 = vmatpush1.msra.mxu0 0.0
        %1362 = vmatprep.subr.mxu0 0.0
        %1363 = vmatpush1.msra.mxu0 0.0
        %1364 = vmatprep.subr.mxu0 0.0
        %1365 = vmatpush1.msra.mxu0 0.0
        %1366 = vmatprep.subr.mxu0 0.0
        %1367 = vmatpush1.msra.mxu0 0.0
        %1368 = vmatprep.subr.mxu0 0.0
        %1369 = vmatpush1.msra.mxu0 0.0
        %1370 = vmatprep.subr.mxu0 0.0
        %1371 = vmatpush1.msra.mxu0 0.0
        %1372 = vmatprep.subr.mxu0 0.0
        %1373 = vmatpush1.msra.mxu0 0.0
        %1374 = vmatprep.subr.mxu0 0.0
        %1375 = vmatpush1.msra.mxu0 0.0
        %1376 = vmatprep.subr.mxu0 0.0
        %1377 = vmatpush1.msra.mxu0 0.0
        %1378 = vmatprep.subr.mxu0 0.0
        %1379 = vmatpush1.msra.mxu0 0.0
        %1380 = vmatprep.mubr.f32.mxu0 0.0
        %1381 = vmatmul.mubr.f32.gmra.mrb[0].mxu0 %v1314
        %v1382 = vpop.f32.mrb[0].mxu0
        %v1383 = vadd.f32 %v1235, %v1382
        %v1384 = vpop.f32.mrb[0].mxu0
        %1385 = vmatprep.mubr.f32.mxu0 0.0
        %1386 = vmatmul.mubr.f32.gmra.mrb[0].mxu0 %v1121
        %v1387 = vpop.f32.mrb[0].mxu0
        %v1388 = vadd.f32 %v1240, %v1387
        %v1389 = vpop.f32.mrb[0].mxu0
        %1390 = vmatprep.mubr.f32.mxu0 0.0
        %1391 = vmatmul.mubr.f32.gmra.mrb[0].mxu0 %v1124
        %v1392 = vpop.f32.mrb[0].mxu0
        %v1393 = vadd.f32 %v1245, %v1392
        %v1394 = vpop.f32.mrb[0].mxu0
        %1395 = vmatprep.mubr.f32.mxu0 0.0
        %1396 = vmatmul.mubr.f32.gmra.mrb[0].mxu0 %v1127
        %v1397 = vpop.f32.mrb[0].mxu0
        %v1398 = vadd.f32 %v1250, %v1397
        %v1399 = vpop.f32.mrb[0].mxu0
        %1400 = vmatprep.mubr.f32.mxu0 0.0
        %1401 = vmatmul.mubr.f32.gmra.mrb[0].mxu0 %v1130
        %v1402 = vpop.f32.mrb[0].mxu0
        %v1403 = vadd.f32 %v1255, %v1402
        %v1404 = vpop.f32.mrb[0].mxu0
        %1405 = vmatprep.mubr.f32.mxu0 0.0
        %1406 = vmatmul.mubr.f32.gmra.mrb[0].mxu0 %v1133
        %v1407 = vpop.f32.mrb[0].mxu0
        %v1408 = vadd.f32 %v1260, %v1407
        %v1409 = vpop.f32.mrb[0].mxu0
        %1410 = vmatprep.mubr.f32.mxu0 0.0
        %1411 = vmatmul.mubr.f32.gmra.mrb[0].mxu0 %v1136
        %v1412 = vpop.f32.mrb[0].mxu0
        %v1413 = vadd.f32 %v1265, %v1412
        %v1414 = vpop.f32.mrb[0].mxu0
        %1415 = vmatprep.mubr.f32.mxu0 0.0
        %1416 = vmatmul.mubr.f32.gmra.mrb[0].mxu0 %v1139
        %v1417 = vpop.f32.mrb[0].mxu0
        %v1418 = vadd.f32 %v1270, %v1417
        %v1419 = vpop.f32.mrb[0].mxu0
        %1420 = vmatprep.mubr.f32.mxu0 0.0
        %1421 = vmatmul.mubr.f32.gmra.mrb[0].mxu0 %v1142
        %v1422 = vpop.f32.mrb[0].mxu0
        %v1423 = vadd.f32 %v1275, %v1422
        %v1424 = vpop.f32.mrb[0].mxu0
        %1425 = vmatprep.mubr.f32.mxu0 0.0
        %1426 = vmatmul.mubr.f32.gmra.mrb[0].mxu0 %v1145
        %v1427 = vpop.f32.mrb[0].mxu0
        %v1428 = vadd.f32 %v1280, %v1427
        %v1429 = vpop.f32.mrb[0].mxu0
        %1430 = vmatprep.mubr.f32.mxu0 0.0
        %1431 = vmatmul.mubr.f32.gmra.mrb[0].mxu0 %v1148
        %v1432 = vpop.f32.mrb[0].mxu0
        %v1433 = vadd.f32 %v1285, %v1432
        %v1434 = vpop.f32.mrb[0].mxu0
        %1435 = vmatprep.mubr.f32.mxu0 0.0
        %1436 = vmatmul.mubr.f32.gmra.mrb[0].mxu0 %v1151
        %v1437 = vpop.f32.mrb[0].mxu0
        %v1438 = vadd.f32 %v1290, %v1437
        %v1439 = vpop.f32.mrb[0].mxu0
        %1440 = vmatprep.mubr.f32.mxu0 0.0
        %1441 = vmatmul.mubr.f32.gmra.mrb[0].mxu0 %v1154
        %v1442 = vpop.f32.mrb[0].mxu0
        %v1443 = vadd.f32 %v1295, %v1442
        %v1444 = vpop.f32.mrb[0].mxu0
        %1445 = vmatprep.mubr.f32.mxu0 0.0
        %1446 = vmatmul.mubr.f32.gmra.mrb[0].mxu0 %v1157
        %v1447 = vpop.f32.mrb[0].mxu0
        %v1448 = vadd.f32 %v1300, %v1447
        %v1449 = vpop.f32.mrb[0].mxu0
        %1450 = vmatprep.mubr.f32.mxu0 0.0
        %1451 = vmatmul.mubr.f32.gmra.mrb[0].mxu0 %v1160
        %v1452 = vpop.f32.mrb[0].mxu0
        %v1453 = vadd.f32 %v1305, %v1452
        %v1454 = vpop.f32.mrb[0].mxu0
        %1455 = vmatprep.mubr.f32.mxu0 0.0
        %1456 = vmatmul.mubr.f32.gmra.mrb[0].mxu0 %v1163
        %v1457 = vpop.f32.mrb[0].mxu0
        %v1458 = vadd.f32 %v1310, %v1457
        %v1459 = vpop.f32.mrb[0].mxu0
        %1460 = vdwg.mxu0
        %v1461 = vld [vmem:[#allocation3 + $0x10] sm:$0xff]
        %v1462 = vld [vmem:[#allocation3 + $0x18] sm:$0xff]
        %v1463 = vld [vmem:[#allocation3 + $0x20] sm:$0xff]
        %v1464 = vld [vmem:[#allocation3 + $0x28] sm:$0xff]
        %v1465 = vld [vmem:[#allocation3 + $0x30] sm:$0xff]
        %v1466 = vld [vmem:[#allocation3 + $0x38] sm:$0xff]
        %v1467 = vld [vmem:[#allocation3 + $0x40] sm:$0xff]
        %v1468 = vld [vmem:[#allocation3 + $0x48] sm:$0xff]
        %v1469 = vld [vmem:[#allocation3 + $0x50] sm:$0xff]
        %v1470 = vld [vmem:[#allocation3 + $0x58] sm:$0xff]
        %v1471 = vld [vmem:[#allocation3 + $0x60] sm:$0xff]
        %v1472 = vld [vmem:[#allocation3 + $0x68] sm:$0xff]
        %v1473 = vld [vmem:[#allocation3 + $0x70] sm:$0xff]
        %v1474 = vld [vmem:[#allocation3 + $0x78] sm:$0xff]
        %v1475 = vld [vmem:[#allocation3 + $0x80] sm:$0xff]
        %v1476 = vld [vmem:[#allocation3 + $0x88] sm:$0xff]
        %s1477 = scalar_lea.vmem %s3, 64
        %v1478 = vld [vmem:[%s1477] sm:$0xff]
        %v1479 = vld [vmem:[%s1477 + $0x8] sm:$0xff]
        %v1480 = vld [vmem:[%s1477 + $0x10] sm:$0xff]
        %v1481 = vld [vmem:[%s1477 + $0x18] sm:$0xff]
        %v1483 = vsel %vm343, %v1461, 0
        %v1486 = vsel %vm343, %v1462, 0
        %v1489 = vsel %vm343, %v1463, 0
        %v1492 = vsel %vm343, %v1464, 0
        %v1495 = vsel %vm343, %v1465, 0
        %v1498 = vsel %vm343, %v1466, 0
        %v1501 = vsel %vm343, %v1467, 0
        %v1504 = vsel %vm343, %v1468, 0
        %v1507 = vsel %vm343, %v1469, 0
        %v1510 = vsel %vm343, %v1470, 0
        %v1513 = vsel %vm343, %v1471, 0
        %v1516 = vsel %vm343, %v1472, 0
        %v1519 = vsel %vm343, %v1473, 0
        %v1522 = vsel %vm343, %v1474, 0
        %v1525 = vsel %vm343, %v1475, 0
        %v1528 = vsel %vm343, %v1476, 0
        %1530 = vmatprep.subr.mxu0 0.0
        %1531 = vmatpush1.msra.mxu0 %v1478
        %1532 = vmatprep.subr.mxu0 0.0
        %1533 = vmatpush1.msra.mxu0 %v1479
        %1534 = vmatprep.subr.mxu0 0.0
        %1535 = vmatpush1.msra.mxu0 %v1480
        %1536 = vmatprep.subr.mxu0 0.0
        %1537 = vmatpush1.msra.mxu0 %v1481
        %1538 = vmatprep.subr.mxu0 0.0
        %1539 = vmatpush1.msra.mxu0 0.0
        %1540 = vmatprep.subr.mxu0 0.0
        %1541 = vmatpush1.msra.mxu0 0.0
        %1542 = vmatprep.subr.mxu0 0.0
        %1543 = vmatpush1.msra.mxu0 0.0
        %1544 = vmatprep.subr.mxu0 0.0
        %1545 = vmatpush1.msra.mxu0 0.0
        %1546 = vmatprep.subr.mxu0 0.0
        %1547 = vmatpush1.msra.mxu0 0.0
        %1548 = vmatprep.subr.mxu0 0.0
        %1549 = vmatpush1.msra.mxu0 0.0
        %1550 = vmatprep.subr.mxu0 0.0
        %1551 = vmatpush1.msra.mxu0 0.0
        %1552 = vmatprep.subr.mxu0 0.0
        %1553 = vmatpush1.msra.mxu0 0.0
        %1554 = vmatprep.subr.mxu0 0.0
        %1555 = vmatpush1.msra.mxu0 0.0
        %1556 = vmatprep.subr.mxu0 0.0
        %1557 = vmatpush1.msra.mxu0 0.0
        %1558 = vmatprep.subr.mxu0 0.0
        %1559 = vmatpush1.msra.mxu0 0.0
        %1560 = vmatprep.subr.mxu0 0.0
        %1561 = vmatpush1.msra.mxu0 0.0
        %1562 = vmatprep.subr.mxu0 0.0
        %1563 = vmatpush1.msra.mxu0 0.0
        %1564 = vmatprep.subr.mxu0 0.0
        %1565 = vmatpush1.msra.mxu0 0.0
        %1566 = vmatprep.subr.mxu0 0.0
        %1567 = vmatpush1.msra.mxu0 0.0
        %1568 = vmatprep.subr.mxu0 0.0
        %1569 = vmatpush1.msra.mxu0 0.0
        %1570 = vmatprep.subr.mxu0 0.0
        %1571 = vmatpush1.msra.mxu0 0.0
        %1572 = vmatprep.subr.mxu0 0.0
        %1573 = vmatpush1.msra.mxu0 0.0
        %1574 = vmatprep.subr.mxu0 0.0
        %1575 = vmatpush1.msra.mxu0 0.0
        %1576 = vmatprep.subr.mxu0 0.0
        %1577 = vmatpush1.msra.mxu0 0.0
        %1578 = vmatprep.subr.mxu0 0.0
        %1579 = vmatpush1.msra.mxu0 0.0
        %1580 = vmatprep.subr.mxu0 0.0
        %1581 = vmatpush1.msra.mxu0 0.0
        %1582 = vmatprep.subr.mxu0 0.0
        %1583 = vmatpush1.msra.mxu0 0.0
        %1584 = vmatprep.subr.mxu0 0.0
        %1585 = vmatpush1.msra.mxu0 0.0
        %1586 = vmatprep.subr.mxu0 0.0
        %1587 = vmatpush1.msra.mxu0 0.0
        %1588 = vmatprep.subr.mxu0 0.0
        %1589 = vmatpush1.msra.mxu0 0.0
        %1590 = vmatprep.subr.mxu0 0.0
        %1591 = vmatpush1.msra.mxu0 0.0
        %1592 = vmatprep.subr.mxu0 0.0
        %1593 = vmatpush1.msra.mxu0 0.0
        %1594 = vmatprep.mubr.f32.mxu0 0.0
        %1595 = vmatmul.mubr.f32.gmra.mrb[0].mxu0 %v1483
        %v1596 = vpop.f32.mrb[0].mxu0
        %v1597 = vadd.f32 0.0, %v1596
        %v1598 = vpop.f32.mrb[0].mxu0
        %1599 = vmatprep.mubr.f32.mxu0 0.0
        %1600 = vmatmul.mubr.f32.gmra.mrb[0].mxu0 %v1486
        %v1601 = vpop.f32.mrb[0].mxu0
        %v1602 = vadd.f32 0.0, %v1601
        %v1603 = vpop.f32.mrb[0].mxu0
        %1604 = vmatprep.mubr.f32.mxu0 0.0
        %1605 = vmatmul.mubr.f32.gmra.mrb[0].mxu0 %v1489
        %v1606 = vpop.f32.mrb[0].mxu0
        %v1607 = vadd.f32 0.0, %v1606
        %v1608 = vpop.f32.mrb[0].mxu0
        %1609 = vmatprep.mubr.f32.mxu0 0.0
        %1610 = vmatmul.mubr.f32.gmra.mrb[0].mxu0 %v1492
        %v1611 = vpop.f32.mrb[0].mxu0
        %v1612 = vadd.f32 0.0, %v1611
        %v1613 = vpop.f32.mrb[0].mxu0
        %1614 = vmatprep.mubr.f32.mxu0 0.0
        %1615 = vmatmul.mubr.f32.gmra.mrb[0].mxu0 %v1495
        %v1616 = vpop.f32.mrb[0].mxu0
        %v1617 = vadd.f32 0.0, %v1616
        %v1618 = vpop.f32.mrb[0].mxu0
        %1619 = vmatprep.mubr.f32.mxu0 0.0
        %1620 = vmatmul.mubr.f32.gmra.mrb[0].mxu0 %v1498
        %v1621 = vpop.f32.mrb[0].mxu0
        %v1622 = vadd.f32 0.0, %v1621
        %v1623 = vpop.f32.mrb[0].mxu0
        %1624 = vmatprep.mubr.f32.mxu0 0.0
        %1625 = vmatmul.mubr.f32.gmra.mrb[0].mxu0 %v1501
        %v1626 = vpop.f32.mrb[0].mxu0
        %v1627 = vadd.f32 0.0, %v1626
        %v1628 = vpop.f32.mrb[0].mxu0
        %1629 = vmatprep.mubr.f32.mxu0 0.0
        %1630 = vmatmul.mubr.f32.gmra.mrb[0].mxu0 %v1504
        %v1631 = vpop.f32.mrb[0].mxu0
        %v1632 = vadd.f32 0.0, %v1631
        %v1633 = vpop.f32.mrb[0].mxu0
        %1634 = vmatprep.mubr.f32.mxu0 0.0
        %1635 = vmatmul.mubr.f32.gmra.mrb[0].mxu0 %v1507
        %v1636 = vpop.f32.mrb[0].mxu0
        %v1637 = vadd.f32 0.0, %v1636
        %v1638 = vpop.f32.mrb[0].mxu0
        %1639 = vmatprep.mubr.f32.mxu0 0.0
        %1640 = vmatmul.mubr.f32.gmra.mrb[0].mxu0 %v1510
        %v1641 = vpop.f32.mrb[0].mxu0
        %v1642 = vadd.f32 0.0, %v1641
        %v1643 = vpop.f32.mrb[0].mxu0
        %1644 = vmatprep.mubr.f32.mxu0 0.0
        %1645 = vmatmul.mubr.f32.gmra.mrb[0].mxu0 %v1513
        %v1646 = vpop.f32.mrb[0].mxu0
        %v1647 = vadd.f32 0.0, %v1646
        %v1648 = vpop.f32.mrb[0].mxu0
        %1649 = vmatprep.mubr.f32.mxu0 0.0
        %1650 = vmatmul.mubr.f32.gmra.mrb[0].mxu0 %v1516
        %v1651 = vpop.f32.mrb[0].mxu0
        %v1652 = vadd.f32 0.0, %v1651
        %v1653 = vpop.f32.mrb[0].mxu0
        %1654 = vmatprep.mubr.f32.mxu0 0.0
        %1655 = vmatmul.mubr.f32.gmra.mrb[0].mxu0 %v1519
        %v1656 = vpop.f32.mrb[0].mxu0
        %v1657 = vadd.f32 0.0, %v1656
        %v1658 = vpop.f32.mrb[0].mxu0
        %1659 = vmatprep.mubr.f32.mxu0 0.0
        %1660 = vmatmul.mubr.f32.gmra.mrb[0].mxu0 %v1522
        %v1661 = vpop.f32.mrb[0].mxu0
        %v1662 = vadd.f32 0.0, %v1661
        %v1663 = vpop.f32.mrb[0].mxu0
        %1664 = vmatprep.mubr.f32.mxu0 0.0
        %1665 = vmatmul.mubr.f32.gmra.mrb[0].mxu0 %v1525
        %v1666 = vpop.f32.mrb[0].mxu0
        %v1667 = vadd.f32 0.0, %v1666
        %v1668 = vpop.f32.mrb[0].mxu0
        %1669 = vmatprep.mubr.f32.mxu0 0.0
        %1670 = vmatmul.mubr.f32.gmra.mrb[0].mxu0 %v1528
        %v1671 = vpop.f32.mrb[0].mxu0
        %v1672 = vadd.f32 0.0, %v1671
        %v1673 = vpop.f32.mrb[0].mxu0
        %1674 = vdwg.mxu0
        %v1675 = vadd.f32 %v1383, %v1597
        %v1676 = vadd.f32 %v1388, %v1602
        %v1677 = vadd.f32 %v1393, %v1607
        %v1678 = vadd.f32 %v1398, %v1612
        %v1679 = vadd.f32 %v1403, %v1617
        %v1680 = vadd.f32 %v1408, %v1622
        %v1681 = vadd.f32 %v1413, %v1627
        %v1682 = vadd.f32 %v1418, %v1632
        %v1683 = vadd.f32 %v1423, %v1637
        %v1684 = vadd.f32 %v1428, %v1642
        %v1685 = vadd.f32 %v1433, %v1647
        %v1686 = vadd.f32 %v1438, %v1652
        %v1687 = vadd.f32 %v1443, %v1657
        %v1688 = vadd.f32 %v1448, %v1662
        %v1689 = vadd.f32 %v1453, %v1667
        %v1690 = vadd.f32 %v1458, %v1672
        %v1691 = vld [vmem:[%s4] sm:$0x1]
        %v1693 = vlaneseq
        %v1694 = vshrl.u32 %v1693, 7
        %v1695 = vsub.s32 0, %v1694
        %v1696 = vrot.slane %v1691, %v1695
        %v1698 = vadd.f32 %v1675, %v1696
        %v1699 = vadd.f32 %v1676, %v1696
        %v1700 = vadd.f32 %v1677, %v1696
        %v1701 = vadd.f32 %v1678, %v1696
        %v1702 = vadd.f32 %v1679, %v1696
        %v1703 = vadd.f32 %v1680, %v1696
        %v1704 = vadd.f32 %v1681, %v1696
        %v1705 = vadd.f32 %v1682, %v1696
        %v1706 = vadd.f32 %v1683, %v1696
        %v1707 = vadd.f32 %v1684, %v1696
        %v1708 = vadd.f32 %v1685, %v1696
        %v1709 = vadd.f32 %v1686, %v1696
        %v1710 = vadd.f32 %v1687, %v1696
        %v1711 = vadd.f32 %v1688, %v1696
        %v1712 = vadd.f32 %v1689, %v1696
        %v1713 = vadd.f32 %v1690, %v1696
        %v1714 = vmax.f32 %v1698, 0.0
        %v1715 = vmax.f32 %v1699, 0.0
        %v1716 = vmax.f32 %v1700, 0.0
        %v1717 = vmax.f32 %v1701, 0.0
        %v1718 = vmax.f32 %v1702, 0.0
        %v1719 = vmax.f32 %v1703, 0.0
        %v1720 = vmax.f32 %v1704, 0.0
        %v1721 = vmax.f32 %v1705, 0.0
        %v1722 = vmax.f32 %v1706, 0.0
        %v1723 = vmax.f32 %v1707, 0.0
        %v1724 = vmax.f32 %v1708, 0.0
        %v1725 = vmax.f32 %v1709, 0.0
        %v1726 = vmax.f32 %v1710, 0.0
        %v1727 = vmax.f32 %v1711, 0.0
        %v1728 = vmax.f32 %v1712, 0.0
        %v1729 = vmax.f32 %v1713, 0.0
        %1730 = vst.msk [vmem:[#allocation2 + $0x8] sm:$0xff] %vm343, %v1714
        %1731 = vst.msk [vmem:[#allocation2 + $0x10] sm:$0xff] %vm343, %v1715
        %1732 = vst.msk [vmem:[#allocation2 + $0x18] sm:$0xff] %vm343, %v1716
        %1733 = vst.msk [vmem:[#allocation2 + $0x20] sm:$0xff] %vm343, %v1717
        %1734 = vst.msk [vmem:[#allocation2 + $0x28] sm:$0xff] %vm343, %v1718
        %1735 = vst.msk [vmem:[#allocation2 + $0x30] sm:$0xff] %vm343, %v1719
        %1736 = vst.msk [vmem:[#allocation2 + $0x38] sm:$0xff] %vm343, %v1720
        %1737 = vst.msk [vmem:[#allocation2 + $0x40] sm:$0xff] %vm343, %v1721
        %1738 = vst.msk [vmem:[#allocation2 + $0x48] sm:$0xff] %vm343, %v1722
        %1739 = vst.msk [vmem:[#allocation2 + $0x50] sm:$0xff] %vm343, %v1723
        %1740 = vst.msk [vmem:[#allocation2 + $0x58] sm:$0xff] %vm343, %v1724
        %1741 = vst.msk [vmem:[#allocation2 + $0x60] sm:$0xff] %vm343, %v1725
        %1742 = vst.msk [vmem:[#allocation2 + $0x68] sm:$0xff] %vm343, %v1726
        %1743 = vst.msk [vmem:[#allocation2 + $0x70] sm:$0xff] %vm343, %v1727
        %1744 = vst.msk [vmem:[#allocation2 + $0x78] sm:$0xff] %vm343, %v1728
        %1745 = vst.msk [vmem:[#allocation2 + $0x80] sm:$0xff] %vm343, %v1729
        %v1746 = vld [vmem:[#allocation2] sm:$0xff]
        %v1747 = vld [vmem:[#allocation2 + $0x8] sm:$0xff]
        %v1748 = vld [vmem:[#allocation2 + $0x10] sm:$0xff]
        %v1749 = vld [vmem:[#allocation2 + $0x18] sm:$0xff]
        %v1750 = vld [vmem:[#allocation2 + $0x20] sm:$0xff]
        %v1751 = vld [vmem:[#allocation2 + $0x28] sm:$0xff]
        %v1752 = vld [vmem:[#allocation2 + $0x30] sm:$0xff]
        %v1753 = vld [vmem:[#allocation2 + $0x38] sm:$0xff]
        %v1754 = vld [vmem:[#allocation2 + $0x40] sm:$0xff]
        %v1755 = vld [vmem:[#allocation2 + $0x48] sm:$0xff]
        %v1756 = vld [vmem:[#allocation2 + $0x50] sm:$0xff]
        %v1757 = vld [vmem:[#allocation2 + $0x58] sm:$0xff]
        %v1758 = vld [vmem:[#allocation2 + $0x60] sm:$0xff]
        %v1759 = vld [vmem:[#allocation2 + $0x68] sm:$0xff]
        %v1760 = vld [vmem:[#allocation2 + $0x70] sm:$0xff]
        %v1761 = vld [vmem:[#allocation2 + $0x78] sm:$0xff]
        %v1762 = vld [vmem:[%s5] sm:$0xff]
        %v1763 = vld [vmem:[%s5 + $0x8] sm:$0xff]
        %v1764 = vld [vmem:[%s5 + $0x10] sm:$0xff]
        %v1765 = vld [vmem:[%s5 + $0x18] sm:$0xff]
        %v1766 = vld [vmem:[#allocation2 + $0x80] sm:$0xff]
        %s1767 = scalar_lea.vmem %s5, 32
        %v1768 = vld [vmem:[%s1767] sm:$0xff]
        %v1769 = vld [vmem:[%s1767 + $0x8] sm:$0xff]
        %v1770 = vld [vmem:[%s1767 + $0x10] sm:$0xff]
        %v1771 = vld [vmem:[%s1767 + $0x18] sm:$0xff]
        %v1773 = vsel %vm343, %v1747, 0
        %v1776 = vsel %vm343, %v1748, 0
        %v1779 = vsel %vm343, %v1749, 0
        %v1782 = vsel %vm343, %v1750, 0
        %v1785 = vsel %vm343, %v1751, 0
        %v1788 = vsel %vm343, %v1752, 0
        %v1791 = vsel %vm343, %v1753, 0
        %v1794 = vsel %vm343, %v1754, 0
        %v1797 = vsel %vm343, %v1755, 0
        %v1800 = vsel %vm343, %v1756, 0
        %v1803 = vsel %vm343, %v1757, 0
        %v1806 = vsel %vm343, %v1758, 0
        %v1809 = vsel %vm343, %v1759, 0
        %v1812 = vsel %vm343, %v1760, 0
        %v1815 = vsel %vm343, %v1761, 0
        %v1818 = vsel %vm343, %v1766, 0
        %1820 = vmatprep.subr.mxu0 0.0
        %1821 = vmatpush1.msra.mxu0 %v1768
        %1822 = vmatprep.subr.mxu0 0.0
        %1823 = vmatpush1.msra.mxu0 %v1769
        %1824 = vmatprep.subr.mxu0 0.0
        %1825 = vmatpush1.msra.mxu0 %v1770
        %1826 = vmatprep.subr.mxu0 0.0
        %1827 = vmatpush1.msra.mxu0 %v1771
        %1828 = vmatprep.subr.mxu0 0.0
        %1829 = vmatpush1.msra.mxu0 0.0
        %1830 = vmatprep.subr.mxu0 0.0
        %1831 = vmatpush1.msra.mxu0 0.0
        %1832 = vmatprep.subr.mxu0 0.0
        %1833 = vmatpush1.msra.mxu0 0.0
        %1834 = vmatprep.subr.mxu0 0.0
        %1835 = vmatpush1.msra.mxu0 0.0
        %1836 = vmatprep.subr.mxu0 0.0
        %1837 = vmatpush1.msra.mxu0 0.0
        %1838 = vmatprep.subr.mxu0 0.0
        %1839 = vmatpush1.msra.mxu0 0.0
        %1840 = vmatprep.subr.mxu0 0.0
        %1841 = vmatpush1.msra.mxu0 0.0
        %1842 = vmatprep.subr.mxu0 0.0
        %1843 = vmatpush1.msra.mxu0 0.0
        %1844 = vmatprep.subr.mxu0 0.0
        %1845 = vmatpush1.msra.mxu0 0.0
        %1846 = vmatprep.subr.mxu0 0.0
        %1847 = vmatpush1.msra.mxu0 0.0
        %1848 = vmatprep.subr.mxu0 0.0
        %1849 = vmatpush1.msra.mxu0 0.0
        %1850 = vmatprep.subr.mxu0 0.0
        %1851 = vmatpush1.msra.mxu0 0.0
        %1852 = vmatprep.subr.mxu0 0.0
        %1853 = vmatpush1.msra.mxu0 0.0
        %1854 = vmatprep.subr.mxu0 0.0
        %1855 = vmatpush1.msra.mxu0 0.0
        %1856 = vmatprep.subr.mxu0 0.0
        %1857 = vmatpush1.msra.mxu0 0.0
        %1858 = vmatprep.subr.mxu0 0.0
        %1859 = vmatpush1.msra.mxu0 0.0
        %1860 = vmatprep.subr.mxu0 0.0
        %1861 = vmatpush1.msra.mxu0 0.0
        %1862 = vmatprep.subr.mxu0 0.0
        %1863 = vmatpush1.msra.mxu0 0.0
        %1864 = vmatprep.subr.mxu0 0.0
        %1865 = vmatpush1.msra.mxu0 0.0
        %1866 = vmatprep.subr.mxu0 0.0
        %1867 = vmatpush1.msra.mxu0 0.0
        %1868 = vmatprep.subr.mxu0 0.0
        %1869 = vmatpush1.msra.mxu0 0.0
        %1870 = vmatprep.subr.mxu0 0.0
        %1871 = vmatpush1.msra.mxu0 0.0
        %1872 = vmatprep.subr.mxu0 0.0
        %1873 = vmatpush1.msra.mxu0 0.0
        %1874 = vmatprep.subr.mxu0 0.0
        %1875 = vmatpush1.msra.mxu0 0.0
        %1876 = vmatprep.subr.mxu0 0.0
        %1877 = vmatpush1.msra.mxu0 0.0
        %1878 = vmatprep.subr.mxu0 0.0
        %1879 = vmatpush1.msra.mxu0 0.0
        %1880 = vmatprep.subr.mxu0 0.0
        %1881 = vmatpush1.msra.mxu0 0.0
        %1882 = vmatprep.subr.mxu0 0.0
        %1883 = vmatpush1.msra.mxu0 0.0
        %1884 = vmatprep.mubr.f32.mxu0 0.0
        %1885 = vmatmul.mubr.f32.gmra.mrb[0].mxu0 %v1773
        %v1886 = vpop.f32.mrb[0].mxu0
        %v1887 = vadd.f32 0.0, %v1886
        %v1888 = vpop.f32.mrb[0].mxu0
        %1889 = vmatprep.mubr.f32.mxu0 0.0
        %1890 = vmatmul.mubr.f32.gmra.mrb[0].mxu0 %v1776
        %v1891 = vpop.f32.mrb[0].mxu0
        %v1892 = vadd.f32 0.0, %v1891
        %v1893 = vpop.f32.mrb[0].mxu0
        %1894 = vmatprep.mubr.f32.mxu0 0.0
        %1895 = vmatmul.mubr.f32.gmra.mrb[0].mxu0 %v1779
        %v1896 = vpop.f32.mrb[0].mxu0
        %v1897 = vadd.f32 0.0, %v1896
        %v1898 = vpop.f32.mrb[0].mxu0
        %1899 = vmatprep.mubr.f32.mxu0 0.0
        %1900 = vmatmul.mubr.f32.gmra.mrb[0].mxu0 %v1782
        %v1901 = vpop.f32.mrb[0].mxu0
        %v1902 = vadd.f32 0.0, %v1901
        %v1903 = vpop.f32.mrb[0].mxu0
        %1904 = vmatprep.mubr.f32.mxu0 0.0
        %1905 = vmatmul.mubr.f32.gmra.mrb[0].mxu0 %v1785
        %v1906 = vpop.f32.mrb[0].mxu0
        %v1907 = vadd.f32 0.0, %v1906
        %v1908 = vpop.f32.mrb[0].mxu0
        %1909 = vmatprep.mubr.f32.mxu0 0.0
        %1910 = vmatmul.mubr.f32.gmra.mrb[0].mxu0 %v1788
        %v1911 = vpop.f32.mrb[0].mxu0
        %v1912 = vadd.f32 0.0, %v1911
        %v1913 = vpop.f32.mrb[0].mxu0
        %1914 = vmatprep.mubr.f32.mxu0 0.0
        %1915 = vmatmul.mubr.f32.gmra.mrb[0].mxu0 %v1791
        %v1916 = vpop.f32.mrb[0].mxu0
        %v1917 = vadd.f32 0.0, %v1916
        %v1918 = vpop.f32.mrb[0].mxu0
        %1919 = vmatprep.mubr.f32.mxu0 0.0
        %1920 = vmatmul.mubr.f32.gmra.mrb[0].mxu0 %v1794
        %v1921 = vpop.f32.mrb[0].mxu0
        %v1922 = vadd.f32 0.0, %v1921
        %v1923 = vpop.f32.mrb[0].mxu0
        %1924 = vmatprep.mubr.f32.mxu0 0.0
        %1925 = vmatmul.mubr.f32.gmra.mrb[0].mxu0 %v1797
        %v1926 = vpop.f32.mrb[0].mxu0
        %v1927 = vadd.f32 0.0, %v1926
        %v1928 = vpop.f32.mrb[0].mxu0
        %1929 = vmatprep.mubr.f32.mxu0 0.0
        %1930 = vmatmul.mubr.f32.gmra.mrb[0].mxu0 %v1800
        %v1931 = vpop.f32.mrb[0].mxu0
        %v1932 = vadd.f32 0.0, %v1931
        %v1933 = vpop.f32.mrb[0].mxu0
        %1934 = vmatprep.mubr.f32.mxu0 0.0
        %1935 = vmatmul.mubr.f32.gmra.mrb[0].mxu0 %v1803
        %v1936 = vpop.f32.mrb[0].mxu0
        %v1937 = vadd.f32 0.0, %v1936
        %v1938 = vpop.f32.mrb[0].mxu0
        %1939 = vmatprep.mubr.f32.mxu0 0.0
        %1940 = vmatmul.mubr.f32.gmra.mrb[0].mxu0 %v1806
        %v1941 = vpop.f32.mrb[0].mxu0
        %v1942 = vadd.f32 0.0, %v1941
        %v1943 = vpop.f32.mrb[0].mxu0
        %1944 = vmatprep.mubr.f32.mxu0 0.0
        %1945 = vmatmul.mubr.f32.gmra.mrb[0].mxu0 %v1809
        %v1946 = vpop.f32.mrb[0].mxu0
        %v1947 = vadd.f32 0.0, %v1946
        %v1948 = vpop.f32.mrb[0].mxu0
        %1949 = vmatprep.mubr.f32.mxu0 0.0
        %1950 = vmatmul.mubr.f32.gmra.mrb[0].mxu0 %v1812
        %v1951 = vpop.f32.mrb[0].mxu0
        %v1952 = vadd.f32 0.0, %v1951
        %v1953 = vpop.f32.mrb[0].mxu0
        %1954 = vmatprep.mubr.f32.mxu0 0.0
        %1955 = vmatmul.mubr.f32.gmra.mrb[0].mxu0 %v1815
        %v1956 = vpop.f32.mrb[0].mxu0
        %v1957 = vadd.f32 0.0, %v1956
        %v1958 = vpop.f32.mrb[0].mxu0
        %1959 = vmatprep.mubr.f32.mxu0 0.0
        %1960 = vmatmul.mubr.f32.gmra.mrb[0].mxu0 %v1818
        %v1961 = vpop.f32.mrb[0].mxu0
        %v1962 = vadd.f32 0.0, %v1961
        %v1963 = vpop.f32.mrb[0].mxu0
        %1964 = vdwg.mxu0
        %v1966 = vsel %vm343, %v1746, 0
        %1968 = vmatprep.subr.mxu0 0.0
        %1969 = vmatpush1.msra.mxu0 %v1762
        %1970 = vmatprep.subr.mxu0 0.0
        %1971 = vmatpush1.msra.mxu0 %v1763
        %1972 = vmatprep.subr.mxu0 0.0
        %1973 = vmatpush1.msra.mxu0 %v1764
        %1974 = vmatprep.subr.mxu0 0.0
        %1975 = vmatpush1.msra.mxu0 %v1765
        %1976 = vmatprep.subr.mxu0 0.0
        %1977 = vmatpush1.msra.mxu0 0.0
        %1978 = vmatprep.subr.mxu0 0.0
        %1979 = vmatpush1.msra.mxu0 0.0
        %1980 = vmatprep.subr.mxu0 0.0
        %1981 = vmatpush1.msra.mxu0 0.0
        %1982 = vmatprep.subr.mxu0 0.0
        %1983 = vmatpush1.msra.mxu0 0.0
        %1984 = vmatprep.subr.mxu0 0.0
        %1985 = vmatpush1.msra.mxu0 0.0
        %1986 = vmatprep.subr.mxu0 0.0
        %1987 = vmatpush1.msra.mxu0 0.0
        %1988 = vmatprep.subr.mxu0 0.0
        %1989 = vmatpush1.msra.mxu0 0.0
        %1990 = vmatprep.subr.mxu0 0.0
        %1991 = vmatpush1.msra.mxu0 0.0
        %1992 = vmatprep.subr.mxu0 0.0
        %1993 = vmatpush1.msra.mxu0 0.0
        %1994 = vmatprep.subr.mxu0 0.0
        %1995 = vmatpush1.msra.mxu0 0.0
        %1996 = vmatprep.subr.mxu0 0.0
        %1997 = vmatpush1.msra.mxu0 0.0
        %1998 = vmatprep.subr.mxu0 0.0
        %1999 = vmatpush1.msra.mxu0 0.0
        %2000 = vmatprep.subr.mxu0 0.0
        %2001 = vmatpush1.msra.mxu0 0.0
        %2002 = vmatprep.subr.mxu0 0.0
        %2003 = vmatpush1.msra.mxu0 0.0
        %2004 = vmatprep.subr.mxu0 0.0
        %2005 = vmatpush1.msra.mxu0 0.0
        %2006 = vmatprep.subr.mxu0 0.0
        %2007 = vmatpush1.msra.mxu0 0.0
        %2008 = vmatprep.subr.mxu0 0.0
        %2009 = vmatpush1.msra.mxu0 0.0
        %2010 = vmatprep.subr.mxu0 0.0
        %2011 = vmatpush1.msra.mxu0 0.0
        %2012 = vmatprep.subr.mxu0 0.0
        %2013 = vmatpush1.msra.mxu0 0.0
        %2014 = vmatprep.subr.mxu0 0.0
        %2015 = vmatpush1.msra.mxu0 0.0
        %2016 = vmatprep.subr.mxu0 0.0
        %2017 = vmatpush1.msra.mxu0 0.0
        %2018 = vmatprep.subr.mxu0 0.0
        %2019 = vmatpush1.msra.mxu0 0.0
        %2020 = vmatprep.subr.mxu0 0.0
        %2021 = vmatpush1.msra.mxu0 0.0
        %2022 = vmatprep.subr.mxu0 0.0
        %2023 = vmatpush1.msra.mxu0 0.0
        %2024 = vmatprep.subr.mxu0 0.0
        %2025 = vmatpush1.msra.mxu0 0.0
        %2026 = vmatprep.subr.mxu0 0.0
        %2027 = vmatpush1.msra.mxu0 0.0
        %2028 = vmatprep.subr.mxu0 0.0
        %2029 = vmatpush1.msra.mxu0 0.0
        %2030 = vmatprep.subr.mxu0 0.0
        %2031 = vmatpush1.msra.mxu0 0.0
        %2032 = vmatprep.mubr.f32.mxu0 0.0
        %2033 = vmatmul.mubr.f32.gmra.mrb[0].mxu0 %v1966
        %v2034 = vpop.f32.mrb[0].mxu0
        %v2035 = vadd.f32 %v1887, %v2034
        %v2036 = vpop.f32.mrb[0].mxu0
        %2037 = vmatprep.mubr.f32.mxu0 0.0
        %2038 = vmatmul.mubr.f32.gmra.mrb[0].mxu0 %v1773
        %v2039 = vpop.f32.mrb[0].mxu0
        %v2040 = vadd.f32 %v1892, %v2039
        %v2041 = vpop.f32.mrb[0].mxu0
        %2042 = vmatprep.mubr.f32.mxu0 0.0
        %2043 = vmatmul.mubr.f32.gmra.mrb[0].mxu0 %v1776
        %v2044 = vpop.f32.mrb[0].mxu0
        %v2045 = vadd.f32 %v1897, %v2044
        %v2046 = vpop.f32.mrb[0].mxu0
        %2047 = vmatprep.mubr.f32.mxu0 0.0
        %2048 = vmatmul.mubr.f32.gmra.mrb[0].mxu0 %v1779
        %v2049 = vpop.f32.mrb[0].mxu0
        %v2050 = vadd.f32 %v1902, %v2049
        %v2051 = vpop.f32.mrb[0].mxu0
        %2052 = vmatprep.mubr.f32.mxu0 0.0
        %2053 = vmatmul.mubr.f32.gmra.mrb[0].mxu0 %v1782
        %v2054 = vpop.f32.mrb[0].mxu0
        %v2055 = vadd.f32 %v1907, %v2054
        %v2056 = vpop.f32.mrb[0].mxu0
        %2057 = vmatprep.mubr.f32.mxu0 0.0
        %2058 = vmatmul.mubr.f32.gmra.mrb[0].mxu0 %v1785
        %v2059 = vpop.f32.mrb[0].mxu0
        %v2060 = vadd.f32 %v1912, %v2059
        %v2061 = vpop.f32.mrb[0].mxu0
        %2062 = vmatprep.mubr.f32.mxu0 0.0
        %2063 = vmatmul.mubr.f32.gmra.mrb[0].mxu0 %v1788
        %v2064 = vpop.f32.mrb[0].mxu0
        %v2065 = vadd.f32 %v1917, %v2064
        %v2066 = vpop.f32.mrb[0].mxu0
        %2067 = vmatprep.mubr.f32.mxu0 0.0
        %2068 = vmatmul.mubr.f32.gmra.mrb[0].mxu0 %v1791
        %v2069 = vpop.f32.mrb[0].mxu0
        %v2070 = vadd.f32 %v1922, %v2069
        %v2071 = vpop.f32.mrb[0].mxu0
        %2072 = vmatprep.mubr.f32.mxu0 0.0
        %2073 = vmatmul.mubr.f32.gmra.mrb[0].mxu0 %v1794
        %v2074 = vpop.f32.mrb[0].mxu0
        %v2075 = vadd.f32 %v1927, %v2074
        %v2076 = vpop.f32.mrb[0].mxu0
        %2077 = vmatprep.mubr.f32.mxu0 0.0
        %2078 = vmatmul.mubr.f32.gmra.mrb[0].mxu0 %v1797
        %v2079 = vpop.f32.mrb[0].mxu0
        %v2080 = vadd.f32 %v1932, %v2079
        %v2081 = vpop.f32.mrb[0].mxu0
        %2082 = vmatprep.mubr.f32.mxu0 0.0
        %2083 = vmatmul.mubr.f32.gmra.mrb[0].mxu0 %v1800
        %v2084 = vpop.f32.mrb[0].mxu0
        %v2085 = vadd.f32 %v1937, %v2084
        %v2086 = vpop.f32.mrb[0].mxu0
        %2087 = vmatprep.mubr.f32.mxu0 0.0
        %2088 = vmatmul.mubr.f32.gmra.mrb[0].mxu0 %v1803
        %v2089 = vpop.f32.mrb[0].mxu0
        %v2090 = vadd.f32 %v1942, %v2089
        %v2091 = vpop.f32.mrb[0].mxu0
        %2092 = vmatprep.mubr.f32.mxu0 0.0
        %2093 = vmatmul.mubr.f32.gmra.mrb[0].mxu0 %v1806
        %v2094 = vpop.f32.mrb[0].mxu0
        %v2095 = vadd.f32 %v1947, %v2094
        %v2096 = vpop.f32.mrb[0].mxu0
        %2097 = vmatprep.mubr.f32.mxu0 0.0
        %2098 = vmatmul.mubr.f32.gmra.mrb[0].mxu0 %v1809
        %v2099 = vpop.f32.mrb[0].mxu0
        %v2100 = vadd.f32 %v1952, %v2099
        %v2101 = vpop.f32.mrb[0].mxu0
        %2102 = vmatprep.mubr.f32.mxu0 0.0
        %2103 = vmatmul.mubr.f32.gmra.mrb[0].mxu0 %v1812
        %v2104 = vpop.f32.mrb[0].mxu0
        %v2105 = vadd.f32 %v1957, %v2104
        %v2106 = vpop.f32.mrb[0].mxu0
        %2107 = vmatprep.mubr.f32.mxu0 0.0
        %2108 = vmatmul.mubr.f32.gmra.mrb[0].mxu0 %v1815
        %v2109 = vpop.f32.mrb[0].mxu0
        %v2110 = vadd.f32 %v1962, %v2109
        %v2111 = vpop.f32.mrb[0].mxu0
        %2112 = vdwg.mxu0
        %v2113 = vld [vmem:[#allocation2 + $0x10] sm:$0xff]
        %v2114 = vld [vmem:[#allocation2 + $0x18] sm:$0xff]
        %v2115 = vld [vmem:[#allocation2 + $0x20] sm:$0xff]
        %v2116 = vld [vmem:[#allocation2 + $0x28] sm:$0xff]
        %v2117 = vld [vmem:[#allocation2 + $0x30] sm:$0xff]
        %v2118 = vld [vmem:[#allocation2 + $0x38] sm:$0xff]
        %v2119 = vld [vmem:[#allocation2 + $0x40] sm:$0xff]
        %v2120 = vld [vmem:[#allocation2 + $0x48] sm:$0xff]
        %v2121 = vld [vmem:[#allocation2 + $0x50] sm:$0xff]
        %v2122 = vld [vmem:[#allocation2 + $0x58] sm:$0xff]
        %v2123 = vld [vmem:[#allocation2 + $0x60] sm:$0xff]
        %v2124 = vld [vmem:[#allocation2 + $0x68] sm:$0xff]
        %v2125 = vld [vmem:[#allocation2 + $0x70] sm:$0xff]
        %v2126 = vld [vmem:[#allocation2 + $0x78] sm:$0xff]
        %v2127 = vld [vmem:[#allocation2 + $0x80] sm:$0xff]
        %v2128 = vld [vmem:[#allocation2 + $0x88] sm:$0xff]
        %s2129 = scalar_lea.vmem %s5, 64
        %v2130 = vld [vmem:[%s2129] sm:$0xff]
        %v2131 = vld [vmem:[%s2129 + $0x8] sm:$0xff]
        %v2132 = vld [vmem:[%s2129 + $0x10] sm:$0xff]
        %v2133 = vld [vmem:[%s2129 + $0x18] sm:$0xff]
        %v2135 = vsel %vm343, %v2113, 0
        %v2138 = vsel %vm343, %v2114, 0
        %v2141 = vsel %vm343, %v2115, 0
        %v2144 = vsel %vm343, %v2116, 0
        %v2147 = vsel %vm343, %v2117, 0
        %v2150 = vsel %vm343, %v2118, 0
        %v2153 = vsel %vm343, %v2119, 0
        %v2156 = vsel %vm343, %v2120, 0
        %v2159 = vsel %vm343, %v2121, 0
        %v2162 = vsel %vm343, %v2122, 0
        %v2165 = vsel %vm343, %v2123, 0
        %v2168 = vsel %vm343, %v2124, 0
        %v2171 = vsel %vm343, %v2125, 0
        %v2174 = vsel %vm343, %v2126, 0
        %v2177 = vsel %vm343, %v2127, 0
        %v2180 = vsel %vm343, %v2128, 0
        %2182 = vmatprep.subr.mxu0 0.0
        %2183 = vmatpush1.msra.mxu0 %v2130
        %2184 = vmatprep.subr.mxu0 0.0
        %2185 = vmatpush1.msra.mxu0 %v2131
        %2186 = vmatprep.subr.mxu0 0.0
        %2187 = vmatpush1.msra.mxu0 %v2132
        %2188 = vmatprep.subr.mxu0 0.0
        %2189 = vmatpush1.msra.mxu0 %v2133
        %2190 = vmatprep.subr.mxu0 0.0
        %2191 = vmatpush1.msra.mxu0 0.0
        %2192 = vmatprep.subr.mxu0 0.0
        %2193 = vmatpush1.msra.mxu0 0.0
        %2194 = vmatprep.subr.mxu0 0.0
        %2195 = vmatpush1.msra.mxu0 0.0
        %2196 = vmatprep.subr.mxu0 0.0
        %2197 = vmatpush1.msra.mxu0 0.0
        %2198 = vmatprep.subr.mxu0 0.0
        %2199 = vmatpush1.msra.mxu0 0.0
        %2200 = vmatprep.subr.mxu0 0.0
        %2201 = vmatpush1.msra.mxu0 0.0
        %2202 = vmatprep.subr.mxu0 0.0
        %2203 = vmatpush1.msra.mxu0 0.0
        %2204 = vmatprep.subr.mxu0 0.0
        %2205 = vmatpush1.msra.mxu0 0.0
        %2206 = vmatprep.subr.mxu0 0.0
        %2207 = vmatpush1.msra.mxu0 0.0
        %2208 = vmatprep.subr.mxu0 0.0
        %2209 = vmatpush1.msra.mxu0 0.0
        %2210 = vmatprep.subr.mxu0 0.0
        %2211 = vmatpush1.msra.mxu0 0.0
        %2212 = vmatprep.subr.mxu0 0.0
        %2213 = vmatpush1.msra.mxu0 0.0
        %2214 = vmatprep.subr.mxu0 0.0
        %2215 = vmatpush1.msra.mxu0 0.0
        %2216 = vmatprep.subr.mxu0 0.0
        %2217 = vmatpush1.msra.mxu0 0.0
        %2218 = vmatprep.subr.mxu0 0.0
        %2219 = vmatpush1.msra.mxu0 0.0
        %2220 = vmatprep.subr.mxu0 0.0
        %2221 = vmatpush1.msra.mxu0 0.0
        %2222 = vmatprep.subr.mxu0 0.0
        %2223 = vmatpush1.msra.mxu0 0.0
        %2224 = vmatprep.subr.mxu0 0.0
        %2225 = vmatpush1.msra.mxu0 0.0
        %2226 = vmatprep.subr.mxu0 0.0
        %2227 = vmatpush1.msra.mxu0 0.0
        %2228 = vmatprep.subr.mxu0 0.0
        %2229 = vmatpush1.msra.mxu0 0.0
        %2230 = vmatprep.subr.mxu0 0.0
        %2231 = vmatpush1.msra.mxu0 0.0
        %2232 = vmatprep.subr.mxu0 0.0
        %2233 = vmatpush1.msra.mxu0 0.0
        %2234 = vmatprep.subr.mxu0 0.0
        %2235 = vmatpush1.msra.mxu0 0.0
        %2236 = vmatprep.subr.mxu0 0.0
        %2237 = vmatpush1.msra.mxu0 0.0
        %2238 = vmatprep.subr.mxu0 0.0
        %2239 = vmatpush1.msra.mxu0 0.0
        %2240 = vmatprep.subr.mxu0 0.0
        %2241 = vmatpush1.msra.mxu0 0.0
        %2242 = vmatprep.subr.mxu0 0.0
        %2243 = vmatpush1.msra.mxu0 0.0
        %2244 = vmatprep.subr.mxu0 0.0
        %2245 = vmatpush1.msra.mxu0 0.0
        %2246 = vmatprep.mubr.f32.mxu0 0.0
        %2247 = vmatmul.mubr.f32.gmra.mrb[0].mxu0 %v2135
        %v2248 = vpop.f32.mrb[0].mxu0
        %v2249 = vadd.f32 0.0, %v2248
        %v2250 = vpop.f32.mrb[0].mxu0
        %2251 = vmatprep.mubr.f32.mxu0 0.0
        %2252 = vmatmul.mubr.f32.gmra.mrb[0].mxu0 %v2138
        %v2253 = vpop.f32.mrb[0].mxu0
        %v2254 = vadd.f32 0.0, %v2253
        %v2255 = vpop.f32.mrb[0].mxu0
        %2256 = vmatprep.mubr.f32.mxu0 0.0
        %2257 = vmatmul.mubr.f32.gmra.mrb[0].mxu0 %v2141
        %v2258 = vpop.f32.mrb[0].mxu0
        %v2259 = vadd.f32 0.0, %v2258
        %v2260 = vpop.f32.mrb[0].mxu0
        %2261 = vmatprep.mubr.f32.mxu0 0.0
        %2262 = vmatmul.mubr.f32.gmra.mrb[0].mxu0 %v2144
        %v2263 = vpop.f32.mrb[0].mxu0
        %v2264 = vadd.f32 0.0, %v2263
        %v2265 = vpop.f32.mrb[0].mxu0
        %2266 = vmatprep.mubr.f32.mxu0 0.0
        %2267 = vmatmul.mubr.f32.gmra.mrb[0].mxu0 %v2147
        %v2268 = vpop.f32.mrb[0].mxu0
        %v2269 = vadd.f32 0.0, %v2268
        %v2270 = vpop.f32.mrb[0].mxu0
        %2271 = vmatprep.mubr.f32.mxu0 0.0
        %2272 = vmatmul.mubr.f32.gmra.mrb[0].mxu0 %v2150
        %v2273 = vpop.f32.mrb[0].mxu0
        %v2274 = vadd.f32 0.0, %v2273
        %v2275 = vpop.f32.mrb[0].mxu0
        %2276 = vmatprep.mubr.f32.mxu0 0.0
        %2277 = vmatmul.mubr.f32.gmra.mrb[0].mxu0 %v2153
        %v2278 = vpop.f32.mrb[0].mxu0
        %v2279 = vadd.f32 0.0, %v2278
        %v2280 = vpop.f32.mrb[0].mxu0
        %2281 = vmatprep.mubr.f32.mxu0 0.0
        %2282 = vmatmul.mubr.f32.gmra.mrb[0].mxu0 %v2156
        %v2283 = vpop.f32.mrb[0].mxu0
        %v2284 = vadd.f32 0.0, %v2283
        %v2285 = vpop.f32.mrb[0].mxu0
        %2286 = vmatprep.mubr.f32.mxu0 0.0
        %2287 = vmatmul.mubr.f32.gmra.mrb[0].mxu0 %v2159
        %v2288 = vpop.f32.mrb[0].mxu0
        %v2289 = vadd.f32 0.0, %v2288
        %v2290 = vpop.f32.mrb[0].mxu0
        %2291 = vmatprep.mubr.f32.mxu0 0.0
        %2292 = vmatmul.mubr.f32.gmra.mrb[0].mxu0 %v2162
        %v2293 = vpop.f32.mrb[0].mxu0
        %v2294 = vadd.f32 0.0, %v2293
        %v2295 = vpop.f32.mrb[0].mxu0
        %2296 = vmatprep.mubr.f32.mxu0 0.0
        %2297 = vmatmul.mubr.f32.gmra.mrb[0].mxu0 %v2165
        %v2298 = vpop.f32.mrb[0].mxu0
        %v2299 = vadd.f32 0.0, %v2298
        %v2300 = vpop.f32.mrb[0].mxu0
        %2301 = vmatprep.mubr.f32.mxu0 0.0
        %2302 = vmatmul.mubr.f32.gmra.mrb[0].mxu0 %v2168
        %v2303 = vpop.f32.mrb[0].mxu0
        %v2304 = vadd.f32 0.0, %v2303
        %v2305 = vpop.f32.mrb[0].mxu0
        %2306 = vmatprep.mubr.f32.mxu0 0.0
        %2307 = vmatmul.mubr.f32.gmra.mrb[0].mxu0 %v2171
        %v2308 = vpop.f32.mrb[0].mxu0
        %v2309 = vadd.f32 0.0, %v2308
        %v2310 = vpop.f32.mrb[0].mxu0
        %2311 = vmatprep.mubr.f32.mxu0 0.0
        %2312 = vmatmul.mubr.f32.gmra.mrb[0].mxu0 %v2174
        %v2313 = vpop.f32.mrb[0].mxu0
        %v2314 = vadd.f32 0.0, %v2313
        %v2315 = vpop.f32.mrb[0].mxu0
        %2316 = vmatprep.mubr.f32.mxu0 0.0
        %2317 = vmatmul.mubr.f32.gmra.mrb[0].mxu0 %v2177
        %v2318 = vpop.f32.mrb[0].mxu0
        %v2319 = vadd.f32 0.0, %v2318
        %v2320 = vpop.f32.mrb[0].mxu0
        %2321 = vmatprep.mubr.f32.mxu0 0.0
        %2322 = vmatmul.mubr.f32.gmra.mrb[0].mxu0 %v2180
        %v2323 = vpop.f32.mrb[0].mxu0
        %v2324 = vadd.f32 0.0, %v2323
        %v2325 = vpop.f32.mrb[0].mxu0
        %2326 = vdwg.mxu0
        %v2327 = vadd.f32 %v2035, %v2249
        %v2328 = vadd.f32 %v2040, %v2254
        %v2329 = vadd.f32 %v2045, %v2259
        %v2330 = vadd.f32 %v2050, %v2264
        %v2331 = vadd.f32 %v2055, %v2269
        %v2332 = vadd.f32 %v2060, %v2274
        %v2333 = vadd.f32 %v2065, %v2279
        %v2334 = vadd.f32 %v2070, %v2284
        %v2335 = vadd.f32 %v2075, %v2289
        %v2336 = vadd.f32 %v2080, %v2294
        %v2337 = vadd.f32 %v2085, %v2299
        %v2338 = vadd.f32 %v2090, %v2304
        %v2339 = vadd.f32 %v2095, %v2309
        %v2340 = vadd.f32 %v2100, %v2314
        %v2341 = vadd.f32 %v2105, %v2319
        %v2342 = vadd.f32 %v2110, %v2324
        %v2343 = vld [vmem:[%s6] sm:$0x1]
        %v2345 = vlaneseq
        %v2346 = vshrl.u32 %v2345, 7
        %v2347 = vsub.s32 0, %v2346
        %v2348 = vrot.slane %v2343, %v2347
        %v2350 = vadd.f32 %v2327, %v2348
        %v2351 = vadd.f32 %v2328, %v2348
        %v2352 = vadd.f32 %v2329, %v2348
        %v2353 = vadd.f32 %v2330, %v2348
        %v2354 = vadd.f32 %v2331, %v2348
        %v2355 = vadd.f32 %v2332, %v2348
        %v2356 = vadd.f32 %v2333, %v2348
        %v2357 = vadd.f32 %v2334, %v2348
        %v2358 = vadd.f32 %v2335, %v2348
        %v2359 = vadd.f32 %v2336, %v2348
        %v2360 = vadd.f32 %v2337, %v2348
        %v2361 = vadd.f32 %v2338, %v2348
        %v2362 = vadd.f32 %v2339, %v2348
        %v2363 = vadd.f32 %v2340, %v2348
        %v2364 = vadd.f32 %v2341, %v2348
        %v2365 = vadd.f32 %v2342, %v2348
        %v2366 = vmax.f32 %v2350, 0.0
        %v2367 = vmax.f32 %v2351, 0.0
        %v2368 = vmax.f32 %v2352, 0.0
        %v2369 = vmax.f32 %v2353, 0.0
        %v2370 = vmax.f32 %v2354, 0.0
        %v2371 = vmax.f32 %v2355, 0.0
        %v2372 = vmax.f32 %v2356, 0.0
        %v2373 = vmax.f32 %v2357, 0.0
        %v2374 = vmax.f32 %v2358, 0.0
        %v2375 = vmax.f32 %v2359, 0.0
        %v2376 = vmax.f32 %v2360, 0.0
        %v2377 = vmax.f32 %v2361, 0.0
        %v2378 = vmax.f32 %v2362, 0.0
        %v2379 = vmax.f32 %v2363, 0.0
        %v2380 = vmax.f32 %v2364, 0.0
        %v2381 = vmax.f32 %v2365, 0.0
        %2382 = vst.msk [vmem:[#allocation3 + $0x8] sm:$0xff] %vm343, %v2366
        %2383 = vst.msk [vmem:[#allocation3 + $0x10] sm:$0xff] %vm343, %v2367
        %2384 = vst.msk [vmem:[#allocation3 + $0x18] sm:$0xff] %vm343, %v2368
        %2385 = vst.msk [vmem:[#allocation3 + $0x20] sm:$0xff] %vm343, %v2369
        %2386 = vst.msk [vmem:[#allocation3 + $0x28] sm:$0xff] %vm343, %v2370
        %2387 = vst.msk [vmem:[#allocation3 + $0x30] sm:$0xff] %vm343, %v2371
        %2388 = vst.msk [vmem:[#allocation3 + $0x38] sm:$0xff] %vm343, %v2372
        %2389 = vst.msk [vmem:[#allocation3 + $0x40] sm:$0xff] %vm343, %v2373
        %2390 = vst.msk [vmem:[#allocation3 + $0x48] sm:$0xff] %vm343, %v2374
        %2391 = vst.msk [vmem:[#allocation3 + $0x50] sm:$0xff] %vm343, %v2375
        %2392 = vst.msk [vmem:[#allocation3 + $0x58] sm:$0xff] %vm343, %v2376
        %2393 = vst.msk [vmem:[#allocation3 + $0x60] sm:$0xff] %vm343, %v2377
        %2394 = vst.msk [vmem:[#allocation3 + $0x68] sm:$0xff] %vm343, %v2378
        %2395 = vst.msk [vmem:[#allocation3 + $0x70] sm:$0xff] %vm343, %v2379
        %2396 = vst.msk [vmem:[#allocation3 + $0x78] sm:$0xff] %vm343, %v2380
        %2397 = vst.msk [vmem:[#allocation3 + $0x80] sm:$0xff] %vm343, %v2381
        %v2398 = vld [vmem:[#allocation3 + $0x8] sm:$0xff]
        %v2399 = vld [vmem:[#allocation4] sm:$0xff]
        %v2400 = vld [vmem:[#allocation4 + $0x8] sm:$0xff]
        %v2401 = vld [vmem:[#allocation4 + $0x10] sm:$0xff]
        %v2402 = vld [vmem:[#allocation4 + $0x18] sm:$0xff]
        %v2403 = vld [vmem:[#allocation3 + $0x10] sm:$0xff]
        %s2404 = scalar_lea.vmem [#allocation4], 32
        %v2405 = vld [vmem:[%s2404] sm:$0xff]
        %v2406 = vld [vmem:[%s2404 + $0x8] sm:$0xff]
        %v2407 = vld [vmem:[%s2404 + $0x10] sm:$0xff]
        %v2408 = vld [vmem:[%s2404 + $0x18] sm:$0xff]
        %v2410 = vsel %vm343, %v2403, 0
        %2412 = vmatprep.subr.mxu0 0.0
        %2413 = vmatpush1.msra.mxu0 %v2405
        %2414 = vmatprep.subr.mxu0 0.0
        %2415 = vmatpush1.msra.mxu0 %v2406
        %2416 = vmatprep.subr.mxu0 0.0
        %2417 = vmatpush1.msra.mxu0 %v2407
        %2418 = vmatprep.subr.mxu0 0.0
        %2419 = vmatpush1.msra.mxu0 %v2408
        %2420 = vmatprep.subr.mxu0 0.0
        %2421 = vmatpush1.msra.mxu0 0.0
        %2422 = vmatprep.subr.mxu0 0.0
        %2423 = vmatpush1.msra.mxu0 0.0
        %2424 = vmatprep.subr.mxu0 0.0
        %2425 = vmatpush1.msra.mxu0 0.0
        %2426 = vmatprep.subr.mxu0 0.0
        %2427 = vmatpush1.msra.mxu0 0.0
        %2428 = vmatprep.subr.mxu0 0.0
        %2429 = vmatpush1.msra.mxu0 0.0
        %2430 = vmatprep.subr.mxu0 0.0
        %2431 = vmatpush1.msra.mxu0 0.0
        %2432 = vmatprep.subr.mxu0 0.0
        %2433 = vmatpush1.msra.mxu0 0.0
        %2434 = vmatprep.subr.mxu0 0.0
        %2435 = vmatpush1.msra.mxu0 0.0
        %2436 = vmatprep.subr.mxu0 0.0
        %2437 = vmatpush1.msra.mxu0 0.0
        %2438 = vmatprep.subr.mxu0 0.0
        %2439 = vmatpush1.msra.mxu0 0.0
        %2440 = vmatprep.subr.mxu0 0.0
        %2441 = vmatpush1.msra.mxu0 0.0
        %2442 = vmatprep.subr.mxu0 0.0
        %2443 = vmatpush1.msra.mxu0 0.0
        %2444 = vmatprep.subr.mxu0 0.0
        %2445 = vmatpush1.msra.mxu0 0.0
        %2446 = vmatprep.subr.mxu0 0.0
        %2447 = vmatpush1.msra.mxu0 0.0
        %2448 = vmatprep.subr.mxu0 0.0
        %2449 = vmatpush1.msra.mxu0 0.0
        %2450 = vmatprep.subr.mxu0 0.0
        %2451 = vmatpush1.msra.mxu0 0.0
        %2452 = vmatprep.subr.mxu0 0.0
        %2453 = vmatpush1.msra.mxu0 0.0
        %2454 = vmatprep.subr.mxu0 0.0
        %2455 = vmatpush1.msra.mxu0 0.0
        %2456 = vmatprep.subr.mxu0 0.0
        %2457 = vmatpush1.msra.mxu0 0.0
        %2458 = vmatprep.subr.mxu0 0.0
        %2459 = vmatpush1.msra.mxu0 0.0
        %2460 = vmatprep.subr.mxu0 0.0
        %2461 = vmatpush1.msra.mxu0 0.0
        %2462 = vmatprep.subr.mxu0 0.0
        %2463 = vmatpush1.msra.mxu0 0.0
        %2464 = vmatprep.subr.mxu0 0.0
        %2465 = vmatpush1.msra.mxu0 0.0
        %2466 = vmatprep.subr.mxu0 0.0
        %2467 = vmatpush1.msra.mxu0 0.0
        %2468 = vmatprep.subr.mxu0 0.0
        %2469 = vmatpush1.msra.mxu0 0.0
        %2470 = vmatprep.subr.mxu0 0.0
        %2471 = vmatpush1.msra.mxu0 0.0
        %2472 = vmatprep.subr.mxu0 0.0
        %2473 = vmatpush1.msra.mxu0 0.0
        %2474 = vmatprep.subr.mxu0 0.0
        %2475 = vmatpush1.msra.mxu0 0.0
        %2476 = vmatprep.mubr.f32.mxu0 0.0
        %2477 = vmatmul.mubr.f32.gmra.mrb[0].mxu0 %v2410
        %v2478 = vpop.f32.mrb[0].mxu0
        %v2479 = vadd.f32 0.0, %v2478
        %v2480 = vpop.f32.mrb[0].mxu0
        %2481 = vdwg.mxu0
        %v2483 = vsel %vm343, %v2398, 0
        %2485 = vmatprep.subr.mxu0 0.0
        %2486 = vmatpush1.msra.mxu0 %v2399
        %2487 = vmatprep.subr.mxu0 0.0
        %2488 = vmatpush1.msra.mxu0 %v2400
        %2489 = vmatprep.subr.mxu0 0.0
        %2490 = vmatpush1.msra.mxu0 %v2401
        %2491 = vmatprep.subr.mxu0 0.0
        %2492 = vmatpush1.msra.mxu0 %v2402
        %2493 = vmatprep.subr.mxu0 0.0
        %2494 = vmatpush1.msra.mxu0 0.0
        %2495 = vmatprep.subr.mxu0 0.0
        %2496 = vmatpush1.msra.mxu0 0.0
        %2497 = vmatprep.subr.mxu0 0.0
        %2498 = vmatpush1.msra.mxu0 0.0
        %2499 = vmatprep.subr.mxu0 0.0
        %2500 = vmatpush1.msra.mxu0 0.0
        %2501 = vmatprep.subr.mxu0 0.0
        %2502 = vmatpush1.msra.mxu0 0.0
        %2503 = vmatprep.subr.mxu0 0.0
        %2504 = vmatpush1.msra.mxu0 0.0
        %2505 = vmatprep.subr.mxu0 0.0
        %2506 = vmatpush1.msra.mxu0 0.0
        %2507 = vmatprep.subr.mxu0 0.0
        %2508 = vmatpush1.msra.mxu0 0.0
        %2509 = vmatprep.subr.mxu0 0.0
        %2510 = vmatpush1.msra.mxu0 0.0
        %2511 = vmatprep.subr.mxu0 0.0
        %2512 = vmatpush1.msra.mxu0 0.0
        %2513 = vmatprep.subr.mxu0 0.0
        %2514 = vmatpush1.msra.mxu0 0.0
        %2515 = vmatprep.subr.mxu0 0.0
        %2516 = vmatpush1.msra.mxu0 0.0
        %2517 = vmatprep.subr.mxu0 0.0
        %2518 = vmatpush1.msra.mxu0 0.0
        %2519 = vmatprep.subr.mxu0 0.0
        %2520 = vmatpush1.msra.mxu0 0.0
        %2521 = vmatprep.subr.mxu0 0.0
        %2522 = vmatpush1.msra.mxu0 0.0
        %2523 = vmatprep.subr.mxu0 0.0
        %2524 = vmatpush1.msra.mxu0 0.0
        %2525 = vmatprep.subr.mxu0 0.0
        %2526 = vmatpush1.msra.mxu0 0.0
        %2527 = vmatprep.subr.mxu0 0.0
        %2528 = vmatpush1.msra.mxu0 0.0
        %2529 = vmatprep.subr.mxu0 0.0
        %2530 = vmatpush1.msra.mxu0 0.0
        %2531 = vmatprep.subr.mxu0 0.0
        %2532 = vmatpush1.msra.mxu0 0.0
        %2533 = vmatprep.subr.mxu0 0.0
        %2534 = vmatpush1.msra.mxu0 0.0
        %2535 = vmatprep.subr.mxu0 0.0
        %2536 = vmatpush1.msra.mxu0 0.0
        %2537 = vmatprep.subr.mxu0 0.0
        %2538 = vmatpush1.msra.mxu0 0.0
        %2539 = vmatprep.subr.mxu0 0.0
        %2540 = vmatpush1.msra.mxu0 0.0
        %2541 = vmatprep.subr.mxu0 0.0
        %2542 = vmatpush1.msra.mxu0 0.0
        %2543 = vmatprep.subr.mxu0 0.0
        %2544 = vmatpush1.msra.mxu0 0.0
        %2545 = vmatprep.subr.mxu0 0.0
        %2546 = vmatpush1.msra.mxu0 0.0
        %2547 = vmatprep.subr.mxu0 0.0
        %2548 = vmatpush1.msra.mxu0 0.0
        %2549 = vmatprep.mubr.f32.mxu0 0.0
        %2550 = vmatmul.mubr.f32.gmra.mrb[0].mxu0 %v2483
        %v2551 = vpop.f32.mrb[0].mxu0
        %v2552 = vadd.f32 %v2479, %v2551
        %v2553 = vpop.f32.mrb[0].mxu0
        %2554 = vdwg.mxu0
        %v2555 = vld [vmem:[#allocation3 + $0x18] sm:$0xff]
        %s2556 = scalar_lea.vmem [#allocation4], 64
        %v2557 = vld [vmem:[%s2556] sm:$0xff]
        %v2558 = vld [vmem:[%s2556 + $0x8] sm:$0xff]
        %v2559 = vld [vmem:[%s2556 + $0x10] sm:$0xff]
        %v2560 = vld [vmem:[%s2556 + $0x18] sm:$0xff]
        %v2562 = vsel %vm343, %v2555, 0
        %2564 = vmatprep.subr.mxu0 0.0
        %2565 = vmatpush1.msra.mxu0 %v2557
        %2566 = vmatprep.subr.mxu0 0.0
        %2567 = vmatpush1.msra.mxu0 %v2558
        %2568 = vmatprep.subr.mxu0 0.0
        %2569 = vmatpush1.msra.mxu0 %v2559
        %2570 = vmatprep.subr.mxu0 0.0
        %2571 = vmatpush1.msra.mxu0 %v2560
        %2572 = vmatprep.subr.mxu0 0.0
        %2573 = vmatpush1.msra.mxu0 0.0
        %2574 = vmatprep.subr.mxu0 0.0
        %2575 = vmatpush1.msra.mxu0 0.0
        %2576 = vmatprep.subr.mxu0 0.0
        %2577 = vmatpush1.msra.mxu0 0.0
        %2578 = vmatprep.subr.mxu0 0.0
        %2579 = vmatpush1.msra.mxu0 0.0
        %2580 = vmatprep.subr.mxu0 0.0
        %2581 = vmatpush1.msra.mxu0 0.0
        %2582 = vmatprep.subr.mxu0 0.0
        %2583 = vmatpush1.msra.mxu0 0.0
        %2584 = vmatprep.subr.mxu0 0.0
        %2585 = vmatpush1.msra.mxu0 0.0
        %2586 = vmatprep.subr.mxu0 0.0
        %2587 = vmatpush1.msra.mxu0 0.0
        %2588 = vmatprep.subr.mxu0 0.0
        %2589 = vmatpush1.msra.mxu0 0.0
        %2590 = vmatprep.subr.mxu0 0.0
        %2591 = vmatpush1.msra.mxu0 0.0
        %2592 = vmatprep.subr.mxu0 0.0
        %2593 = vmatpush1.msra.mxu0 0.0
        %2594 = vmatprep.subr.mxu0 0.0
        %2595 = vmatpush1.msra.mxu0 0.0
        %2596 = vmatprep.subr.mxu0 0.0
        %2597 = vmatpush1.msra.mxu0 0.0
        %2598 = vmatprep.subr.mxu0 0.0
        %2599 = vmatpush1.msra.mxu0 0.0
        %2600 = vmatprep.subr.mxu0 0.0
        %2601 = vmatpush1.msra.mxu0 0.0
        %2602 = vmatprep.subr.mxu0 0.0
        %2603 = vmatpush1.msra.mxu0 0.0
        %2604 = vmatprep.subr.mxu0 0.0
        %2605 = vmatpush1.msra.mxu0 0.0
        %2606 = vmatprep.subr.mxu0 0.0
        %2607 = vmatpush1.msra.mxu0 0.0
        %2608 = vmatprep.subr.mxu0 0.0
        %2609 = vmatpush1.msra.mxu0 0.0
        %2610 = vmatprep.subr.mxu0 0.0
        %2611 = vmatpush1.msra.mxu0 0.0
        %2612 = vmatprep.subr.mxu0 0.0
        %2613 = vmatpush1.msra.mxu0 0.0
        %2614 = vmatprep.subr.mxu0 0.0
        %2615 = vmatpush1.msra.mxu0 0.0
        %2616 = vmatprep.subr.mxu0 0.0
        %2617 = vmatpush1.msra.mxu0 0.0
        %2618 = vmatprep.subr.mxu0 0.0
        %2619 = vmatpush1.msra.mxu0 0.0
        %2620 = vmatprep.subr.mxu0 0.0
        %2621 = vmatpush1.msra.mxu0 0.0
        %2622 = vmatprep.subr.mxu0 0.0
        %2623 = vmatpush1.msra.mxu0 0.0
        %2624 = vmatprep.subr.mxu0 0.0
        %2625 = vmatpush1.msra.mxu0 0.0
        %2626 = vmatprep.subr.mxu0 0.0
        %2627 = vmatpush1.msra.mxu0 0.0
        %2628 = vmatprep.mubr.f32.mxu0 0.0
        %2629 = vmatmul.mubr.f32.gmra.mrb[0].mxu0 %v2562
        %v2630 = vpop.f32.mrb[0].mxu0
        %v2631 = vadd.f32 0.0, %v2630
        %v2632 = vpop.f32.mrb[0].mxu0
        %2633 = vdwg.mxu0
        %v2634 = vadd.f32 %v2552, %v2631
        %v2635 = vld [vmem:[#allocation3 + $0x20] sm:$0xff]
        %s2636 = scalar_lea.vmem [#allocation4], 96
        %v2637 = vld [vmem:[%s2636] sm:$0xff]
        %v2638 = vld [vmem:[%s2636 + $0x8] sm:$0xff]
        %v2639 = vld [vmem:[%s2636 + $0x10] sm:$0xff]
        %v2640 = vld [vmem:[%s2636 + $0x18] sm:$0xff]
        %v2642 = vsel %vm343, %v2635, 0
        %2644 = vmatprep.subr.mxu0 0.0
        %2645 = vmatpush1.msra.mxu0 %v2637
        %2646 = vmatprep.subr.mxu0 0.0
        %2647 = vmatpush1.msra.mxu0 %v2638
        %2648 = vmatprep.subr.mxu0 0.0
        %2649 = vmatpush1.msra.mxu0 %v2639
        %2650 = vmatprep.subr.mxu0 0.0
        %2651 = vmatpush1.msra.mxu0 %v2640
        %2652 = vmatprep.subr.mxu0 0.0
        %2653 = vmatpush1.msra.mxu0 0.0
        %2654 = vmatprep.subr.mxu0 0.0
        %2655 = vmatpush1.msra.mxu0 0.0
        %2656 = vmatprep.subr.mxu0 0.0
        %2657 = vmatpush1.msra.mxu0 0.0
        %2658 = vmatprep.subr.mxu0 0.0
        %2659 = vmatpush1.msra.mxu0 0.0
        %2660 = vmatprep.subr.mxu0 0.0
        %2661 = vmatpush1.msra.mxu0 0.0
        %2662 = vmatprep.subr.mxu0 0.0
        %2663 = vmatpush1.msra.mxu0 0.0
        %2664 = vmatprep.subr.mxu0 0.0
        %2665 = vmatpush1.msra.mxu0 0.0
        %2666 = vmatprep.subr.mxu0 0.0
        %2667 = vmatpush1.msra.mxu0 0.0
        %2668 = vmatprep.subr.mxu0 0.0
        %2669 = vmatpush1.msra.mxu0 0.0
        %2670 = vmatprep.subr.mxu0 0.0
        %2671 = vmatpush1.msra.mxu0 0.0
        %2672 = vmatprep.subr.mxu0 0.0
        %2673 = vmatpush1.msra.mxu0 0.0
        %2674 = vmatprep.subr.mxu0 0.0
        %2675 = vmatpush1.msra.mxu0 0.0
        %2676 = vmatprep.subr.mxu0 0.0
        %2677 = vmatpush1.msra.mxu0 0.0
        %2678 = vmatprep.subr.mxu0 0.0
        %2679 = vmatpush1.msra.mxu0 0.0
        %2680 = vmatprep.subr.mxu0 0.0
        %2681 = vmatpush1.msra.mxu0 0.0
        %2682 = vmatprep.subr.mxu0 0.0
        %2683 = vmatpush1.msra.mxu0 0.0
        %2684 = vmatprep.subr.mxu0 0.0
        %2685 = vmatpush1.msra.mxu0 0.0
        %2686 = vmatprep.subr.mxu0 0.0
        %2687 = vmatpush1.msra.mxu0 0.0
        %2688 = vmatprep.subr.mxu0 0.0
        %2689 = vmatpush1.msra.mxu0 0.0
        %2690 = vmatprep.subr.mxu0 0.0
        %2691 = vmatpush1.msra.mxu0 0.0
        %2692 = vmatprep.subr.mxu0 0.0
        %2693 = vmatpush1.msra.mxu0 0.0
        %2694 = vmatprep.subr.mxu0 0.0
        %2695 = vmatpush1.msra.mxu0 0.0
        %2696 = vmatprep.subr.mxu0 0.0
        %2697 = vmatpush1.msra.mxu0 0.0
        %2698 = vmatprep.subr.mxu0 0.0
        %2699 = vmatpush1.msra.mxu0 0.0
        %2700 = vmatprep.subr.mxu0 0.0
        %2701 = vmatpush1.msra.mxu0 0.0
        %2702 = vmatprep.subr.mxu0 0.0
        %2703 = vmatpush1.msra.mxu0 0.0
        %2704 = vmatprep.subr.mxu0 0.0
        %2705 = vmatpush1.msra.mxu0 0.0
        %2706 = vmatprep.subr.mxu0 0.0
        %2707 = vmatpush1.msra.mxu0 0.0
        %2708 = vmatprep.mubr.f32.mxu0 0.0
        %2709 = vmatmul.mubr.f32.gmra.mrb[0].mxu0 %v2642
        %v2710 = vpop.f32.mrb[0].mxu0
        %v2711 = vadd.f32 0.0, %v2710
        %v2712 = vpop.f32.mrb[0].mxu0
        %2713 = vdwg.mxu0
        %v2714 = vadd.f32 %v2634, %v2711
        %v2715 = vld [vmem:[#allocation3 + $0x28] sm:$0xff]
        %s2716 = scalar_lea.vmem [#allocation4], 128
        %v2717 = vld [vmem:[%s2716] sm:$0xff]
        %v2718 = vld [vmem:[%s2716 + $0x8] sm:$0xff]
        %v2719 = vld [vmem:[%s2716 + $0x10] sm:$0xff]
        %v2720 = vld [vmem:[%s2716 + $0x18] sm:$0xff]
        %v2722 = vsel %vm343, %v2715, 0
        %2724 = vmatprep.subr.mxu0 0.0
        %2725 = vmatpush1.msra.mxu0 %v2717
        %2726 = vmatprep.subr.mxu0 0.0
        %2727 = vmatpush1.msra.mxu0 %v2718
        %2728 = vmatprep.subr.mxu0 0.0
        %2729 = vmatpush1.msra.mxu0 %v2719
        %2730 = vmatprep.subr.mxu0 0.0
        %2731 = vmatpush1.msra.mxu0 %v2720
        %2732 = vmatprep.subr.mxu0 0.0
        %2733 = vmatpush1.msra.mxu0 0.0
        %2734 = vmatprep.subr.mxu0 0.0
        %2735 = vmatpush1.msra.mxu0 0.0
        %2736 = vmatprep.subr.mxu0 0.0
        %2737 = vmatpush1.msra.mxu0 0.0
        %2738 = vmatprep.subr.mxu0 0.0
        %2739 = vmatpush1.msra.mxu0 0.0
        %2740 = vmatprep.subr.mxu0 0.0
        %2741 = vmatpush1.msra.mxu0 0.0
        %2742 = vmatprep.subr.mxu0 0.0
        %2743 = vmatpush1.msra.mxu0 0.0
        %2744 = vmatprep.subr.mxu0 0.0
        %2745 = vmatpush1.msra.mxu0 0.0
        %2746 = vmatprep.subr.mxu0 0.0
        %2747 = vmatpush1.msra.mxu0 0.0
        %2748 = vmatprep.subr.mxu0 0.0
        %2749 = vmatpush1.msra.mxu0 0.0
        %2750 = vmatprep.subr.mxu0 0.0
        %2751 = vmatpush1.msra.mxu0 0.0
        %2752 = vmatprep.subr.mxu0 0.0
        %2753 = vmatpush1.msra.mxu0 0.0
        %2754 = vmatprep.subr.mxu0 0.0
        %2755 = vmatpush1.msra.mxu0 0.0
        %2756 = vmatprep.subr.mxu0 0.0
        %2757 = vmatpush1.msra.mxu0 0.0
        %2758 = vmatprep.subr.mxu0 0.0
        %2759 = vmatpush1.msra.mxu0 0.0
        %2760 = vmatprep.subr.mxu0 0.0
        %2761 = vmatpush1.msra.mxu0 0.0
        %2762 = vmatprep.subr.mxu0 0.0
        %2763 = vmatpush1.msra.mxu0 0.0
        %2764 = vmatprep.subr.mxu0 0.0
        %2765 = vmatpush1.msra.mxu0 0.0
        %2766 = vmatprep.subr.mxu0 0.0
        %2767 = vmatpush1.msra.mxu0 0.0
        %2768 = vmatprep.subr.mxu0 0.0
        %2769 = vmatpush1.msra.mxu0 0.0
        %2770 = vmatprep.subr.mxu0 0.0
        %2771 = vmatpush1.msra.mxu0 0.0
        %2772 = vmatprep.subr.mxu0 0.0
        %2773 = vmatpush1.msra.mxu0 0.0
        %2774 = vmatprep.subr.mxu0 0.0
        %2775 = vmatpush1.msra.mxu0 0.0
        %2776 = vmatprep.subr.mxu0 0.0
        %2777 = vmatpush1.msra.mxu0 0.0
        %2778 = vmatprep.subr.mxu0 0.0
        %2779 = vmatpush1.msra.mxu0 0.0
        %2780 = vmatprep.subr.mxu0 0.0
        %2781 = vmatpush1.msra.mxu0 0.0
        %2782 = vmatprep.subr.mxu0 0.0
        %2783 = vmatpush1.msra.mxu0 0.0
        %2784 = vmatprep.subr.mxu0 0.0
        %2785 = vmatpush1.msra.mxu0 0.0
        %2786 = vmatprep.subr.mxu0 0.0
        %2787 = vmatpush1.msra.mxu0 0.0
        %2788 = vmatprep.mubr.f32.mxu0 0.0
        %2789 = vmatmul.mubr.f32.gmra.mrb[0].mxu0 %v2722
        %v2790 = vpop.f32.mrb[0].mxu0
        %v2791 = vadd.f32 0.0, %v2790
        %v2792 = vpop.f32.mrb[0].mxu0
        %2793 = vdwg.mxu0
        %v2794 = vadd.f32 %v2714, %v2791
        %v2795 = vld [vmem:[#allocation3 + $0x30] sm:$0xff]
        %s2796 = scalar_lea.vmem [#allocation4], 160
        %v2797 = vld [vmem:[%s2796] sm:$0xff]
        %v2798 = vld [vmem:[%s2796 + $0x8] sm:$0xff]
        %v2799 = vld [vmem:[%s2796 + $0x10] sm:$0xff]
        %v2800 = vld [vmem:[%s2796 + $0x18] sm:$0xff]
        %v2802 = vsel %vm343, %v2795, 0
        %2804 = vmatprep.subr.mxu0 0.0
        %2805 = vmatpush1.msra.mxu0 %v2797
        %2806 = vmatprep.subr.mxu0 0.0
        %2807 = vmatpush1.msra.mxu0 %v2798
        %2808 = vmatprep.subr.mxu0 0.0
        %2809 = vmatpush1.msra.mxu0 %v2799
        %2810 = vmatprep.subr.mxu0 0.0
        %2811 = vmatpush1.msra.mxu0 %v2800
        %2812 = vmatprep.subr.mxu0 0.0
        %2813 = vmatpush1.msra.mxu0 0.0
        %2814 = vmatprep.subr.mxu0 0.0
        %2815 = vmatpush1.msra.mxu0 0.0
        %2816 = vmatprep.subr.mxu0 0.0
        %2817 = vmatpush1.msra.mxu0 0.0
        %2818 = vmatprep.subr.mxu0 0.0
        %2819 = vmatpush1.msra.mxu0 0.0
        %2820 = vmatprep.subr.mxu0 0.0
        %2821 = vmatpush1.msra.mxu0 0.0
        %2822 = vmatprep.subr.mxu0 0.0
        %2823 = vmatpush1.msra.mxu0 0.0
        %2824 = vmatprep.subr.mxu0 0.0
        %2825 = vmatpush1.msra.mxu0 0.0
        %2826 = vmatprep.subr.mxu0 0.0
        %2827 = vmatpush1.msra.mxu0 0.0
        %2828 = vmatprep.subr.mxu0 0.0
        %2829 = vmatpush1.msra.mxu0 0.0
        %2830 = vmatprep.subr.mxu0 0.0
        %2831 = vmatpush1.msra.mxu0 0.0
        %2832 = vmatprep.subr.mxu0 0.0
        %2833 = vmatpush1.msra.mxu0 0.0
        %2834 = vmatprep.subr.mxu0 0.0
        %2835 = vmatpush1.msra.mxu0 0.0
        %2836 = vmatprep.subr.mxu0 0.0
        %2837 = vmatpush1.msra.mxu0 0.0
        %2838 = vmatprep.subr.mxu0 0.0
        %2839 = vmatpush1.msra.mxu0 0.0
        %2840 = vmatprep.subr.mxu0 0.0
        %2841 = vmatpush1.msra.mxu0 0.0
        %2842 = vmatprep.subr.mxu0 0.0
        %2843 = vmatpush1.msra.mxu0 0.0
        %2844 = vmatprep.subr.mxu0 0.0
        %2845 = vmatpush1.msra.mxu0 0.0
        %2846 = vmatprep.subr.mxu0 0.0
        %2847 = vmatpush1.msra.mxu0 0.0
        %2848 = vmatprep.subr.mxu0 0.0
        %2849 = vmatpush1.msra.mxu0 0.0
        %2850 = vmatprep.subr.mxu0 0.0
        %2851 = vmatpush1.msra.mxu0 0.0
        %2852 = vmatprep.subr.mxu0 0.0
        %2853 = vmatpush1.msra.mxu0 0.0
        %2854 = vmatprep.subr.mxu0 0.0
        %2855 = vmatpush1.msra.mxu0 0.0
        %2856 = vmatprep.subr.mxu0 0.0
        %2857 = vmatpush1.msra.mxu0 0.0
        %2858 = vmatprep.subr.mxu0 0.0
        %2859 = vmatpush1.msra.mxu0 0.0
        %2860 = vmatprep.subr.mxu0 0.0
        %2861 = vmatpush1.msra.mxu0 0.0
        %2862 = vmatprep.subr.mxu0 0.0
        %2863 = vmatpush1.msra.mxu0 0.0
        %2864 = vmatprep.subr.mxu0 0.0
        %2865 = vmatpush1.msra.mxu0 0.0
        %2866 = vmatprep.subr.mxu0 0.0
        %2867 = vmatpush1.msra.mxu0 0.0
        %2868 = vmatprep.mubr.f32.mxu0 0.0
        %2869 = vmatmul.mubr.f32.gmra.mrb[0].mxu0 %v2802
        %v2870 = vpop.f32.mrb[0].mxu0
        %v2871 = vadd.f32 0.0, %v2870
        %v2872 = vpop.f32.mrb[0].mxu0
        %2873 = vdwg.mxu0
        %v2874 = vadd.f32 %v2794, %v2871
        %v2875 = vld [vmem:[#allocation3 + $0x38] sm:$0xff]
        %s2876 = scalar_lea.vmem [#allocation4], 192
        %v2877 = vld [vmem:[%s2876] sm:$0xff]
        %v2878 = vld [vmem:[%s2876 + $0x8] sm:$0xff]
        %v2879 = vld [vmem:[%s2876 + $0x10] sm:$0xff]
        %v2880 = vld [vmem:[%s2876 + $0x18] sm:$0xff]
        %v2882 = vsel %vm343, %v2875, 0
        %2884 = vmatprep.subr.mxu0 0.0
        %2885 = vmatpush1.msra.mxu0 %v2877
        %2886 = vmatprep.subr.mxu0 0.0
        %2887 = vmatpush1.msra.mxu0 %v2878
        %2888 = vmatprep.subr.mxu0 0.0
        %2889 = vmatpush1.msra.mxu0 %v2879
        %2890 = vmatprep.subr.mxu0 0.0
        %2891 = vmatpush1.msra.mxu0 %v2880
        %2892 = vmatprep.subr.mxu0 0.0
        %2893 = vmatpush1.msra.mxu0 0.0
        %2894 = vmatprep.subr.mxu0 0.0
        %2895 = vmatpush1.msra.mxu0 0.0
        %2896 = vmatprep.subr.mxu0 0.0
        %2897 = vmatpush1.msra.mxu0 0.0
        %2898 = vmatprep.subr.mxu0 0.0
        %2899 = vmatpush1.msra.mxu0 0.0
        %2900 = vmatprep.subr.mxu0 0.0
        %2901 = vmatpush1.msra.mxu0 0.0
        %2902 = vmatprep.subr.mxu0 0.0
        %2903 = vmatpush1.msra.mxu0 0.0
        %2904 = vmatprep.subr.mxu0 0.0
        %2905 = vmatpush1.msra.mxu0 0.0
        %2906 = vmatprep.subr.mxu0 0.0
        %2907 = vmatpush1.msra.mxu0 0.0
        %2908 = vmatprep.subr.mxu0 0.0
        %2909 = vmatpush1.msra.mxu0 0.0
        %2910 = vmatprep.subr.mxu0 0.0
        %2911 = vmatpush1.msra.mxu0 0.0
        %2912 = vmatprep.subr.mxu0 0.0
        %2913 = vmatpush1.msra.mxu0 0.0
        %2914 = vmatprep.subr.mxu0 0.0
        %2915 = vmatpush1.msra.mxu0 0.0
        %2916 = vmatprep.subr.mxu0 0.0
        %2917 = vmatpush1.msra.mxu0 0.0
        %2918 = vmatprep.subr.mxu0 0.0
        %2919 = vmatpush1.msra.mxu0 0.0
        %2920 = vmatprep.subr.mxu0 0.0
        %2921 = vmatpush1.msra.mxu0 0.0
        %2922 = vmatprep.subr.mxu0 0.0
        %2923 = vmatpush1.msra.mxu0 0.0
        %2924 = vmatprep.subr.mxu0 0.0
        %2925 = vmatpush1.msra.mxu0 0.0
        %2926 = vmatprep.subr.mxu0 0.0
        %2927 = vmatpush1.msra.mxu0 0.0
        %2928 = vmatprep.subr.mxu0 0.0
        %2929 = vmatpush1.msra.mxu0 0.0
        %2930 = vmatprep.subr.mxu0 0.0
        %2931 = vmatpush1.msra.mxu0 0.0
        %2932 = vmatprep.subr.mxu0 0.0
        %2933 = vmatpush1.msra.mxu0 0.0
        %2934 = vmatprep.subr.mxu0 0.0
        %2935 = vmatpush1.msra.mxu0 0.0
        %2936 = vmatprep.subr.mxu0 0.0
        %2937 = vmatpush1.msra.mxu0 0.0
        %2938 = vmatprep.subr.mxu0 0.0
        %2939 = vmatpush1.msra.mxu0 0.0
        %2940 = vmatprep.subr.mxu0 0.0
        %2941 = vmatpush1.msra.mxu0 0.0
        %2942 = vmatprep.subr.mxu0 0.0
        %2943 = vmatpush1.msra.mxu0 0.0
        %2944 = vmatprep.subr.mxu0 0.0
        %2945 = vmatpush1.msra.mxu0 0.0
        %2946 = vmatprep.subr.mxu0 0.0
        %2947 = vmatpush1.msra.mxu0 0.0
        %2948 = vmatprep.mubr.f32.mxu0 0.0
        %2949 = vmatmul.mubr.f32.gmra.mrb[0].mxu0 %v2882
        %v2950 = vpop.f32.mrb[0].mxu0
        %v2951 = vadd.f32 0.0, %v2950
        %v2952 = vpop.f32.mrb[0].mxu0
        %2953 = vdwg.mxu0
        %v2954 = vadd.f32 %v2874, %v2951
        %v2955 = vld [vmem:[#allocation3 + $0x40] sm:$0xff]
        %s2956 = scalar_lea.vmem [#allocation4], 224
        %v2957 = vld [vmem:[%s2956] sm:$0xff]
        %v2958 = vld [vmem:[%s2956 + $0x8] sm:$0xff]
        %v2959 = vld [vmem:[%s2956 + $0x10] sm:$0xff]
        %v2960 = vld [vmem:[%s2956 + $0x18] sm:$0xff]
        %v2962 = vsel %vm343, %v2955, 0
        %2964 = vmatprep.subr.mxu0 0.0
        %2965 = vmatpush1.msra.mxu0 %v2957
        %2966 = vmatprep.subr.mxu0 0.0
        %2967 = vmatpush1.msra.mxu0 %v2958
        %2968 = vmatprep.subr.mxu0 0.0
        %2969 = vmatpush1.msra.mxu0 %v2959
        %2970 = vmatprep.subr.mxu0 0.0
        %2971 = vmatpush1.msra.mxu0 %v2960
        %2972 = vmatprep.subr.mxu0 0.0
        %2973 = vmatpush1.msra.mxu0 0.0
        %2974 = vmatprep.subr.mxu0 0.0
        %2975 = vmatpush1.msra.mxu0 0.0
        %2976 = vmatprep.subr.mxu0 0.0
        %2977 = vmatpush1.msra.mxu0 0.0
        %2978 = vmatprep.subr.mxu0 0.0
        %2979 = vmatpush1.msra.mxu0 0.0
        %2980 = vmatprep.subr.mxu0 0.0
        %2981 = vmatpush1.msra.mxu0 0.0
        %2982 = vmatprep.subr.mxu0 0.0
        %2983 = vmatpush1.msra.mxu0 0.0
        %2984 = vmatprep.subr.mxu0 0.0
        %2985 = vmatpush1.msra.mxu0 0.0
        %2986 = vmatprep.subr.mxu0 0.0
        %2987 = vmatpush1.msra.mxu0 0.0
        %2988 = vmatprep.subr.mxu0 0.0
        %2989 = vmatpush1.msra.mxu0 0.0
        %2990 = vmatprep.subr.mxu0 0.0
        %2991 = vmatpush1.msra.mxu0 0.0
        %2992 = vmatprep.subr.mxu0 0.0
        %2993 = vmatpush1.msra.mxu0 0.0
        %2994 = vmatprep.subr.mxu0 0.0
        %2995 = vmatpush1.msra.mxu0 0.0
        %2996 = vmatprep.subr.mxu0 0.0
        %2997 = vmatpush1.msra.mxu0 0.0
        %2998 = vmatprep.subr.mxu0 0.0
        %2999 = vmatpush1.msra.mxu0 0.0
        %3000 = vmatprep.subr.mxu0 0.0
        %3001 = vmatpush1.msra.mxu0 0.0
        %3002 = vmatprep.subr.mxu0 0.0
        %3003 = vmatpush1.msra.mxu0 0.0
        %3004 = vmatprep.subr.mxu0 0.0
        %3005 = vmatpush1.msra.mxu0 0.0
        %3006 = vmatprep.subr.mxu0 0.0
        %3007 = vmatpush1.msra.mxu0 0.0
        %3008 = vmatprep.subr.mxu0 0.0
        %3009 = vmatpush1.msra.mxu0 0.0
        %3010 = vmatprep.subr.mxu0 0.0
        %3011 = vmatpush1.msra.mxu0 0.0
        %3012 = vmatprep.subr.mxu0 0.0
        %3013 = vmatpush1.msra.mxu0 0.0
        %3014 = vmatprep.subr.mxu0 0.0
        %3015 = vmatpush1.msra.mxu0 0.0
        %3016 = vmatprep.subr.mxu0 0.0
        %3017 = vmatpush1.msra.mxu0 0.0
        %3018 = vmatprep.subr.mxu0 0.0
        %3019 = vmatpush1.msra.mxu0 0.0
        %3020 = vmatprep.subr.mxu0 0.0
        %3021 = vmatpush1.msra.mxu0 0.0
        %3022 = vmatprep.subr.mxu0 0.0
        %3023 = vmatpush1.msra.mxu0 0.0
        %3024 = vmatprep.subr.mxu0 0.0
        %3025 = vmatpush1.msra.mxu0 0.0
        %3026 = vmatprep.subr.mxu0 0.0
        %3027 = vmatpush1.msra.mxu0 0.0
        %3028 = vmatprep.mubr.f32.mxu0 0.0
        %3029 = vmatmul.mubr.f32.gmra.mrb[0].mxu0 %v2962
        %v3030 = vpop.f32.mrb[0].mxu0
        %v3031 = vadd.f32 0.0, %v3030
        %v3032 = vpop.f32.mrb[0].mxu0
        %3033 = vdwg.mxu0
        %v3034 = vadd.f32 %v2954, %v3031
        %v3035 = vld [vmem:[#allocation3 + $0x48] sm:$0xff]
        %s3036 = scalar_lea.vmem [#allocation4], 256
        %v3037 = vld [vmem:[%s3036] sm:$0xff]
        %v3038 = vld [vmem:[%s3036 + $0x8] sm:$0xff]
        %v3039 = vld [vmem:[%s3036 + $0x10] sm:$0xff]
        %v3040 = vld [vmem:[%s3036 + $0x18] sm:$0xff]
        %v3042 = vsel %vm343, %v3035, 0
        %3044 = vmatprep.subr.mxu0 0.0
        %3045 = vmatpush1.msra.mxu0 %v3037
        %3046 = vmatprep.subr.mxu0 0.0
        %3047 = vmatpush1.msra.mxu0 %v3038
        %3048 = vmatprep.subr.mxu0 0.0
        %3049 = vmatpush1.msra.mxu0 %v3039
        %3050 = vmatprep.subr.mxu0 0.0
        %3051 = vmatpush1.msra.mxu0 %v3040
        %3052 = vmatprep.subr.mxu0 0.0
        %3053 = vmatpush1.msra.mxu0 0.0
        %3054 = vmatprep.subr.mxu0 0.0
        %3055 = vmatpush1.msra.mxu0 0.0
        %3056 = vmatprep.subr.mxu0 0.0
        %3057 = vmatpush1.msra.mxu0 0.0
        %3058 = vmatprep.subr.mxu0 0.0
        %3059 = vmatpush1.msra.mxu0 0.0
        %3060 = vmatprep.subr.mxu0 0.0
        %3061 = vmatpush1.msra.mxu0 0.0
        %3062 = vmatprep.subr.mxu0 0.0
        %3063 = vmatpush1.msra.mxu0 0.0
        %3064 = vmatprep.subr.mxu0 0.0
        %3065 = vmatpush1.msra.mxu0 0.0
        %3066 = vmatprep.subr.mxu0 0.0
        %3067 = vmatpush1.msra.mxu0 0.0
        %3068 = vmatprep.subr.mxu0 0.0
        %3069 = vmatpush1.msra.mxu0 0.0
        %3070 = vmatprep.subr.mxu0 0.0
        %3071 = vmatpush1.msra.mxu0 0.0
        %3072 = vmatprep.subr.mxu0 0.0
        %3073 = vmatpush1.msra.mxu0 0.0
        %3074 = vmatprep.subr.mxu0 0.0
        %3075 = vmatpush1.msra.mxu0 0.0
        %3076 = vmatprep.subr.mxu0 0.0
        %3077 = vmatpush1.msra.mxu0 0.0
        %3078 = vmatprep.subr.mxu0 0.0
        %3079 = vmatpush1.msra.mxu0 0.0
        %3080 = vmatprep.subr.mxu0 0.0
        %3081 = vmatpush1.msra.mxu0 0.0
        %3082 = vmatprep.subr.mxu0 0.0
        %3083 = vmatpush1.msra.mxu0 0.0
        %3084 = vmatprep.subr.mxu0 0.0
        %3085 = vmatpush1.msra.mxu0 0.0
        %3086 = vmatprep.subr.mxu0 0.0
        %3087 = vmatpush1.msra.mxu0 0.0
        %3088 = vmatprep.subr.mxu0 0.0
        %3089 = vmatpush1.msra.mxu0 0.0
        %3090 = vmatprep.subr.mxu0 0.0
        %3091 = vmatpush1.msra.mxu0 0.0
        %3092 = vmatprep.subr.mxu0 0.0
        %3093 = vmatpush1.msra.mxu0 0.0
        %3094 = vmatprep.subr.mxu0 0.0
        %3095 = vmatpush1.msra.mxu0 0.0
        %3096 = vmatprep.subr.mxu0 0.0
        %3097 = vmatpush1.msra.mxu0 0.0
        %3098 = vmatprep.subr.mxu0 0.0
        %3099 = vmatpush1.msra.mxu0 0.0
        %3100 = vmatprep.subr.mxu0 0.0
        %3101 = vmatpush1.msra.mxu0 0.0
        %3102 = vmatprep.subr.mxu0 0.0
        %3103 = vmatpush1.msra.mxu0 0.0
        %3104 = vmatprep.subr.mxu0 0.0
        %3105 = vmatpush1.msra.mxu0 0.0
        %3106 = vmatprep.subr.mxu0 0.0
        %3107 = vmatpush1.msra.mxu0 0.0
        %3108 = vmatprep.mubr.f32.mxu0 0.0
        %3109 = vmatmul.mubr.f32.gmra.mrb[0].mxu0 %v3042
        %v3110 = vpop.f32.mrb[0].mxu0
        %v3111 = vadd.f32 0.0, %v3110
        %v3112 = vpop.f32.mrb[0].mxu0
        %3113 = vdwg.mxu0
        %v3114 = vadd.f32 %v3034, %v3111
        %v3115 = vld [vmem:[#allocation3 + $0x50] sm:$0xff]
        %s3116 = scalar_lea.vmem [#allocation4], 288
        %v3117 = vld [vmem:[%s3116] sm:$0xff]
        %v3118 = vld [vmem:[%s3116 + $0x8] sm:$0xff]
        %v3119 = vld [vmem:[%s3116 + $0x10] sm:$0xff]
        %v3120 = vld [vmem:[%s3116 + $0x18] sm:$0xff]
        %v3122 = vsel %vm343, %v3115, 0
        %3124 = vmatprep.subr.mxu0 0.0
        %3125 = vmatpush1.msra.mxu0 %v3117
        %3126 = vmatprep.subr.mxu0 0.0
        %3127 = vmatpush1.msra.mxu0 %v3118
        %3128 = vmatprep.subr.mxu0 0.0
        %3129 = vmatpush1.msra.mxu0 %v3119
        %3130 = vmatprep.subr.mxu0 0.0
        %3131 = vmatpush1.msra.mxu0 %v3120
        %3132 = vmatprep.subr.mxu0 0.0
        %3133 = vmatpush1.msra.mxu0 0.0
        %3134 = vmatprep.subr.mxu0 0.0
        %3135 = vmatpush1.msra.mxu0 0.0
        %3136 = vmatprep.subr.mxu0 0.0
        %3137 = vmatpush1.msra.mxu0 0.0
        %3138 = vmatprep.subr.mxu0 0.0
        %3139 = vmatpush1.msra.mxu0 0.0
        %3140 = vmatprep.subr.mxu0 0.0
        %3141 = vmatpush1.msra.mxu0 0.0
        %3142 = vmatprep.subr.mxu0 0.0
        %3143 = vmatpush1.msra.mxu0 0.0
        %3144 = vmatprep.subr.mxu0 0.0
        %3145 = vmatpush1.msra.mxu0 0.0
        %3146 = vmatprep.subr.mxu0 0.0
        %3147 = vmatpush1.msra.mxu0 0.0
        %3148 = vmatprep.subr.mxu0 0.0
        %3149 = vmatpush1.msra.mxu0 0.0
        %3150 = vmatprep.subr.mxu0 0.0
        %3151 = vmatpush1.msra.mxu0 0.0
        %3152 = vmatprep.subr.mxu0 0.0
        %3153 = vmatpush1.msra.mxu0 0.0
        %3154 = vmatprep.subr.mxu0 0.0
        %3155 = vmatpush1.msra.mxu0 0.0
        %3156 = vmatprep.subr.mxu0 0.0
        %3157 = vmatpush1.msra.mxu0 0.0
        %3158 = vmatprep.subr.mxu0 0.0
        %3159 = vmatpush1.msra.mxu0 0.0
        %3160 = vmatprep.subr.mxu0 0.0
        %3161 = vmatpush1.msra.mxu0 0.0
        %3162 = vmatprep.subr.mxu0 0.0
        %3163 = vmatpush1.msra.mxu0 0.0
        %3164 = vmatprep.subr.mxu0 0.0
        %3165 = vmatpush1.msra.mxu0 0.0
        %3166 = vmatprep.subr.mxu0 0.0
        %3167 = vmatpush1.msra.mxu0 0.0
        %3168 = vmatprep.subr.mxu0 0.0
        %3169 = vmatpush1.msra.mxu0 0.0
        %3170 = vmatprep.subr.mxu0 0.0
        %3171 = vmatpush1.msra.mxu0 0.0
        %3172 = vmatprep.subr.mxu0 0.0
        %3173 = vmatpush1.msra.mxu0 0.0
        %3174 = vmatprep.subr.mxu0 0.0
        %3175 = vmatpush1.msra.mxu0 0.0
        %3176 = vmatprep.subr.mxu0 0.0
        %3177 = vmatpush1.msra.mxu0 0.0
        %3178 = vmatprep.subr.mxu0 0.0
        %3179 = vmatpush1.msra.mxu0 0.0
        %3180 = vmatprep.subr.mxu0 0.0
        %3181 = vmatpush1.msra.mxu0 0.0
        %3182 = vmatprep.subr.mxu0 0.0
        %3183 = vmatpush1.msra.mxu0 0.0
        %3184 = vmatprep.subr.mxu0 0.0
        %3185 = vmatpush1.msra.mxu0 0.0
        %3186 = vmatprep.subr.mxu0 0.0
        %3187 = vmatpush1.msra.mxu0 0.0
        %3188 = vmatprep.mubr.f32.mxu0 0.0
        %3189 = vmatmul.mubr.f32.gmra.mrb[0].mxu0 %v3122
        %v3190 = vpop.f32.mrb[0].mxu0
        %v3191 = vadd.f32 0.0, %v3190
        %v3192 = vpop.f32.mrb[0].mxu0
        %3193 = vdwg.mxu0
        %v3194 = vadd.f32 %v3114, %v3191
        %v3195 = vld [vmem:[#allocation3 + $0x58] sm:$0xff]
        %s3196 = scalar_lea.vmem [#allocation4], 320
        %v3197 = vld [vmem:[%s3196] sm:$0xff]
        %v3198 = vld [vmem:[%s3196 + $0x8] sm:$0xff]
        %v3199 = vld [vmem:[%s3196 + $0x10] sm:$0xff]
        %v3200 = vld [vmem:[%s3196 + $0x18] sm:$0xff]
        %v3202 = vsel %vm343, %v3195, 0
        %3204 = vmatprep.subr.mxu0 0.0
        %3205 = vmatpush1.msra.mxu0 %v3197
        %3206 = vmatprep.subr.mxu0 0.0
        %3207 = vmatpush1.msra.mxu0 %v3198
        %3208 = vmatprep.subr.mxu0 0.0
        %3209 = vmatpush1.msra.mxu0 %v3199
        %3210 = vmatprep.subr.mxu0 0.0
        %3211 = vmatpush1.msra.mxu0 %v3200
        %3212 = vmatprep.subr.mxu0 0.0
        %3213 = vmatpush1.msra.mxu0 0.0
        %3214 = vmatprep.subr.mxu0 0.0
        %3215 = vmatpush1.msra.mxu0 0.0
        %3216 = vmatprep.subr.mxu0 0.0
        %3217 = vmatpush1.msra.mxu0 0.0
        %3218 = vmatprep.subr.mxu0 0.0
        %3219 = vmatpush1.msra.mxu0 0.0
        %3220 = vmatprep.subr.mxu0 0.0
        %3221 = vmatpush1.msra.mxu0 0.0
        %3222 = vmatprep.subr.mxu0 0.0
        %3223 = vmatpush1.msra.mxu0 0.0
        %3224 = vmatprep.subr.mxu0 0.0
        %3225 = vmatpush1.msra.mxu0 0.0
        %3226 = vmatprep.subr.mxu0 0.0
        %3227 = vmatpush1.msra.mxu0 0.0
        %3228 = vmatprep.subr.mxu0 0.0
        %3229 = vmatpush1.msra.mxu0 0.0
        %3230 = vmatprep.subr.mxu0 0.0
        %3231 = vmatpush1.msra.mxu0 0.0
        %3232 = vmatprep.subr.mxu0 0.0
        %3233 = vmatpush1.msra.mxu0 0.0
        %3234 = vmatprep.subr.mxu0 0.0
        %3235 = vmatpush1.msra.mxu0 0.0
        %3236 = vmatprep.subr.mxu0 0.0
        %3237 = vmatpush1.msra.mxu0 0.0
        %3238 = vmatprep.subr.mxu0 0.0
        %3239 = vmatpush1.msra.mxu0 0.0
        %3240 = vmatprep.subr.mxu0 0.0
        %3241 = vmatpush1.msra.mxu0 0.0
        %3242 = vmatprep.subr.mxu0 0.0
        %3243 = vmatpush1.msra.mxu0 0.0
        %3244 = vmatprep.subr.mxu0 0.0
        %3245 = vmatpush1.msra.mxu0 0.0
        %3246 = vmatprep.subr.mxu0 0.0
        %3247 = vmatpush1.msra.mxu0 0.0
        %3248 = vmatprep.subr.mxu0 0.0
        %3249 = vmatpush1.msra.mxu0 0.0
        %3250 = vmatprep.subr.mxu0 0.0
        %3251 = vmatpush1.msra.mxu0 0.0
        %3252 = vmatprep.subr.mxu0 0.0
        %3253 = vmatpush1.msra.mxu0 0.0
        %3254 = vmatprep.subr.mxu0 0.0
        %3255 = vmatpush1.msra.mxu0 0.0
        %3256 = vmatprep.subr.mxu0 0.0
        %3257 = vmatpush1.msra.mxu0 0.0
        %3258 = vmatprep.subr.mxu0 0.0
        %3259 = vmatpush1.msra.mxu0 0.0
        %3260 = vmatprep.subr.mxu0 0.0
        %3261 = vmatpush1.msra.mxu0 0.0
        %3262 = vmatprep.subr.mxu0 0.0
        %3263 = vmatpush1.msra.mxu0 0.0
        %3264 = vmatprep.subr.mxu0 0.0
        %3265 = vmatpush1.msra.mxu0 0.0
        %3266 = vmatprep.subr.mxu0 0.0
        %3267 = vmatpush1.msra.mxu0 0.0
        %3268 = vmatprep.mubr.f32.mxu0 0.0
        %3269 = vmatmul.mubr.f32.gmra.mrb[0].mxu0 %v3202
        %v3270 = vpop.f32.mrb[0].mxu0
        %v3271 = vadd.f32 0.0, %v3270
        %v3272 = vpop.f32.mrb[0].mxu0
        %3273 = vdwg.mxu0
        %v3274 = vadd.f32 %v3194, %v3271
        %v3275 = vld [vmem:[#allocation3 + $0x60] sm:$0xff]
        %s3276 = scalar_lea.vmem [#allocation4], 352
        %v3277 = vld [vmem:[%s3276] sm:$0xff]
        %v3278 = vld [vmem:[%s3276 + $0x8] sm:$0xff]
        %v3279 = vld [vmem:[%s3276 + $0x10] sm:$0xff]
        %v3280 = vld [vmem:[%s3276 + $0x18] sm:$0xff]
        %v3282 = vsel %vm343, %v3275, 0
        %3284 = vmatprep.subr.mxu0 0.0
        %3285 = vmatpush1.msra.mxu0 %v3277
        %3286 = vmatprep.subr.mxu0 0.0
        %3287 = vmatpush1.msra.mxu0 %v3278
        %3288 = vmatprep.subr.mxu0 0.0
        %3289 = vmatpush1.msra.mxu0 %v3279
        %3290 = vmatprep.subr.mxu0 0.0
        %3291 = vmatpush1.msra.mxu0 %v3280
        %3292 = vmatprep.subr.mxu0 0.0
        %3293 = vmatpush1.msra.mxu0 0.0
        %3294 = vmatprep.subr.mxu0 0.0
        %3295 = vmatpush1.msra.mxu0 0.0
        %3296 = vmatprep.subr.mxu0 0.0
        %3297 = vmatpush1.msra.mxu0 0.0
        %3298 = vmatprep.subr.mxu0 0.0
        %3299 = vmatpush1.msra.mxu0 0.0
        %3300 = vmatprep.subr.mxu0 0.0
        %3301 = vmatpush1.msra.mxu0 0.0
        %3302 = vmatprep.subr.mxu0 0.0
        %3303 = vmatpush1.msra.mxu0 0.0
        %3304 = vmatprep.subr.mxu0 0.0
        %3305 = vmatpush1.msra.mxu0 0.0
        %3306 = vmatprep.subr.mxu0 0.0
        %3307 = vmatpush1.msra.mxu0 0.0
        %3308 = vmatprep.subr.mxu0 0.0
        %3309 = vmatpush1.msra.mxu0 0.0
        %3310 = vmatprep.subr.mxu0 0.0
        %3311 = vmatpush1.msra.mxu0 0.0
        %3312 = vmatprep.subr.mxu0 0.0
        %3313 = vmatpush1.msra.mxu0 0.0
        %3314 = vmatprep.subr.mxu0 0.0
        %3315 = vmatpush1.msra.mxu0 0.0
        %3316 = vmatprep.subr.mxu0 0.0
        %3317 = vmatpush1.msra.mxu0 0.0
        %3318 = vmatprep.subr.mxu0 0.0
        %3319 = vmatpush1.msra.mxu0 0.0
        %3320 = vmatprep.subr.mxu0 0.0
        %3321 = vmatpush1.msra.mxu0 0.0
        %3322 = vmatprep.subr.mxu0 0.0
        %3323 = vmatpush1.msra.mxu0 0.0
        %3324 = vmatprep.subr.mxu0 0.0
        %3325 = vmatpush1.msra.mxu0 0.0
        %3326 = vmatprep.subr.mxu0 0.0
        %3327 = vmatpush1.msra.mxu0 0.0
        %3328 = vmatprep.subr.mxu0 0.0
        %3329 = vmatpush1.msra.mxu0 0.0
        %3330 = vmatprep.subr.mxu0 0.0
        %3331 = vmatpush1.msra.mxu0 0.0
        %3332 = vmatprep.subr.mxu0 0.0
        %3333 = vmatpush1.msra.mxu0 0.0
        %3334 = vmatprep.subr.mxu0 0.0
        %3335 = vmatpush1.msra.mxu0 0.0
        %3336 = vmatprep.subr.mxu0 0.0
        %3337 = vmatpush1.msra.mxu0 0.0
        %3338 = vmatprep.subr.mxu0 0.0
        %3339 = vmatpush1.msra.mxu0 0.0
        %3340 = vmatprep.subr.mxu0 0.0
        %3341 = vmatpush1.msra.mxu0 0.0
        %3342 = vmatprep.subr.mxu0 0.0
        %3343 = vmatpush1.msra.mxu0 0.0
        %3344 = vmatprep.subr.mxu0 0.0
        %3345 = vmatpush1.msra.mxu0 0.0
        %3346 = vmatprep.subr.mxu0 0.0
        %3347 = vmatpush1.msra.mxu0 0.0
        %3348 = vmatprep.mubr.f32.mxu0 0.0
        %3349 = vmatmul.mubr.f32.gmra.mrb[0].mxu0 %v3282
        %v3350 = vpop.f32.mrb[0].mxu0
        %v3351 = vadd.f32 0.0, %v3350
        %v3352 = vpop.f32.mrb[0].mxu0
        %3353 = vdwg.mxu0
        %v3354 = vadd.f32 %v3274, %v3351
        %v3355 = vld [vmem:[#allocation3 + $0x68] sm:$0xff]
        %s3356 = scalar_lea.vmem [#allocation4], 384
        %v3357 = vld [vmem:[%s3356] sm:$0xff]
        %v3358 = vld [vmem:[%s3356 + $0x8] sm:$0xff]
        %v3359 = vld [vmem:[%s3356 + $0x10] sm:$0xff]
        %v3360 = vld [vmem:[%s3356 + $0x18] sm:$0xff]
        %v3362 = vsel %vm343, %v3355, 0
        %3364 = vmatprep.subr.mxu0 0.0
        %3365 = vmatpush1.msra.mxu0 %v3357
        %3366 = vmatprep.subr.mxu0 0.0
        %3367 = vmatpush1.msra.mxu0 %v3358
        %3368 = vmatprep.subr.mxu0 0.0
        %3369 = vmatpush1.msra.mxu0 %v3359
        %3370 = vmatprep.subr.mxu0 0.0
        %3371 = vmatpush1.msra.mxu0 %v3360
        %3372 = vmatprep.subr.mxu0 0.0
        %3373 = vmatpush1.msra.mxu0 0.0
        %3374 = vmatprep.subr.mxu0 0.0
        %3375 = vmatpush1.msra.mxu0 0.0
        %3376 = vmatprep.subr.mxu0 0.0
        %3377 = vmatpush1.msra.mxu0 0.0
        %3378 = vmatprep.subr.mxu0 0.0
        %3379 = vmatpush1.msra.mxu0 0.0
        %3380 = vmatprep.subr.mxu0 0.0
        %3381 = vmatpush1.msra.mxu0 0.0
        %3382 = vmatprep.subr.mxu0 0.0
        %3383 = vmatpush1.msra.mxu0 0.0
        %3384 = vmatprep.subr.mxu0 0.0
        %3385 = vmatpush1.msra.mxu0 0.0
        %3386 = vmatprep.subr.mxu0 0.0
        %3387 = vmatpush1.msra.mxu0 0.0
        %3388 = vmatprep.subr.mxu0 0.0
        %3389 = vmatpush1.msra.mxu0 0.0
        %3390 = vmatprep.subr.mxu0 0.0
        %3391 = vmatpush1.msra.mxu0 0.0
        %3392 = vmatprep.subr.mxu0 0.0
        %3393 = vmatpush1.msra.mxu0 0.0
        %3394 = vmatprep.subr.mxu0 0.0
        %3395 = vmatpush1.msra.mxu0 0.0
        %3396 = vmatprep.subr.mxu0 0.0
        %3397 = vmatpush1.msra.mxu0 0.0
        %3398 = vmatprep.subr.mxu0 0.0
        %3399 = vmatpush1.msra.mxu0 0.0
        %3400 = vmatprep.subr.mxu0 0.0
        %3401 = vmatpush1.msra.mxu0 0.0
        %3402 = vmatprep.subr.mxu0 0.0
        %3403 = vmatpush1.msra.mxu0 0.0
        %3404 = vmatprep.subr.mxu0 0.0
        %3405 = vmatpush1.msra.mxu0 0.0
        %3406 = vmatprep.subr.mxu0 0.0
        %3407 = vmatpush1.msra.mxu0 0.0
        %3408 = vmatprep.subr.mxu0 0.0
        %3409 = vmatpush1.msra.mxu0 0.0
        %3410 = vmatprep.subr.mxu0 0.0
        %3411 = vmatpush1.msra.mxu0 0.0
        %3412 = vmatprep.subr.mxu0 0.0
        %3413 = vmatpush1.msra.mxu0 0.0
        %3414 = vmatprep.subr.mxu0 0.0
        %3415 = vmatpush1.msra.mxu0 0.0
        %3416 = vmatprep.subr.mxu0 0.0
        %3417 = vmatpush1.msra.mxu0 0.0
        %3418 = vmatprep.subr.mxu0 0.0
        %3419 = vmatpush1.msra.mxu0 0.0
        %3420 = vmatprep.subr.mxu0 0.0
        %3421 = vmatpush1.msra.mxu0 0.0
        %3422 = vmatprep.subr.mxu0 0.0
        %3423 = vmatpush1.msra.mxu0 0.0
        %3424 = vmatprep.subr.mxu0 0.0
        %3425 = vmatpush1.msra.mxu0 0.0
        %3426 = vmatprep.subr.mxu0 0.0
        %3427 = vmatpush1.msra.mxu0 0.0
        %3428 = vmatprep.mubr.f32.mxu0 0.0
        %3429 = vmatmul.mubr.f32.gmra.mrb[0].mxu0 %v3362
        %v3430 = vpop.f32.mrb[0].mxu0
        %v3431 = vadd.f32 0.0, %v3430
        %v3432 = vpop.f32.mrb[0].mxu0
        %3433 = vdwg.mxu0
        %v3434 = vadd.f32 %v3354, %v3431
        %v3435 = vld [vmem:[#allocation3 + $0x70] sm:$0xff]
        %s3436 = scalar_lea.vmem [#allocation4], 416
        %v3437 = vld [vmem:[%s3436] sm:$0xff]
        %v3438 = vld [vmem:[%s3436 + $0x8] sm:$0xff]
        %v3439 = vld [vmem:[%s3436 + $0x10] sm:$0xff]
        %v3440 = vld [vmem:[%s3436 + $0x18] sm:$0xff]
        %v3442 = vsel %vm343, %v3435, 0
        %3444 = vmatprep.subr.mxu0 0.0
        %3445 = vmatpush1.msra.mxu0 %v3437
        %3446 = vmatprep.subr.mxu0 0.0
        %3447 = vmatpush1.msra.mxu0 %v3438
        %3448 = vmatprep.subr.mxu0 0.0
        %3449 = vmatpush1.msra.mxu0 %v3439
        %3450 = vmatprep.subr.mxu0 0.0
        %3451 = vmatpush1.msra.mxu0 %v3440
        %3452 = vmatprep.subr.mxu0 0.0
        %3453 = vmatpush1.msra.mxu0 0.0
        %3454 = vmatprep.subr.mxu0 0.0
        %3455 = vmatpush1.msra.mxu0 0.0
        %3456 = vmatprep.subr.mxu0 0.0
        %3457 = vmatpush1.msra.mxu0 0.0
        %3458 = vmatprep.subr.mxu0 0.0
        %3459 = vmatpush1.msra.mxu0 0.0
        %3460 = vmatprep.subr.mxu0 0.0
        %3461 = vmatpush1.msra.mxu0 0.0
        %3462 = vmatprep.subr.mxu0 0.0
        %3463 = vmatpush1.msra.mxu0 0.0
        %3464 = vmatprep.subr.mxu0 0.0
        %3465 = vmatpush1.msra.mxu0 0.0
        %3466 = vmatprep.subr.mxu0 0.0
        %3467 = vmatpush1.msra.mxu0 0.0
        %3468 = vmatprep.subr.mxu0 0.0
        %3469 = vmatpush1.msra.mxu0 0.0
        %3470 = vmatprep.subr.mxu0 0.0
        %3471 = vmatpush1.msra.mxu0 0.0
        %3472 = vmatprep.subr.mxu0 0.0
        %3473 = vmatpush1.msra.mxu0 0.0
        %3474 = vmatprep.subr.mxu0 0.0
        %3475 = vmatpush1.msra.mxu0 0.0
        %3476 = vmatprep.subr.mxu0 0.0
        %3477 = vmatpush1.msra.mxu0 0.0
        %3478 = vmatprep.subr.mxu0 0.0
        %3479 = vmatpush1.msra.mxu0 0.0
        %3480 = vmatprep.subr.mxu0 0.0
        %3481 = vmatpush1.msra.mxu0 0.0
        %3482 = vmatprep.subr.mxu0 0.0
        %3483 = vmatpush1.msra.mxu0 0.0
        %3484 = vmatprep.subr.mxu0 0.0
        %3485 = vmatpush1.msra.mxu0 0.0
        %3486 = vmatprep.subr.mxu0 0.0
        %3487 = vmatpush1.msra.mxu0 0.0
        %3488 = vmatprep.subr.mxu0 0.0
        %3489 = vmatpush1.msra.mxu0 0.0
        %3490 = vmatprep.subr.mxu0 0.0
        %3491 = vmatpush1.msra.mxu0 0.0
        %3492 = vmatprep.subr.mxu0 0.0
        %3493 = vmatpush1.msra.mxu0 0.0
        %3494 = vmatprep.subr.mxu0 0.0
        %3495 = vmatpush1.msra.mxu0 0.0
        %3496 = vmatprep.subr.mxu0 0.0
        %3497 = vmatpush1.msra.mxu0 0.0
        %3498 = vmatprep.subr.mxu0 0.0
        %3499 = vmatpush1.msra.mxu0 0.0
        %3500 = vmatprep.subr.mxu0 0.0
        %3501 = vmatpush1.msra.mxu0 0.0
        %3502 = vmatprep.subr.mxu0 0.0
        %3503 = vmatpush1.msra.mxu0 0.0
        %3504 = vmatprep.subr.mxu0 0.0
        %3505 = vmatpush1.msra.mxu0 0.0
        %3506 = vmatprep.subr.mxu0 0.0
        %3507 = vmatpush1.msra.mxu0 0.0
        %3508 = vmatprep.mubr.f32.mxu0 0.0
        %3509 = vmatmul.mubr.f32.gmra.mrb[0].mxu0 %v3442
        %v3510 = vpop.f32.mrb[0].mxu0
        %v3511 = vadd.f32 0.0, %v3510
        %v3512 = vpop.f32.mrb[0].mxu0
        %3513 = vdwg.mxu0
        %v3514 = vadd.f32 %v3434, %v3511
        %v3515 = vld [vmem:[#allocation3 + $0x78] sm:$0xff]
        %s3516 = scalar_lea.vmem [#allocation4], 448
        %v3517 = vld [vmem:[%s3516] sm:$0xff]
        %v3518 = vld [vmem:[%s3516 + $0x8] sm:$0xff]
        %v3519 = vld [vmem:[%s3516 + $0x10] sm:$0xff]
        %v3520 = vld [vmem:[%s3516 + $0x18] sm:$0xff]
        %v3522 = vsel %vm343, %v3515, 0
        %3524 = vmatprep.subr.mxu0 0.0
        %3525 = vmatpush1.msra.mxu0 %v3517
        %3526 = vmatprep.subr.mxu0 0.0
        %3527 = vmatpush1.msra.mxu0 %v3518
        %3528 = vmatprep.subr.mxu0 0.0
        %3529 = vmatpush1.msra.mxu0 %v3519
        %3530 = vmatprep.subr.mxu0 0.0
        %3531 = vmatpush1.msra.mxu0 %v3520
        %3532 = vmatprep.subr.mxu0 0.0
        %3533 = vmatpush1.msra.mxu0 0.0
        %3534 = vmatprep.subr.mxu0 0.0
        %3535 = vmatpush1.msra.mxu0 0.0
        %3536 = vmatprep.subr.mxu0 0.0
        %3537 = vmatpush1.msra.mxu0 0.0
        %3538 = vmatprep.subr.mxu0 0.0
        %3539 = vmatpush1.msra.mxu0 0.0
        %3540 = vmatprep.subr.mxu0 0.0
        %3541 = vmatpush1.msra.mxu0 0.0
        %3542 = vmatprep.subr.mxu0 0.0
        %3543 = vmatpush1.msra.mxu0 0.0
        %3544 = vmatprep.subr.mxu0 0.0
        %3545 = vmatpush1.msra.mxu0 0.0
        %3546 = vmatprep.subr.mxu0 0.0
        %3547 = vmatpush1.msra.mxu0 0.0
        %3548 = vmatprep.subr.mxu0 0.0
        %3549 = vmatpush1.msra.mxu0 0.0
        %3550 = vmatprep.subr.mxu0 0.0
        %3551 = vmatpush1.msra.mxu0 0.0
        %3552 = vmatprep.subr.mxu0 0.0
        %3553 = vmatpush1.msra.mxu0 0.0
        %3554 = vmatprep.subr.mxu0 0.0
        %3555 = vmatpush1.msra.mxu0 0.0
        %3556 = vmatprep.subr.mxu0 0.0
        %3557 = vmatpush1.msra.mxu0 0.0
        %3558 = vmatprep.subr.mxu0 0.0
        %3559 = vmatpush1.msra.mxu0 0.0
        %3560 = vmatprep.subr.mxu0 0.0
        %3561 = vmatpush1.msra.mxu0 0.0
        %3562 = vmatprep.subr.mxu0 0.0
        %3563 = vmatpush1.msra.mxu0 0.0
        %3564 = vmatprep.subr.mxu0 0.0
        %3565 = vmatpush1.msra.mxu0 0.0
        %3566 = vmatprep.subr.mxu0 0.0
        %3567 = vmatpush1.msra.mxu0 0.0
        %3568 = vmatprep.subr.mxu0 0.0
        %3569 = vmatpush1.msra.mxu0 0.0
        %3570 = vmatprep.subr.mxu0 0.0
        %3571 = vmatpush1.msra.mxu0 0.0
        %3572 = vmatprep.subr.mxu0 0.0
        %3573 = vmatpush1.msra.mxu0 0.0
        %3574 = vmatprep.subr.mxu0 0.0
        %3575 = vmatpush1.msra.mxu0 0.0
        %3576 = vmatprep.subr.mxu0 0.0
        %3577 = vmatpush1.msra.mxu0 0.0
        %3578 = vmatprep.subr.mxu0 0.0
        %3579 = vmatpush1.msra.mxu0 0.0
        %3580 = vmatprep.subr.mxu0 0.0
        %3581 = vmatpush1.msra.mxu0 0.0
        %3582 = vmatprep.subr.mxu0 0.0
        %3583 = vmatpush1.msra.mxu0 0.0
        %3584 = vmatprep.subr.mxu0 0.0
        %3585 = vmatpush1.msra.mxu0 0.0
        %3586 = vmatprep.subr.mxu0 0.0
        %3587 = vmatpush1.msra.mxu0 0.0
        %3588 = vmatprep.mubr.f32.mxu0 0.0
        %3589 = vmatmul.mubr.f32.gmra.mrb[0].mxu0 %v3522
        %v3590 = vpop.f32.mrb[0].mxu0
        %v3591 = vadd.f32 0.0, %v3590
        %v3592 = vpop.f32.mrb[0].mxu0
        %3593 = vdwg.mxu0
        %v3594 = vadd.f32 %v3514, %v3591
        %v3595 = vld [vmem:[#allocation3 + $0x80] sm:$0xff]
        %s3596 = scalar_lea.vmem [#allocation4], 480
        %v3597 = vld [vmem:[%s3596] sm:$0xff]
        %v3598 = vld [vmem:[%s3596 + $0x8] sm:$0xff]
        %v3599 = vld [vmem:[%s3596 + $0x10] sm:$0xff]
        %v3600 = vld [vmem:[%s3596 + $0x18] sm:$0xff]
        %v3602 = vsel %vm343, %v3595, 0
        %3604 = vmatprep.subr.mxu0 0.0
        %3605 = vmatpush1.msra.mxu0 %v3597
        %3606 = vmatprep.subr.mxu0 0.0
        %3607 = vmatpush1.msra.mxu0 %v3598
        %3608 = vmatprep.subr.mxu0 0.0
        %3609 = vmatpush1.msra.mxu0 %v3599
        %3610 = vmatprep.subr.mxu0 0.0
        %3611 = vmatpush1.msra.mxu0 %v3600
        %3612 = vmatprep.subr.mxu0 0.0
        %3613 = vmatpush1.msra.mxu0 0.0
        %3614 = vmatprep.subr.mxu0 0.0
        %3615 = vmatpush1.msra.mxu0 0.0
        %3616 = vmatprep.subr.mxu0 0.0
        %3617 = vmatpush1.msra.mxu0 0.0
        %3618 = vmatprep.subr.mxu0 0.0
        %3619 = vmatpush1.msra.mxu0 0.0
        %3620 = vmatprep.subr.mxu0 0.0
        %3621 = vmatpush1.msra.mxu0 0.0
        %3622 = vmatprep.subr.mxu0 0.0
        %3623 = vmatpush1.msra.mxu0 0.0
        %3624 = vmatprep.subr.mxu0 0.0
        %3625 = vmatpush1.msra.mxu0 0.0
        %3626 = vmatprep.subr.mxu0 0.0
        %3627 = vmatpush1.msra.mxu0 0.0
        %3628 = vmatprep.subr.mxu0 0.0
        %3629 = vmatpush1.msra.mxu0 0.0
        %3630 = vmatprep.subr.mxu0 0.0
        %3631 = vmatpush1.msra.mxu0 0.0
        %3632 = vmatprep.subr.mxu0 0.0
        %3633 = vmatpush1.msra.mxu0 0.0
        %3634 = vmatprep.subr.mxu0 0.0
        %3635 = vmatpush1.msra.mxu0 0.0
        %3636 = vmatprep.subr.mxu0 0.0
        %3637 = vmatpush1.msra.mxu0 0.0
        %3638 = vmatprep.subr.mxu0 0.0
        %3639 = vmatpush1.msra.mxu0 0.0
        %3640 = vmatprep.subr.mxu0 0.0
        %3641 = vmatpush1.msra.mxu0 0.0
        %3642 = vmatprep.subr.mxu0 0.0
        %3643 = vmatpush1.msra.mxu0 0.0
        %3644 = vmatprep.subr.mxu0 0.0
        %3645 = vmatpush1.msra.mxu0 0.0
        %3646 = vmatprep.subr.mxu0 0.0
        %3647 = vmatpush1.msra.mxu0 0.0
        %3648 = vmatprep.subr.mxu0 0.0
        %3649 = vmatpush1.msra.mxu0 0.0
        %3650 = vmatprep.subr.mxu0 0.0
        %3651 = vmatpush1.msra.mxu0 0.0
        %3652 = vmatprep.subr.mxu0 0.0
        %3653 = vmatpush1.msra.mxu0 0.0
        %3654 = vmatprep.subr.mxu0 0.0
        %3655 = vmatpush1.msra.mxu0 0.0
        %3656 = vmatprep.subr.mxu0 0.0
        %3657 = vmatpush1.msra.mxu0 0.0
        %3658 = vmatprep.subr.mxu0 0.0
        %3659 = vmatpush1.msra.mxu0 0.0
        %3660 = vmatprep.subr.mxu0 0.0
        %3661 = vmatpush1.msra.mxu0 0.0
        %3662 = vmatprep.subr.mxu0 0.0
        %3663 = vmatpush1.msra.mxu0 0.0
        %3664 = vmatprep.subr.mxu0 0.0
        %3665 = vmatpush1.msra.mxu0 0.0
        %3666 = vmatprep.subr.mxu0 0.0
        %3667 = vmatpush1.msra.mxu0 0.0
        %3668 = vmatprep.mubr.f32.mxu0 0.0
        %3669 = vmatmul.mubr.f32.gmra.mrb[0].mxu0 %v3602
        %v3670 = vpop.f32.mrb[0].mxu0
        %v3671 = vadd.f32 0.0, %v3670
        %v3672 = vpop.f32.mrb[0].mxu0
        %3673 = vdwg.mxu0
        %v3674 = vadd.f32 %v3594, %v3671
        %v3675 = vld [vmem:[%s8] sm:$0x1]
        %v3677 = vlaneseq
        %v3678 = vshrl.u32 %v3677, 7
        %v3679 = vsub.s32 0, %v3678
        %v3680 = vrot.slane %v3675, %v3679
        %v3682 = vadd.f32 %v3674, %v3680
        %3683 = vst [vmem:[%s342] sm:$0xff] %v3682
        %p3684 = scmp.lt.s32.totalorder %s21, 1
        %s3685 = scalar_select %p3684, %s21, 1
        %s3686 = smul.addr %s3685, 8
        %s3687 = scalar_lea.vmem %s9, %s3686
        // Predicated region
        $region61: #{cnn_forward.1} parent=55 // pred_check
          %p3688 = pneg %p233
        $region62: #{cnn_forward.1} parent=55 // pred_check_branch
          %3690 = sbr.rel (%p3688) target = $region64
        $region63: #{cnn_forward.1} parent=55 // pred_region
          _
        $region64: #{cnn_forward.1} parent=55 // pred_fallthru
          _
      $region56: #{cnn_forward.1} parent=5 // pred_fallthru
        _
      %p3691 = scmp.le.s32.totalorder 2, %s16
      // Predicated region
      $region65: #{cnn_forward.1} parent=5 // pred_check
        %p3692 = pneg %p3691
      $region66: #{cnn_forward.1} parent=5 // pred_check_branch
        %3694 = sbr.rel (%p3692) target = $region68
      $region67: #{cnn_forward.1} parent=5 // pred_region
        %s3695 = ssub.s32 %s16, 2
        // Predicated region
        $region69: #{cnn_forward.1} parent=67 // pred_check
          %p3696 = pneg %p239
        $region70: #{cnn_forward.1} parent=67 // pred_check_branch
          %3698 = sbr.rel (%p3696) target = $region72
        $region71: #{cnn_forward.1} parent=67 // pred_region
          %p3699 = scmp.lt.s32.totalorder %s22, 1
          %s3700 = scalar_select %p3699, %s22, 1
          %s3701 = smul.addr %s3700, 8
          %s3702 = scalar_lea.vmem %s9, %s3701
        $region72: #{cnn_forward.1} parent=67 // pred_fallthru
          _
      $region68: #{cnn_forward.1} parent=5 // pred_fallthru
        _
    $region6: #{cnn_forward.1} parent=1 // loop_footer
      %s20 = sadd.s32 1, %s16
    $region7: #{cnn_forward.1} parent=1 // loop_footer_branch
      %15 = sbr.rel target = $region3
    $region8: #{cnn_forward.1} parent=1 // loop_exit
      _
    %3703 = vsyncpa [#allocation5], 1
    %s3704 = scalar_lea.sflag [#allocation5], 1
    %3705 = vsyncpa %s3704, 1

</llo_original>
